<compile_context>
chip_gen: v7x
topology: tpu7x:2x2x1
jax: 0.10.0
libtpu: 0.0.40
codegen_flags: <defaults>
</compile_context>

<pallas_src>
import functools

import jax
import jax.numpy as jnp
import numpy as np
from jax.experimental import pallas as pl
from jax.experimental.pallas import tpu as pltpu


def _cat_loss_kernel(flow_ref, halo_ref, fixed_ref, moved_ref, out_ref,
                     sse_acc, dh_acc, dw_acc, dd_acc, jl_acc,
                     *, scales, H, TH):
    f32 = jnp.float32
    h = pl.program_id(1)
    n_h = pl.num_programs(1)

    @pl.when(h == 0)
    def _init():
        sse_acc[...] = jnp.zeros_like(sse_acc)
        dh_acc[...] = jnp.zeros_like(dh_acc)
        dw_acc[...] = jnp.zeros_like(dw_acc)
        dd_acc[...] = jnp.zeros_like(dd_acc)
        jl_acc[...] = jnp.zeros_like(jl_acc)

    # ---- similarity (MSE numerator): sum of squared differences --------------
    diff = fixed_ref[...].astype(f32) - moved_ref[...].astype(f32)   # (TH, W, D)
    sse_acc[...] += jnp.sum(diff * diff, axis=0)                     # (W, D)

    # Rows whose forward H-difference / Jacobian is outside the volume (only the
    # very last global row, delivered via the clamped halo) must not contribute
    # to the Jacobian term.  (Their dH contribution is exactly 0 by clamping.)
    row = h * TH + jax.lax.broadcasted_iota(jnp.int32, (TH, 1, 1), 0)
    jmask = (row < (H - 1)).astype(f32)                              # (TH, 1, 1)

    dh_sum = jnp.zeros(dh_acc.shape, f32)
    dw_sum = jnp.zeros(dw_acc.shape, f32)
    dd_sum = jnp.zeros(dd_acc.shape, f32)

    a_h = [None] * 3   # scaled d/dH on the (TH, W-1, D-1) interior
    a_w = [None] * 3   # scaled d/dW
    a_d = [None] * 3   # scaled d/dD

    for c in range(3):
        u_c = flow_ref[c].astype(f32)                                # (TH, W, D)
        uh_c = halo_ref[c].astype(f32)                               # (1, W, D)
        if TH > 1:
            nxt = jnp.concatenate([u_c[1:], uh_c], axis=0)           # (TH, W, D)
        else:
            nxt = uh_c
        gh = nxt - u_c                                               # (TH, W,   D)
        gw = u_c[:, 1:, :] - u_c[:, :-1, :]                          # (TH, W-1, D)
        gd = u_c[:, :, 1:] - u_c[:, :, :-1]                          # (TH, W,   D-1)

        dh_sum += jnp.sum(gh * gh, axis=0)
        dw_sum += jnp.sum(gw * gw, axis=0)
        dd_sum += jnp.sum(gd * gd, axis=0)

        s_c = scales[c]   # static Python float
        a_h[c] = gh[:, :-1, :-1] * s_c
        a_w[c] = gw[:, :, :-1] * s_c
        a_d[c] = gd[:, :-1, :] * s_c

    dh_acc[...] += dh_sum
    dw_acc[...] += dw_sum
    dd_acc[...] += dd_sum

    # ---- Jacobian determinant of (I + grad(scaled displacement)) -------------
    # Cofactor-by-cofactor to limit live slab-sized intermediates.
    a11 = a_w[1] + 1.0
    a22 = a_d[2] + 1.0
    cof0 = a11 * a22 - a_d[1] * a_w[2]
    cof1 = a_h[1] * a22 - a_d[1] * a_h[2]
    cof2 = a_h[1] * a_w[2] - a11 * a_h[2]
    jdet = (a_h[0] + 1.0) * cof0 - a_w[0] * cof1 + a_d[0] * cof2     # (TH, W-1, D-1)
    abslog = jnp.abs(jnp.log(jnp.maximum(jdet, 0.0) + 1e-7)) * jmask
    jl_acc[...] += jnp.sum(abslog, axis=0)                           # (W-1, D-1)

    # ---- finalize: one cross-lane reduce per batch element, lane-dense emit --
    @pl.when(h == n_h - 1)
    def _emit():
        out_ref[0, 0] = jnp.full((8, 128), jnp.sum(sse_acc[...]), f32)
        out_ref[0, 1] = jnp.full((8, 128), jnp.sum(dh_acc[...]), f32)
        out_ref[0, 2] = jnp.full((8, 128), jnp.sum(dw_acc[...]), f32)
        out_ref[0, 3] = jnp.full((8, 128), jnp.sum(dd_acc[...]), f32)
        out_ref[0, 4] = jnp.full((8, 128), jnp.sum(jl_acc[...]), f32)


def _pick_tile_h(H, W, D, in_itemsize, budget_bytes):
    """Largest divisor of H whose working set (double-buffered input blocks +
    scratch + rough f32 temporaries) fits the VMEM budget."""
    best = 1
    slab = W * D
    for th in range(1, H + 1):
        if H % th:
            continue
        inputs = 2 * (3 + 2) * th * slab * in_itemsize   # flow + fixed + moved, 2 buffers
        halo = 2 * 3 * slab * in_itemsize
        scratch = 5 * slab * 4
        temps = 16 * th * slab * 4                       # live f32 intermediates (rough)
        if inputs + halo + scratch + temps <= budget_bytes:
            best = th
    return best


def cat_loss_pallas(fixed, moved, flow, weight=1.0, w_sm=0.1, w_in=0.1,
                    tile_h=None, vmem_budget_bytes=24 * 1024 * 1024):
    """Pallas implementation of CatLoss.forward (image_loss='mse', l2 Grad,
    incompress form='abslog', abs='l1'). Returns (tot, sim, smooth, incompress)."""
    f32 = jnp.float32
    B, C, H, W, D = flow.shape
    assert C == 3, "flow must have 3 channels"
    assert fixed.shape == (B, 1, H, W, D) and moved.shape == (B, 1, H, W, D), \
        "fixed/moved must be (B, 1, H, W, D)"

    TH = tile_h if tile_h is not None else _pick_tile_h(
        H, W, D, jnp.dtype(flow.dtype).itemsize, vmem_budget_bytes)
    assert H % TH == 0, "tile_h must divide H"
    n_h_tiles = H // TH
    scales = (H / 2.0, W / 2.0, D / 2.0)   # scale_flow factors (static floats)

    kernel = functools.partial(_cat_loss_kernel, scales=scales, H=H, TH=TH)

    flow_spec = pl.BlockSpec(
        (None, 3, TH, W, D), lambda b, h: (b, 0, h, 0, 0))
    # 1-row H halo: first row of the next tile, clamped to the last row at the edge.
    halo_spec = pl.BlockSpec(
        (None, 3, 1, W, D),
        lambda b, h: (b, 0, jnp.minimum((h + 1) * TH, H - 1), 0, 0))
    img_spec = pl.BlockSpec(
        (None, None, TH, W, D), lambda b, h: (b, 0, h, 0, 0))
    out_spec = pl.BlockSpec((1, 5, 8, 128), lambda b, h: (b, 0, 0, 0))

    partials = pl.pallas_call(
        kernel,
        out_shape=jax.ShapeDtypeStruct((B, 5, 8, 128), f32),
        grid=(B, n_h_tiles),
        in_specs=[flow_spec, halo_spec, img_spec, img_spec],
        out_specs=out_spec,
        scratch_shapes=[
            pltpu.VMEM((W, D), f32),          # sum (fixed-moved)^2
            pltpu.VMEM((W, D), f32),          # sum dH^2
            pltpu.VMEM((W - 1, D), f32),      # sum dW^2
            pltpu.VMEM((W, D - 1), f32),      # sum dD^2
            pltpu.VMEM((W - 1, D - 1), f32),  # sum |log(relu(Jdet)+eps)|
        ],
        compiler_params=pltpu.CompilerParams(
            dimension_semantics=("parallel", "arbitrary"),
            vmem_limit_bytes=48 * 1024 * 1024,
        ),
    )(flow, flow, fixed, moved)

    # ---- tiny final reductions + weighting (glue) -----------------------------
    sums = jnp.sum(partials[:, :, 0, 0], axis=0)                      # (5,)
    sse, dh, dw, dd, jl = sums[0], sums[1], sums[2], sums[3], sums[4]

    similarity = sse / fixed.size

    n_dh = B * 3 * (H - 1) * W * D
    n_dw = B * 3 * H * (W - 1) * D
    n_dd = B * 3 * H * W * (D - 1)
    smoothness = ((dw / n_dw + dh / n_dh + dd / n_dd) / 3.0) * w_sm

    n_j = B * (H - 1) * (W - 1) * (D - 1)
    incompress = (jl * weight / n_j) * w_in

    tot = similarity + smoothness + incompress
    return tot, similarity, smoothness, incompress


def cat_loss_ref(fixed, moved, flow, weight=1.0, w_sm=0.1, w_in=0.1):
    """Pure-JAX reference with identical semantics (for validation)."""
    fixed = fixed.astype(jnp.float32)
    moved = moved.astype(jnp.float32)
    flow = flow.astype(jnp.float32)
    sim = jnp.mean((fixed - moved) ** 2)

    dy = flow[:, :, 1:, :, :] - flow[:, :, :-1, :, :]
    dx = flow[:, :, :, 1:, :] - flow[:, :, :, :-1, :]
    dz = flow[:, :, :, :, 1:] - flow[:, :, :, :, :-1]
    smooth = ((jnp.mean(dx * dx) + jnp.mean(dy * dy) + jnp.mean(dz * dz)) / 3.0) * w_sm

    B, C, H, W, D = flow.shape
    s = jnp.array([H / 2.0, W / 2.0, D / 2.0], jnp.float32).reshape(1, 3, 1, 1, 1)
    v = flow * s
    c = v[:, :, :-1, :-1, :-1]
    gh = v[:, :, 1:, :-1, :-1] - c
    gw = v[:, :, :-1, 1:, :-1] - c
    gd = v[:, :, :-1, :-1, 1:] - c
    a00, a01, a02 = gh[:, 0] + 1.0, gw[:, 0], gd[:, 0]
    a10, a11, a12 = gh[:, 1], gw[:, 1] + 1.0, gd[:, 1]
    a20, a21, a22 = gh[:, 2], gw[:, 2], gd[:, 2] + 1.0
    jdet = (a00 * (a11 * a22 - a12 * a21)
            - a01 * (a10 * a22 - a12 * a20)
            + a02 * (a10 * a21 - a11 * a20))
    incom = jnp.mean(jnp.abs(jnp.log(jnp.maximum(jdet, 0.0) + 1e-7)) * weight) * w_in
    return sim + smooth + incom, sim, smooth, incom


if __name__ == "__main__":
    key = jax.random.PRNGKey(0)
    k1, k2, k3 = jax.random.split(key, 3)
    B, H, W, D = 2, 16, 16, 8
    fixed = jax.random.normal(k1, (B, 1, H, W, D), jnp.float32)
    moved = jax.random.normal(k2, (B, 1, H, W, D), jnp.float32)
    flow = 0.1 * jax.random.normal(k3, (B, 3, H, W, D), jnp.float32)

    ref = cat_loss_ref(fixed, moved, flow)

    # Auto tile (single H-tile for this toy size) and a forced 4-row tile
    # (exercises the multi-tile path with the H halo).
    for th in (None, 4):
        out = cat_loss_pallas(fixed, moved, flow, tile_h=th)
        jax.block_until_ready(out[0])
        for a, b in zip(out, ref):
            np.testing.assert_allclose(np.asarray(a), np.asarray(b),
                                       rtol=1e-4, atol=1e-5)

    # Native-dtype streaming: bf16 inputs are cast to f32 inside the kernel.
    fixed_bf = fixed.astype(jnp.bfloat16)
    moved_bf = moved.astype(jnp.bfloat16)
    flow_bf = flow.astype(jnp.bfloat16)
    out_bf = cat_loss_pallas(fixed_bf, moved_bf, flow_bf, tile_h=4)
    jax.block_until_ready(out_bf[0])
    ref_bf = cat_loss_ref(fixed_bf, moved_bf, flow_bf)
    for a, b in zip(out_bf, ref_bf):
        np.testing.assert_allclose(np.asarray(a), np.asarray(b),
                                   rtol=1e-3, atol=1e-4)

    print("KERNEL_OK")
</pallas_src>

<mosaic_0001>
module attributes {stable_mosaic.version = 11 : i64} {
  func.func @_cat_loss_kernel(%arg0: i32, %arg1: i32, %arg2: memref<1x3x16x16x8xf32, #tpu.memory_space<vmem>>, %arg3: memref<1x3x1x16x8xf32, #tpu.memory_space<vmem>>, %arg4: memref<1x1x16x16x8xf32, #tpu.memory_space<vmem>>, %arg5: memref<1x1x16x16x8xf32, #tpu.memory_space<vmem>>, %arg6: memref<1x5x8x128xf32, #tpu.memory_space<vmem>>, %arg7: memref<16x8xf32, #tpu.memory_space<vmem>>, %arg8: memref<16x8xf32, #tpu.memory_space<vmem>>, %arg9: memref<15x8xf32, #tpu.memory_space<vmem>>, %arg10: memref<16x7xf32, #tpu.memory_space<vmem>>, %arg11: memref<15x7xf32, #tpu.memory_space<vmem>>) attributes {dimension_semantics = [#tpu.dimension_semantics<parallel>, #tpu.dimension_semantics<arbitrary>], iteration_bounds = array<i64: 2, 1>, scalar_prefetch = 0 : i64, scratch_operands = 5 : i64, tpu.core_type = #tpu.core_type<tc>, window_params = [{transform_indices = @transform_0, window_bounds = array<i64: 1, 3, 16, 16, 8>}, {transform_indices = @transform_1, window_bounds = array<i64: 1, 3, 1, 16, 8>}, {transform_indices = @transform_2, window_bounds = array<i64: 1, 1, 16, 16, 8>}, {transform_indices = @transform_3, window_bounds = array<i64: 1, 1, 16, 16, 8>}, {transform_indices = @transform_4, window_bounds = array<i64: 1, 5, 8, 128>}]} {
    %c0_i32 = arith.constant 0 : i32
    %0 = arith.cmpi eq, %arg1, %c0_i32 : i32
    %1 = arith.extui %0 : i1 to i32
    %c0_i32_0 = arith.constant 0 : i32
    %2 = arith.cmpi ne, %1, %c0_i32_0 : i32
    scf.if %2 {
      %cst_87 = arith.constant 0.000000e+00 : f32
      %161 = vector.broadcast %cst_87 : f32 to vector<16x8xf32>
      %c0_88 = arith.constant 0 : index
      %c0_89 = arith.constant 0 : index
      %162 = vector.load %arg7[%c0_88, %c0_89] : memref<16x8xf32, #tpu.memory_space<vmem>>, vector<16x8xf32>
      tpu.vector_store %arg7[%c0_88, %c0_89], %161 {strides = array<i32>} : memref<16x8xf32, #tpu.memory_space<vmem>>, vector<16x8xf32>,
      %cst_90 = arith.constant 0.000000e+00 : f32
      %163 = vector.broadcast %cst_90 : f32 to vector<16x8xf32>
      %c0_91 = arith.constant 0 : index
      %c0_92 = arith.constant 0 : index
      %164 = vector.load %arg8[%c0_91, %c0_92] : memref<16x8xf32, #tpu.memory_space<vmem>>, vector<16x8xf32>
      tpu.vector_store %arg8[%c0_91, %c0_92], %163 {strides = array<i32>} : memref<16x8xf32, #tpu.memory_space<vmem>>, vector<16x8xf32>,
      %cst_93 = arith.constant 0.000000e+00 : f32
      %165 = vector.broadcast %cst_93 : f32 to vector<15x8xf32>
      %c0_94 = arith.constant 0 : index
      %c0_95 = arith.constant 0 : index
      %166 = vector.load %arg9[%c0_94, %c0_95] : memref<15x8xf32, #tpu.memory_space<vmem>>, vector<15x8xf32>
      tpu.vector_store %arg9[%c0_94, %c0_95], %165 {strides = array<i32>} : memref<15x8xf32, #tpu.memory_space<vmem>>, vector<15x8xf32>,
      %cst_96 = arith.constant 0.000000e+00 : f32
      %167 = vector.broadcast %cst_96 : f32 to vector<16x7xf32>
      %c0_97 = arith.constant 0 : index
      %c0_98 = arith.constant 0 : index
      %168 = vector.load %arg10[%c0_97, %c0_98] : memref<16x7xf32, #tpu.memory_space<vmem>>, vector<16x7xf32>
      tpu.vector_store %arg10[%c0_97, %c0_98], %167 {strides = array<i32>} : memref<16x7xf32, #tpu.memory_space<vmem>>, vector<16x7xf32>,
      %cst_99 = arith.constant 0.000000e+00 : f32
      %169 = vector.broadcast %cst_99 : f32 to vector<15x7xf32>
      %c0_100 = arith.constant 0 : index
      %c0_101 = arith.constant 0 : index
      %170 = vector.load %arg11[%c0_100, %c0_101] : memref<15x7xf32, #tpu.memory_space<vmem>>, vector<15x7xf32>
      tpu.vector_store %arg11[%c0_100, %c0_101], %169 {strides = array<i32>} : memref<15x7xf32, #tpu.memory_space<vmem>>, vector<15x7xf32>,
    } else {
    }
    %c0 = arith.constant 0 : index
    %c0_1 = arith.constant 0 : index
    %c0_2 = arith.constant 0 : index
    %c0_3 = arith.constant 0 : index
    %c0_4 = arith.constant 0 : index
    %3 = vector.load %arg4[%c0, %c0_1, %c0_2, %c0_3, %c0_4] : memref<1x1x16x16x8xf32, #tpu.memory_space<vmem>>, vector<1x1x16x16x8xf32>
    %4 = vector.shape_cast %3 : vector<1x1x16x16x8xf32> to vector<16x16x8xf32>
    %c0_5 = arith.constant 0 : index
    %c0_6 = arith.constant 0 : index
    %c0_7 = arith.constant 0 : index
    %c0_8 = arith.constant 0 : index
    %c0_9 = arith.constant 0 : index
    %5 = vector.load %arg5[%c0_5, %c0_6, %c0_7, %c0_8, %c0_9] : memref<1x1x16x16x8xf32, #tpu.memory_space<vmem>>, vector<1x1x16x16x8xf32>
    %6 = vector.shape_cast %5 : vector<1x1x16x16x8xf32> to vector<16x16x8xf32>
    %7 = arith.subf %4, %6 : vector<16x16x8xf32>
    %c0_10 = arith.constant 0 : index
    %c0_11 = arith.constant 0 : index
    %8 = vector.load %arg7[%c0_10, %c0_11] : memref<16x8xf32, #tpu.memory_space<vmem>>, vector<16x8xf32>
    %9 = arith.mulf %7, %7 : vector<16x16x8xf32>
    %cst = arith.constant dense<0.000000e+00> : vector<16x8xf32>
    %10 = vector.multi_reduction <add>, %9, %cst [0] : vector<16x16x8xf32> to vector<16x8xf32>
    %11 = arith.addf %8, %10 : vector<16x8xf32>
    %c0_12 = arith.constant 0 : index
    %c0_13 = arith.constant 0 : index
    %12 = vector.load %arg7[%c0_12, %c0_13] : memref<16x8xf32, #tpu.memory_space<vmem>>, vector<16x8xf32>
    tpu.vector_store %arg7[%c0_12, %c0_13], %11 {strides = array<i32>} : memref<16x8xf32, #tpu.memory_space<vmem>>, vector<16x8xf32>,
    %c16_i32 = arith.constant 16 : i32
    %13 = arith.muli %arg1, %c16_i32 : i32
    %14 = tpu.iota {dimensions = array<i32: 0>} : vector<16x1x1xi32>
    %15 = vector.broadcast %13 : i32 to vector<16x1x1xi32>
    %16 = arith.addi %15, %14 : vector<16x1x1xi32>
    %c15_i32 = arith.constant 15 : i32
    %17 = vector.broadcast %c15_i32 : i32 to vector<16x1x1xi32>
    %18 = arith.cmpi slt, %16, %17 : vector<16x1x1xi32>
    %19 = arith.extui %18 : vector<16x1x1xi1> to vector<16x1x1xi32>
    %20 = arith.sitofp %19 : vector<16x1x1xi32> to vector<16x1x1xf32>
    %cst_14 = arith.constant 0.000000e+00 : f32
    %21 = vector.broadcast %cst_14 : f32 to vector<16x8xf32>
    %cst_15 = arith.constant 0.000000e+00 : f32
    %22 = vector.broadcast %cst_15 : f32 to vector<15x8xf32>
    %cst_16 = arith.constant 0.000000e+00 : f32
    %23 = vector.broadcast %cst_16 : f32 to vector<16x7xf32>
    %c0_17 = arith.constant 0 : index
    %c0_18 = arith.constant 0 : index
    %c0_19 = arith.constant 0 : index
    %c0_20 = arith.constant 0 : index
    %c0_21 = arith.constant 0 : index
    %24 = vector.load %arg2[%c0_17, %c0_18, %c0_19, %c0_20, %c0_21] : memref<1x3x16x16x8xf32, #tpu.memory_space<vmem>>, vector<1x1x16x16x8xf32>
    %25 = vector.shape_cast %24 : vector<1x1x16x16x8xf32> to vector<16x16x8xf32>
    %c0_22 = arith.constant 0 : index
    %c0_23 = arith.constant 0 : index
    %c0_24 = arith.constant 0 : index
    %c0_25 = arith.constant 0 : index
    %c0_26 = arith.constant 0 : index
    %26 = vector.load %arg3[%c0_22, %c0_23, %c0_24, %c0_25, %c0_26] : memref<1x3x1x16x8xf32, #tpu.memory_space<vmem>>, vector<1x1x1x16x8xf32>
    %27 = vector.shape_cast %26 : vector<1x1x1x16x8xf32> to vector<1x16x8xf32>
    %28 = vector.extract_strided_slice %25 {offsets = [1, 0, 0], sizes = [15, 16, 8], strides = [1, 1, 1]} : vector<16x16x8xf32> to vector<15x16x8xf32>
    %29 = tpu.concatenate %28, %27 in 0 : vector<15x16x8xf32>, vector<1x16x8xf32> -> vector<16x16x8xf32>
    %30 = arith.subf %29, %25 : vector<16x16x8xf32>
    %31 = vector.extract_strided_slice %25 {offsets = [0, 1, 0], sizes = [16, 15, 8], strides = [1, 1, 1]} : vector<16x16x8xf32> to vector<16x15x8xf32>
    %32 = vector.extract_strided_slice %25 {offsets = [0, 0, 0], sizes = [16, 15, 8], strides = [1, 1, 1]} : vector<16x16x8xf32> to vector<16x15x8xf32>
    %33 = arith.subf %31, %32 : vector<16x15x8xf32>
    %34 = vector.extract_strided_slice %25 {offsets = [0, 0, 1], sizes = [16, 16, 7], strides = [1, 1, 1]} : vector<16x16x8xf32> to vector<16x16x7xf32>
    %35 = vector.extract_strided_slice %25 {offsets = [0, 0, 0], sizes = [16, 16, 7], strides = [1, 1, 1]} : vector<16x16x8xf32> to vector<16x16x7xf32>
    %36 = arith.subf %34, %35 : vector<16x16x7xf32>
    %37 = arith.mulf %30, %30 : vector<16x16x8xf32>
    %cst_27 = arith.constant dense<0.000000e+00> : vector<16x8xf32>
    %38 = vector.multi_reduction <add>, %37, %cst_27 [0] : vector<16x16x8xf32> to vector<16x8xf32>
    %39 = arith.addf %21, %38 : vector<16x8xf32>
    %40 = arith.mulf %33, %33 : vector<16x15x8xf32>
    %cst_28 = arith.constant dense<0.000000e+00> : vector<15x8xf32>
    %41 = vector.multi_reduction <add>, %40, %cst_28 [0] : vector<16x15x8xf32> to vector<15x8xf32>
    %42 = arith.addf %22, %41 : vector<15x8xf32>
    %43 = arith.mulf %36, %36 : vector<16x16x7xf32>
    %cst_29 = arith.constant dense<0.000000e+00> : vector<16x7xf32>
    %44 = vector.multi_reduction <add>, %43, %cst_29 [0] : vector<16x16x7xf32> to vector<16x7xf32>
    %45 = arith.addf %23, %44 : vector<16x7xf32>
    %46 = vector.extract_strided_slice %30 {offsets = [0, 0, 0], sizes = [16, 15, 7], strides = [1, 1, 1]} : vector<16x16x8xf32> to vector<16x15x7xf32>
    %cst_30 = arith.constant 8.000000e+00 : f32
    %47 = vector.broadcast %cst_30 : f32 to vector<16x15x7xf32>
    %48 = arith.mulf %46, %47 : vector<16x15x7xf32>
    %49 = vector.extract_strided_slice %33 {offsets = [0, 0, 0], sizes = [16, 15, 7], strides = [1, 1, 1]} : vector<16x15x8xf32> to vector<16x15x7xf32>
    %cst_31 = arith.constant 8.000000e+00 : f32
    %50 = vector.broadcast %cst_31 : f32 to vector<16x15x7xf32>
    %51 = arith.mulf %49, %50 : vector<16x15x7xf32>
    %52 = vector.extract_strided_slice %36 {offsets = [0, 0, 0], sizes = [16, 15, 7], strides = [1, 1, 1]} : vector<16x16x7xf32> to vector<16x15x7xf32>
    %cst_32 = arith.constant 8.000000e+00 : f32
    %53 = vector.broadcast %cst_32 : f32 to vector<16x15x7xf32>
    %54 = arith.mulf %52, %53 : vector<16x15x7xf32>
    %c0_33 = arith.constant 0 : index
    %c1 = arith.constant 1 : index
    %c0_34 = arith.constant 0 : index
    %c0_35 = arith.constant 0 : index
    %c0_36 = arith.constant 0 : index
    %55 = vector.load %arg2[%c0_33, %c1, %c0_34, %c0_35, %c0_36] : memref<1x3x16x16x8xf32, #tpu.memory_space<vmem>>, vector<1x1x16x16x8xf32>
    %56 = vector.shape_cast %55 : vector<1x1x16x16x8xf32> to vector<16x16x8xf32>
    %c0_37 = arith.constant 0 : index
    %c1_38 = arith.constant 1 : index
    %c0_39 = arith.constant 0 : index
    %c0_40 = arith.constant 0 : index
    %c0_41 = arith.constant 0 : index
    %57 = vector.load %arg3[%c0_37, %c1_38, %c0_39, %c0_40, %c0_41] : memref<1x3x1x16x8xf32, #tpu.memory_space<vmem>>, vector<1x1x1x16x8xf32>
    %58 = vector.shape_cast %57 : vector<1x1x1x16x8xf32> to vector<1x16x8xf32>
    %59 = vector.extract_strided_slice %56 {offsets = [1, 0, 0], sizes = [15, 16, 8], strides = [1, 1, 1]} : vector<16x16x8xf32> to vector<15x16x8xf32>
    %60 = tpu.concatenate %59, %58 in 0 : vector<15x16x8xf32>, vector<1x16x8xf32> -> vector<16x16x8xf32>
    %61 = arith.subf %60, %56 : vector<16x16x8xf32>
    %62 = vector.extract_strided_slice %56 {offsets = [0, 1, 0], sizes = [16, 15, 8], strides = [1, 1, 1]} : vector<16x16x8xf32> to vector<16x15x8xf32>
    %63 = vector.extract_strided_slice %56 {offsets = [0, 0, 0], sizes = [16, 15, 8], strides = [1, 1, 1]} : vector<16x16x8xf32> to vector<16x15x8xf32>
    %64 = arith.subf %62, %63 : vector<16x15x8xf32>
    %65 = vector.extract_strided_slice %56 {offsets = [0, 0, 1], sizes = [16, 16, 7], strides = [1, 1, 1]} : vector<16x16x8xf32> to vector<16x16x7xf32>
    %66 = vector.extract_strided_slice %56 {offsets = [0, 0, 0], sizes = [16, 16, 7], strides = [1, 1, 1]} : vector<16x16x8xf32> to vector<16x16x7xf32>
    %67 = arith.subf %65, %66 : vector<16x16x7xf32>
    %68 = arith.mulf %61, %61 : vector<16x16x8xf32>
    %cst_42 = arith.constant dense<0.000000e+00> : vector<16x8xf32>
    %69 = vector.multi_reduction <add>, %68, %cst_42 [0] : vector<16x16x8xf32> to vector<16x8xf32>
    %70 = arith.addf %39, %69 : vector<16x8xf32>
    %71 = arith.mulf %64, %64 : vector<16x15x8xf32>
    %cst_43 = arith.constant dense<0.000000e+00> : vector<15x8xf32>
    %72 = vector.multi_reduction <add>, %71, %cst_43 [0] : vector<16x15x8xf32> to vector<15x8xf32>
    %73 = arith.addf %42, %72 : vector<15x8xf32>
    %74 = arith.mulf %67, %67 : vector<16x16x7xf32>
    %cst_44 = arith.constant dense<0.000000e+00> : vector<16x7xf32>
    %75 = vector.multi_reduction <add>, %74, %cst_44 [0] : vector<16x16x7xf32> to vector<16x7xf32>
    %76 = arith.addf %45, %75 : vector<16x7xf32>
    %77 = vector.extract_strided_slice %61 {offsets = [0, 0, 0], sizes = [16, 15, 7], strides = [1, 1, 1]} : vector<16x16x8xf32> to vector<16x15x7xf32>
    %cst_45 = arith.constant 8.000000e+00 : f32
    %78 = vector.broadcast %cst_45 : f32 to vector<16x15x7xf32>
    %79 = arith.mulf %77, %78 : vector<16x15x7xf32>
    %80 = vector.extract_strided_slice %64 {offsets = [0, 0, 0], sizes = [16, 15, 7], strides = [1, 1, 1]} : vector<16x15x8xf32> to vector<16x15x7xf32>
    %cst_46 = arith.constant 8.000000e+00 : f32
    %81 = vector.broadcast %cst_46 : f32 to vector<16x15x7xf32>
    %82 = arith.mulf %80, %81 : vector<16x15x7xf32>
    %83 = vector.extract_strided_slice %67 {offsets = [0, 0, 0], sizes = [16, 15, 7], strides = [1, 1, 1]} : vector<16x16x7xf32> to vector<16x15x7xf32>
    %cst_47 = arith.constant 8.000000e+00 : f32
    %84 = vector.broadcast %cst_47 : f32 to vector<16x15x7xf32>
    %85 = arith.mulf %83, %84 : vector<16x15x7xf32>
    %c0_48 = arith.constant 0 : index
    %c2 = arith.constant 2 : index
    %c0_49 = arith.constant 0 : index
    %c0_50 = arith.constant 0 : index
    %c0_51 = arith.constant 0 : index
    %86 = vector.load %arg2[%c0_48, %c2, %c0_49, %c0_50, %c0_51] : memref<1x3x16x16x8xf32, #tpu.memory_space<vmem>>, vector<1x1x16x16x8xf32>
    %87 = vector.shape_cast %86 : vector<1x1x16x16x8xf32> to vector<16x16x8xf32>
    %c0_52 = arith.constant 0 : index
    %c2_53 = arith.constant 2 : index
    %c0_54 = arith.constant 0 : index
    %c0_55 = arith.constant 0 : index
    %c0_56 = arith.constant 0 : index
    %88 = vector.load %arg3[%c0_52, %c2_53, %c0_54, %c0_55, %c0_56] : memref<1x3x1x16x8xf32, #tpu.memory_space<vmem>>, vector<1x1x1x16x8xf32>
    %89 = vector.shape_cast %88 : vector<1x1x1x16x8xf32> to vector<1x16x8xf32>
    %90 = vector.extract_strided_slice %87 {offsets = [1, 0, 0], sizes = [15, 16, 8], strides = [1, 1, 1]} : vector<16x16x8xf32> to vector<15x16x8xf32>
    %91 = tpu.concatenate %90, %89 in 0 : vector<15x16x8xf32>, vector<1x16x8xf32> -> vector<16x16x8xf32>
    %92 = arith.subf %91, %87 : vector<16x16x8xf32>
    %93 = vector.extract_strided_slice %87 {offsets = [0, 1, 0], sizes = [16, 15, 8], strides = [1, 1, 1]} : vector<16x16x8xf32> to vector<16x15x8xf32>
    %94 = vector.extract_strided_slice %87 {offsets = [0, 0, 0], sizes = [16, 15, 8], strides = [1, 1, 1]} : vector<16x16x8xf32> to vector<16x15x8xf32>
    %95 = arith.subf %93, %94 : vector<16x15x8xf32>
    %96 = vector.extract_strided_slice %87 {offsets = [0, 0, 1], sizes = [16, 16, 7], strides = [1, 1, 1]} : vector<16x16x8xf32> to vector<16x16x7xf32>
    %97 = vector.extract_strided_slice %87 {offsets = [0, 0, 0], sizes = [16, 16, 7], strides = [1, 1, 1]} : vector<16x16x8xf32> to vector<16x16x7xf32>
    %98 = arith.subf %96, %97 : vector<16x16x7xf32>
    %99 = arith.mulf %92, %92 : vector<16x16x8xf32>
    %cst_57 = arith.constant dense<0.000000e+00> : vector<16x8xf32>
    %100 = vector.multi_reduction <add>, %99, %cst_57 [0] : vector<16x16x8xf32> to vector<16x8xf32>
    %101 = arith.addf %70, %100 : vector<16x8xf32>
    %102 = arith.mulf %95, %95 : vector<16x15x8xf32>
    %cst_58 = arith.constant dense<0.000000e+00> : vector<15x8xf32>
    %103 = vector.multi_reduction <add>, %102, %cst_58 [0] : vector<16x15x8xf32> to vector<15x8xf32>
    %104 = arith.addf %73, %103 : vector<15x8xf32>
    %105 = arith.mulf %98, %98 : vector<16x16x7xf32>
    %cst_59 = arith.constant dense<0.000000e+00> : vector<16x7xf32>
    %106 = vector.multi_reduction <add>, %105, %cst_59 [0] : vector<16x16x7xf32> to vector<16x7xf32>
    %107 = arith.addf %76, %106 : vector<16x7xf32>
    %108 = vector.extract_strided_slice %92 {offsets = [0, 0, 0], sizes = [16, 15, 7], strides = [1, 1, 1]} : vector<16x16x8xf32> to vector<16x15x7xf32>
    %cst_60 = arith.constant 4.000000e+00 : f32
    %109 = vector.broadcast %cst_60 : f32 to vector<16x15x7xf32>
    %110 = arith.mulf %108, %109 : vector<16x15x7xf32>
    %111 = vector.extract_strided_slice %95 {offsets = [0, 0, 0], sizes = [16, 15, 7], strides = [1, 1, 1]} : vector<16x15x8xf32> to vector<16x15x7xf32>
    %cst_61 = arith.constant 4.000000e+00 : f32
    %112 = vector.broadcast %cst_61 : f32 to vector<16x15x7xf32>
    %113 = arith.mulf %111, %112 : vector<16x15x7xf32>
    %114 = vector.extract_strided_slice %98 {offsets = [0, 0, 0], sizes = [16, 15, 7], strides = [1, 1, 1]} : vector<16x16x7xf32> to vector<16x15x7xf32>
    %cst_62 = arith.constant 4.000000e+00 : f32
    %115 = vector.broadcast %cst_62 : f32 to vector<16x15x7xf32>
    %116 = arith.mulf %114, %115 : vector<16x15x7xf32>
    %c0_63 = arith.constant 0 : index
    %c0_64 = arith.constant 0 : index
    %117 = vector.load %arg8[%c0_63, %c0_64] : memref<16x8xf32, #tpu.memory_space<vmem>>, vector<16x8xf32>
    %118 = arith.addf %117, %101 : vector<16x8xf32>
    %c0_65 = arith.constant 0 : index
    %c0_66 = arith.constant 0 : index
    %119 = vector.load %arg8[%c0_65, %c0_66] : memref<16x8xf32, #tpu.memory_space<vmem>>, vector<16x8xf32>
    tpu.vector_store %arg8[%c0_65, %c0_66], %118 {strides = array<i32>} : memref<16x8xf32, #tpu.memory_space<vmem>>, vector<16x8xf32>,
    %c0_67 = arith.constant 0 : index
    %c0_68 = arith.constant 0 : index
    %120 = vector.load %arg9[%c0_67, %c0_68] : memref<15x8xf32, #tpu.memory_space<vmem>>, vector<15x8xf32>
    %121 = arith.addf %120, %104 : vector<15x8xf32>
    %c0_69 = arith.constant 0 : index
    %c0_70 = arith.constant 0 : index
    %122 = vector.load %arg9[%c0_69, %c0_70] : memref<15x8xf32, #tpu.memory_space<vmem>>, vector<15x8xf32>
    tpu.vector_store %arg9[%c0_69, %c0_70], %121 {strides = array<i32>} : memref<15x8xf32, #tpu.memory_space<vmem>>, vector<15x8xf32>,
    %c0_71 = arith.constant 0 : index
    %c0_72 = arith.constant 0 : index
    %123 = vector.load %arg10[%c0_71, %c0_72] : memref<16x7xf32, #tpu.memory_space<vmem>>, vector<16x7xf32>
    %124 = arith.addf %123, %107 : vector<16x7xf32>
    %c0_73 = arith.constant 0 : index
    %c0_74 = arith.constant 0 : index
    %125 = vector.load %arg10[%c0_73, %c0_74] : memref<16x7xf32, #tpu.memory_space<vmem>>, vector<16x7xf32>
    tpu.vector_store %arg10[%c0_73, %c0_74], %124 {strides = array<i32>} : memref<16x7xf32, #tpu.memory_space<vmem>>, vector<16x7xf32>,
    %cst_75 = arith.constant 1.000000e+00 : f32
    %126 = vector.broadcast %cst_75 : f32 to vector<16x15x7xf32>
    %127 = arith.addf %82, %126 : vector<16x15x7xf32>
    %cst_76 = arith.constant 1.000000e+00 : f32
    %128 = vector.broadcast %cst_76 : f32 to vector<16x15x7xf32>
    %129 = arith.addf %116, %128 : vector<16x15x7xf32>
    %130 = arith.mulf %127, %129 : vector<16x15x7xf32>
    %131 = arith.mulf %85, %113 : vector<16x15x7xf32>
    %132 = arith.subf %130, %131 : vector<16x15x7xf32>
    %133 = arith.mulf %79, %129 : vector<16x15x7xf32>
    %134 = arith.mulf %85, %110 : vector<16x15x7xf32>
    %135 = arith.subf %133, %134 : vector<16x15x7xf32>
    %136 = arith.mulf %79, %113 : vector<16x15x7xf32>
    %137 = arith.mulf %127, %110 : vector<16x15x7xf32>
    %138 = arith.subf %136, %137 : vector<16x15x7xf32>
    %cst_77 = arith.constant 1.000000e+00 : f32
    %139 = vector.broadcast %cst_77 : f32 to vector<16x15x7xf32>
    %140 = arith.addf %48, %139 : vector<16x15x7xf32>
    %141 = arith.mulf %140, %132 : vector<16x15x7xf32>
    %142 = arith.mulf %51, %135 : vector<16x15x7xf32>
    %143 = arith.subf %141, %142 : vector<16x15x7xf32>
    %144 = arith.mulf %54, %138 : vector<16x15x7xf32>
    %145 = arith.addf %143, %144 : vector<16x15x7xf32>
    %cst_78 = arith.constant 0.000000e+00 : f32
    %146 = vector.broadcast %cst_78 : f32 to vector<16x15x7xf32>
    %147 = arith.maximumf %145, %146 : vector<16x15x7xf32>
    %cst_79 = arith.constant 1.000000e-07 : f32
    %148 = vector.broadcast %cst_79 : f32 to vector<16x15x7xf32>
    %149 = arith.addf %147, %148 : vector<16x15x7xf32>
    %150 = math.log %149 : vector<16x15x7xf32>
    %151 = math.absf %150 : vector<16x15x7xf32>
    %152 = vector.broadcast %20 : vector<16x1x1xf32> to vector<16x15x7xf32>
    %153 = arith.mulf %151, %152 : vector<16x15x7xf32>
    %c0_80 = arith.constant 0 : index
    %c0_81 = arith.constant 0 : index
    %154 = vector.load %arg11[%c0_80, %c0_81] : memref<15x7xf32, #tpu.memory_space<vmem>>, vector<15x7xf32>
    %cst_82 = arith.constant dense<0.000000e+00> : vector<15x7xf32>
    %155 = vector.multi_reduction <add>, %153, %cst_82 [0] : vector<16x15x7xf32> to vector<15x7xf32>
    %156 = arith.addf %154, %155 : vector<15x7xf32>
    %c0_83 = arith.constant 0 : index
    %c0_84 = arith.constant 0 : index
    %157 = vector.load %arg11[%c0_83, %c0_84] : memref<15x7xf32, #tpu.memory_space<vmem>>, vector<15x7xf32>
    tpu.vector_store %arg11[%c0_83, %c0_84], %156 {strides = array<i32>} : memref<15x7xf32, #tpu.memory_space<vmem>>, vector<15x7xf32>,
    %c0_i32_85 = arith.constant 0 : i32
    %158 = arith.cmpi eq, %arg1, %c0_i32_85 : i32
    %159 = arith.extui %158 : i1 to i32
    %c0_i32_86 = arith.constant 0 : i32
    %160 = arith.cmpi ne, %159, %c0_i32_86 : i32
    scf.if %160 {
      %c0_87 = arith.constant 0 : index
      %c0_88 = arith.constant 0 : index
      %161 = vector.load %arg7[%c0_87, %c0_88] : memref<16x8xf32, #tpu.memory_space<vmem>>, vector<16x8xf32>
      %162 = vector.shape_cast %161 : vector<16x8xf32> to vector<1x16x8xf32>
      %cst_89 = arith.constant dense<0.000000e+00> : vector<1xf32>
      %163 = vector.multi_reduction <add>, %162, %cst_89 [1, 2] : vector<1x16x8xf32> to vector<1xf32>
      %164 = vector.shape_cast %163 : vector<1xf32> to vector<1x1x1xf32>
      %165 = vector.extract %164[0, 0, 0] : f32 from vector<1x1x1xf32>
      %166 = vector.broadcast %165 : f32 to vector<8x128xf32>
      %c0_90 = arith.constant 0 : index
      %c0_91 = arith.constant 0 : index
      %c0_92 = arith.constant 0 : index
      %c0_93 = arith.constant 0 : index
      %167 = vector.load %arg6[%c0_90, %c0_91, %c0_92, %c0_93] : memref<1x5x8x128xf32, #tpu.memory_space<vmem>>, vector<1x1x8x128xf32>
      %168 = vector.shape_cast %167 : vector<1x1x8x128xf32> to vector<8x128xf32>
      %169 = vector.shape_cast %166 : vector<8x128xf32> to vector<1x1x8x128xf32>
      tpu.vector_store %arg6[%c0_90, %c0_91, %c0_92, %c0_93], %169 {strides = array<i32>} : memref<1x5x8x128xf32, #tpu.memory_space<vmem>>, vector<1x1x8x128xf32>,
      %c0_94 = arith.constant 0 : index
      %c0_95 = arith.constant 0 : index
      %170 = vector.load %arg8[%c0_94, %c0_95] : memref<16x8xf32, #tpu.memory_space<vmem>>, vector<16x8xf32>
      %171 = vector.shape_cast %170 : vector<16x8xf32> to vector<1x16x8xf32>
      %cst_96 = arith.constant dense<0.000000e+00> : vector<1xf32>
      %172 = vector.multi_reduction <add>, %171, %cst_96 [1, 2] : vector<1x16x8xf32> to vector<1xf32>
      %173 = vector.shape_cast %172 : vector<1xf32> to vector<1x1x1xf32>
      %174 = vector.extract %173[0, 0, 0] : f32 from vector<1x1x1xf32>
      %175 = vector.broadcast %174 : f32 to vector<8x128xf32>
      %c0_97 = arith.constant 0 : index
      %c1_98 = arith.constant 1 : index
      %c0_99 = arith.constant 0 : index
      %c0_100 = arith.constant 0 : index
      %176 = vector.load %arg6[%c0_97, %c1_98, %c0_99, %c0_100] : memref<1x5x8x128xf32, #tpu.memory_space<vmem>>, vector<1x1x8x128xf32>
      %177 = vector.shape_cast %176 : vector<1x1x8x128xf32> to vector<8x128xf32>
      %178 = vector.shape_cast %175 : vector<8x128xf32> to vector<1x1x8x128xf32>
      tpu.vector_store %arg6[%c0_97, %c1_98, %c0_99, %c0_100], %178 {strides = array<i32>} : memref<1x5x8x128xf32, #tpu.memory_space<vmem>>, vector<1x1x8x128xf32>,
      %c0_101 = arith.constant 0 : index
      %c0_102 = arith.constant 0 : index
      %179 = vector.load %arg9[%c0_101, %c0_102] : memref<15x8xf32, #tpu.memory_space<vmem>>, vector<15x8xf32>
      %180 = vector.shape_cast %179 : vector<15x8xf32> to vector<1x15x8xf32>
      %cst_103 = arith.constant dense<0.000000e+00> : vector<1xf32>
      %181 = vector.multi_reduction <add>, %180, %cst_103 [1, 2] : vector<1x15x8xf32> to vector<1xf32>
      %182 = vector.shape_cast %181 : vector<1xf32> to vector<1x1x1xf32>
      %183 = vector.extract %182[0, 0, 0] : f32 from vector<1x1x1xf32>
      %184 = vector.broadcast %183 : f32 to vector<8x128xf32>
      %c0_104 = arith.constant 0 : index
      %c2_105 = arith.constant 2 : index
      %c0_106 = arith.constant 0 : index
      %c0_107 = arith.constant 0 : index
      %185 = vector.load %arg6[%c0_104, %c2_105, %c0_106, %c0_107] : memref<1x5x8x128xf32, #tpu.memory_space<vmem>>, vector<1x1x8x128xf32>
      %186 = vector.shape_cast %185 : vector<1x1x8x128xf32> to vector<8x128xf32>
      %187 = vector.shape_cast %184 : vector<8x128xf32> to vector<1x1x8x128xf32>
      tpu.vector_store %arg6[%c0_104, %c2_105, %c0_106, %c0_107], %187 {strides = array<i32>} : memref<1x5x8x128xf32, #tpu.memory_space<vmem>>, vector<1x1x8x128xf32>,
      %c0_108 = arith.constant 0 : index
      %c0_109 = arith.constant 0 : index
      %188 = vector.load %arg10[%c0_108, %c0_109] : memref<16x7xf32, #tpu.memory_space<vmem>>, vector<16x7xf32>
      %189 = vector.shape_cast %188 : vector<16x7xf32> to vector<1x16x7xf32>
      %cst_110 = arith.constant dense<0.000000e+00> : vector<1xf32>
      %190 = vector.multi_reduction <add>, %189, %cst_110 [1, 2] : vector<1x16x7xf32> to vector<1xf32>
      %191 = vector.shape_cast %190 : vector<1xf32> to vector<1x1x1xf32>
      %192 = vector.extract %191[0, 0, 0] : f32 from vector<1x1x1xf32>
      %193 = vector.broadcast %192 : f32 to vector<8x128xf32>
      %c0_111 = arith.constant 0 : index
      %c3 = arith.constant 3 : index
      %c0_112 = arith.constant 0 : index
      %c0_113 = arith.constant 0 : index
      %194 = vector.load %arg6[%c0_111, %c3, %c0_112, %c0_113] : memref<1x5x8x128xf32, #tpu.memory_space<vmem>>, vector<1x1x8x128xf32>
      %195 = vector.shape_cast %194 : vector<1x1x8x128xf32> to vector<8x128xf32>
      %196 = vector.shape_cast %193 : vector<8x128xf32> to vector<1x1x8x128xf32>
      tpu.vector_store %arg6[%c0_111, %c3, %c0_112, %c0_113], %196 {strides = array<i32>} : memref<1x5x8x128xf32, #tpu.memory_space<vmem>>, vector<1x1x8x128xf32>,
      %c0_114 = arith.constant 0 : index
      %c0_115 = arith.constant 0 : index
      %197 = vector.load %arg11[%c0_114, %c0_115] : memref<15x7xf32, #tpu.memory_space<vmem>>, vector<15x7xf32>
      %198 = vector.shape_cast %197 : vector<15x7xf32> to vector<1x15x7xf32>
      %cst_116 = arith.constant dense<0.000000e+00> : vector<1xf32>
      %199 = vector.multi_reduction <add>, %198, %cst_116 [1, 2] : vector<1x15x7xf32> to vector<1xf32>
      %200 = vector.shape_cast %199 : vector<1xf32> to vector<1x1x1xf32>
      %201 = vector.extract %200[0, 0, 0] : f32 from vector<1x1x1xf32>
      %202 = vector.broadcast %201 : f32 to vector<8x128xf32>
      %c0_117 = arith.constant 0 : index
      %c4 = arith.constant 4 : index
      %c0_118 = arith.constant 0 : index
      %c0_119 = arith.constant 0 : index
      %203 = vector.load %arg6[%c0_117, %c4, %c0_118, %c0_119] : memref<1x5x8x128xf32, #tpu.memory_space<vmem>>, vector<1x1x8x128xf32>
      %204 = vector.shape_cast %203 : vector<1x1x8x128xf32> to vector<8x128xf32>
      %205 = vector.shape_cast %202 : vector<8x128xf32> to vector<1x1x8x128xf32>
      tpu.vector_store %arg6[%c0_117, %c4, %c0_118, %c0_119], %205 {strides = array<i32>} : memref<1x5x8x128xf32, #tpu.memory_space<vmem>>, vector<1x1x8x128xf32>,
    } else {
    }
    return
  }
  func.func @transform_0(%arg0: i32, %arg1: i32) -> (i32, i32, i32, i32, i32) {
    %c0_i32 = arith.constant 0 : i32
    %c0_i32_0 = arith.constant 0 : i32
    %c0_i32_1 = arith.constant 0 : i32
    %c0_i32_2 = arith.constant 0 : i32
    return %arg0, %c0_i32, %arg1, %c0_i32_0, %c0_i32_1 : i32, i32, i32, i32, i32
  }
  func.func @transform_1(%arg0: i32, %arg1: i32) -> (i32, i32, i32, i32, i32) {
    %c1_i32 = arith.constant 1 : i32
    %0 = arith.addi %arg1, %c1_i32 : i32
    %c16_i32 = arith.constant 16 : i32
    %1 = arith.muli %0, %c16_i32 : i32
    %c15_i32 = arith.constant 15 : i32
    %2 = arith.minsi %1, %c15_i32 : i32
    %c0_i32 = arith.constant 0 : i32
    %c0_i32_0 = arith.constant 0 : i32
    %c0_i32_1 = arith.constant 0 : i32
    %c0_i32_2 = arith.constant 0 : i32
    return %arg0, %c0_i32, %2, %c0_i32_0, %c0_i32_1 : i32, i32, i32, i32, i32
  }
  func.func @transform_2(%arg0: i32, %arg1: i32) -> (i32, i32, i32, i32, i32) {
    %c0_i32 = arith.constant 0 : i32
    %c0_i32_0 = arith.constant 0 : i32
    %c0_i32_1 = arith.constant 0 : i32
    %c0_i32_2 = arith.constant 0 : i32
    return %arg0, %c0_i32, %arg1, %c0_i32_0, %c0_i32_1 : i32, i32, i32, i32, i32
  }
  func.func @transform_3(%arg0: i32, %arg1: i32) -> (i32, i32, i32, i32, i32) {
    %c0_i32 = arith.constant 0 : i32
    %c0_i32_0 = arith.constant 0 : i32
    %c0_i32_1 = arith.constant 0 : i32
    %c0_i32_2 = arith.constant 0 : i32
    return %arg0, %c0_i32, %arg1, %c0_i32_0, %c0_i32_1 : i32, i32, i32, i32, i32
  }
  func.func @transform_4(%arg0: i32, %arg1: i32) -> (i32, i32, i32, i32) {
    %c0_i32 = arith.constant 0 : i32
    %c0_i32_0 = arith.constant 0 : i32
    %c0_i32_1 = arith.constant 0 : i32
    %c0_i32_2 = arith.constant 0 : i32
    return %arg0, %c0_i32, %c0_i32_0, %c0_i32_1 : i32, i32, i32, i32
  }
}

</mosaic_0001>

<llo_original>
// kernel: tpu_custom_call.1
$region0: #{tpu_custom_call.1}
  #allocation0 [shape = 'u32[]', space=smem, size = 0x4, offset = 0x4, fixed_abs, tag = 'smem constant byte address 0x4 - core index']
  #allocation1 [shape = 'u32[144,128]{1,0:T(1,128)}', space=vmem, size = 0x12000, scoped, tag = 'internal scratch']
  #allocation2 [shape = 'f32[16,8]{1,0:T(8,128)}', space=vmem, size = 0x2000, scoped, tag = 'scratch operand']
  #allocation3 [shape = 'f32[16,8]{1,0:T(8,128)}', space=vmem, size = 0x2000, scoped, tag = 'scratch operand']
  #allocation4 [shape = 'f32[15,8]{1,0:T(8,128)}', space=vmem, size = 0x2000, scoped, tag = 'scratch operand']
  #allocation5 [shape = 'f32[16,7]{1,0:T(8,128)}', space=vmem, size = 0x2000, scoped, tag = 'scratch operand']
  #allocation6 [shape = 'f32[15,7]{1,0:T(8,128)}', space=vmem, size = 0x2000, scoped, tag = 'scratch operand']
  %s0 = inlined_call_operand.vmem [shape: f32[2,3,16,16,8], index: 0, kind: input, shape index: {}]
  %s1 = inlined_call_operand.vmem [shape: f32[2,3,16,16,8], index: 1, kind: input, shape index: {}]
  %s2 = inlined_call_operand.vmem [shape: f32[2,1,16,16,8], index: 2, kind: input, shape index: {}]
  %s3 = inlined_call_operand.vmem [shape: f32[2,1,16,16,8], index: 3, kind: input, shape index: {}]
  %s4 = inlined_call_operand.hbm [shape: f32[2,5,8,128], index: 4, kind: output, shape index: {}]
  %s5 = sld [smem:[#allocation0]]
  $region95: #{tpu_custom_call.1} parent=0
    _
  %s7 = ssub.s32 1, %s5
  %s8 = scalar_select 0, %s7, %s5
  $region1: #{tpu_custom_call.1} parent=0
    #allocation7 [shape = 'u8[49152]{0}', space=vmem, size = 0xc000, scoped, tag = 'input window, operand 1']
    #allocation8 [shape = 'u8[40960]{0}', space=vmem, size = 0xa000, scoped, tag = 'output window, operand 0']
    #allocation9 [shape = 's32[2]{0}', space=sflag, size = 0x8, scoped, tag = 'scoped memory for tpu_custom_call.1']
    %9 = vsyncpa [#allocation9], 0
    %s10 = scalar_lea.sflag [#allocation9], 1
    %11 = vsyncpa %s10, 0
    loop: start=0, step=1, limit=4
    $region2: #{tpu_custom_call.1} parent=1 // loop_pre_header
      _
    $region3: #{tpu_custom_call.1} parent=1 // loop_header
      %s13 = sphi 0, %s17
      %p14 = scmp.ge.s32.totalorder %s13, 4
      %s20 = sphi 0, %s32
      %s21 = sphi 0, %s28
      %s22 = sphi 0, %s20
      %s23 = sphi 0, %s21
      %s24 = sphi 0, %s22
      %s25 = sphi 0, %s23
      %s37 = sphi 0, %s39
      %s40 = sphi 0, %s37
      %s41 = sphi 0, %s40
      %s57 = sphi 0, %s41
      %s73 = sphi 0, %s75
      %s76 = sphi 0, %s73
      %s77 = sphi 0, %s76
      %s93 = sphi 0, %s77
      %s101 = sphi 0, %s103
      %s104 = sphi 0, %s101
      %s105 = sphi 0, %s104
      %s121 = sphi 0, %s105
      %s129 = sphi 0, %s131
      %s132 = sphi 0, %s129
      %s133 = sphi 0, %s132
      %s149 = sphi 0, %s133
      %s155 = sphi 0, %s157
      %s158 = sphi 0, %s155
      %s159 = sphi 0, %s158
      %s175 = sphi 0, %s159
    $region4: #{tpu_custom_call.1} parent=1 // loop_header_branch
      %16 = sbr.rel (%p14) target = $region8
    $region5: #{tpu_custom_call.1} parent=1 // loop_body
      %s18 = ssub.s32 %s13, 1
      %s19 = ssub.s32 %s13, 2
      %s26 = sadd.s32 1, %s21
      %p27 = scmp.ge.s32.totalorder %s26, 1
      %s28 = scalar_select %p27, 0, %s26
      %s29 = sadd.s32 1, %s20
      %s30 = scalar_select %p27, %s29, %s20
      %p31 = scmp.ge.s32.totalorder %s30, 2
      %s32 = scalar_select %p31, 0, %s30
      %s33 = ssub.s32 %s20, %s32
      %s34 = ssub.s32 %s21, %s28
      %s35 = sor.u32 %s33, %s34
      %p36 = scmp.eq.s32.totalorder %s35, 0
      %s38 = sadd.s32 %s37, 1
      %s39 = scalar_select %p36, %s37, %s38
      %p42 = pneg %p36
      %p43 = scmp.eq.s32.totalorder %s13, 1
      %p44 = por %p42, %p43
      %p45 = scmp.ne.s32.totalorder %s37, %s40
      %p46 = scmp.eq.s32.totalorder %s13, 0
      %p47 = por %p45, %p46
      %p48 = scmp.ne.s32.totalorder %s37, %s40
      %p49 = scmp.eq.s32.totalorder %s18, 1
      %p50 = por %p48, %p49
      %p51 = scmp.ne.s32.totalorder %s40, %s41
      %p52 = scmp.eq.s32.totalorder %s18, 0
      %p53 = por %p51, %p52
      %p54 = scmp.ne.s32.totalorder %s40, %s41
      %p55 = scmp.eq.s32.totalorder %s19, 1
      %p56 = por %p54, %p55
      %p58 = scmp.ne.s32.totalorder %s41, %s57
      %p59 = scmp.eq.s32.totalorder %s19, 0
      %p60 = por %p58, %p59
      %s61 = sadd.s32 %s21, 1
      %s62 = smul.u32 %s61, 16
      %p63 = scmp.lt.s32.totalorder %s62, 15
      %s64 = scalar_select %p63, %s62, 15
      %s65 = sadd.s32 %s28, 1
      %s66 = smul.u32 %s65, 16
      %p67 = scmp.lt.s32.totalorder %s66, 15
      %s68 = scalar_select %p67, %s66, 15
      %s69 = ssub.s32 %s20, %s32
      %s70 = ssub.s32 %s64, %s68
      %s71 = sor.u32 %s69, %s70
      %p72 = scmp.eq.s32.totalorder %s71, 0
      %s74 = sadd.s32 %s73, 1
      %s75 = scalar_select %p72, %s73, %s74
      %p78 = pneg %p72
      %p79 = scmp.eq.s32.totalorder %s13, 1
      %p80 = por %p78, %p79
      %p81 = scmp.ne.s32.totalorder %s73, %s76
      %p82 = scmp.eq.s32.totalorder %s13, 0
      %p83 = por %p81, %p82
      %p84 = scmp.ne.s32.totalorder %s73, %s76
      %p85 = scmp.eq.s32.totalorder %s18, 1
      %p86 = por %p84, %p85
      %p87 = scmp.ne.s32.totalorder %s76, %s77
      %p88 = scmp.eq.s32.totalorder %s18, 0
      %p89 = por %p87, %p88
      %p90 = scmp.ne.s32.totalorder %s76, %s77
      %p91 = scmp.eq.s32.totalorder %s19, 1
      %p92 = por %p90, %p91
      %p94 = scmp.ne.s32.totalorder %s77, %s93
      %p95 = scmp.eq.s32.totalorder %s19, 0
      %p96 = por %p94, %p95
      %s97 = ssub.s32 %s20, %s32
      %s98 = ssub.s32 %s21, %s28
      %s99 = sor.u32 %s97, %s98
      %p100 = scmp.eq.s32.totalorder %s99, 0
      %s102 = sadd.s32 %s101, 1
      %s103 = scalar_select %p100, %s101, %s102
      %p106 = pneg %p100
      %p107 = scmp.eq.s32.totalorder %s13, 1
      %p108 = por %p106, %p107
      %p109 = scmp.ne.s32.totalorder %s101, %s104
      %p110 = scmp.eq.s32.totalorder %s13, 0
      %p111 = por %p109, %p110
      %p112 = scmp.ne.s32.totalorder %s101, %s104
      %p113 = scmp.eq.s32.totalorder %s18, 1
      %p114 = por %p112, %p113
      %p115 = scmp.ne.s32.totalorder %s104, %s105
      %p116 = scmp.eq.s32.totalorder %s18, 0
      %p117 = por %p115, %p116
      %p118 = scmp.ne.s32.totalorder %s104, %s105
      %p119 = scmp.eq.s32.totalorder %s19, 1
      %p120 = por %p118, %p119
      %p122 = scmp.ne.s32.totalorder %s105, %s121
      %p123 = scmp.eq.s32.totalorder %s19, 0
      %p124 = por %p122, %p123
      %s125 = ssub.s32 %s20, %s32
      %s126 = ssub.s32 %s21, %s28
      %s127 = sor.u32 %s125, %s126
      %p128 = scmp.eq.s32.totalorder %s127, 0
      %s130 = sadd.s32 %s129, 1
      %s131 = scalar_select %p128, %s129, %s130
      %p134 = pneg %p128
      %p135 = scmp.eq.s32.totalorder %s13, 1
      %p136 = por %p134, %p135
      %p137 = scmp.ne.s32.totalorder %s129, %s132
      %p138 = scmp.eq.s32.totalorder %s13, 0
      %p139 = por %p137, %p138
      %p140 = scmp.ne.s32.totalorder %s129, %s132
      %p141 = scmp.eq.s32.totalorder %s18, 1
      %p142 = por %p140, %p141
      %p143 = scmp.ne.s32.totalorder %s132, %s133
      %p144 = scmp.eq.s32.totalorder %s18, 0
      %p145 = por %p143, %p144
      %p146 = scmp.ne.s32.totalorder %s132, %s133
      %p147 = scmp.eq.s32.totalorder %s19, 1
      %p148 = por %p146, %p147
      %p150 = scmp.ne.s32.totalorder %s133, %s149
      %p151 = scmp.eq.s32.totalorder %s19, 0
      %p152 = por %p150, %p151
      %s153 = ssub.s32 %s20, %s32
      %p154 = scmp.eq.s32.totalorder %s153, 0
      %s156 = sadd.s32 %s155, 1
      %s157 = scalar_select %p154, %s155, %s156
      %p160 = pneg %p154
      %p161 = scmp.eq.s32.totalorder %s13, 1
      %p162 = por %p160, %p161
      %p163 = scmp.ne.s32.totalorder %s155, %s158
      %p164 = scmp.eq.s32.totalorder %s13, 0
      %p165 = por %p163, %p164
      %p166 = scmp.ne.s32.totalorder %s155, %s158
      %p167 = scmp.eq.s32.totalorder %s18, 1
      %p168 = por %p166, %p167
      %p169 = scmp.ne.s32.totalorder %s158, %s159
      %p170 = scmp.eq.s32.totalorder %s18, 0
      %p171 = por %p169, %p170
      %p172 = scmp.ne.s32.totalorder %s158, %s159
      %p173 = scmp.eq.s32.totalorder %s19, 1
      %p174 = por %p172, %p173
      %p176 = scmp.ne.s32.totalorder %s159, %s175
      %p177 = scmp.eq.s32.totalorder %s19, 0
      %p178 = por %p176, %p177
      %p179 = scmp.le.s32.totalorder 1, %s13
      %p180 = scmp.lt.s32.totalorder %s13, 3
      %p181 = pnand %p179, %p180
      %p182 = pneg %p181
      // Predicated region
      $region9: #{tpu_custom_call.1} parent=5 // pred_check
        _
      $region10: #{tpu_custom_call.1} parent=5 // pred_check_branch
        %184 = sbr.rel (%p181) target = $region12
      $region11: #{tpu_custom_call.1} parent=5 // pred_region
        %s185 = ssub.s32 %s13, 1
      $region12: #{tpu_custom_call.1} parent=5 // pred_fallthru
        _
      %p186 = scmp.lt.s32.totalorder %s13, 2
      // Predicated region
      $region13: #{tpu_custom_call.1} parent=5 // pred_check
        %p187 = pneg %p186
      $region14: #{tpu_custom_call.1} parent=5 // pred_check_branch
        %189 = sbr.rel (%p187) target = $region16
      $region15: #{tpu_custom_call.1} parent=5 // pred_region
        // Predicated region
        $region17: #{tpu_custom_call.1} parent=15 // pred_check
          %p190 = pneg %p47
        $region18: #{tpu_custom_call.1} parent=15 // pred_check_branch
          %192 = sbr.rel (%p190) target = $region20
        $region19: #{tpu_custom_call.1} parent=15 // pred_region
          %s193 = smul.u32 16, %s21
          %p194 = scmp.lt.s32.totalorder %s20, 1
          %s195 = scalar_select %p194, %s20, 1
          %p196 = scmp.lt.s32.totalorder %s193, 15
          %s197 = scalar_select %p196, %s193, 15
          %s198 = smul.addr %s197, 2
          %s199 = smul.addr %s195, 96
          %s200 = sadd.s32 %s198, %s199
          %s201 = smul.addr %s200, 8
          %s202 = scalar_lea.vmem %s0, %s201
          %s203 = smul.u32 16, %s21
        $region20: #{tpu_custom_call.1} parent=15 // pred_fallthru
          _
        // Predicated region
        $region21: #{tpu_custom_call.1} parent=15 // pred_check
          %p204 = pneg %p83
        $region22: #{tpu_custom_call.1} parent=15 // pred_check_branch
          %206 = sbr.rel (%p204) target = $region24
        $region23: #{tpu_custom_call.1} parent=15 // pred_region
          %s207 = sand.u32 %s73, 1
          %s208 = sand.u32 %s73, 1
          %s209 = smul.addr %s208, 48
          %s210 = scalar_lea.vmem [#allocation7], %s209
          %s211 = sadd.s32 %s21, 1
          %s212 = smul.u32 %s211, 16
          %p213 = scmp.lt.s32.totalorder %s212, 15
          %s214 = scalar_select %p213, %s212, 15
          %s215 = smul.addr %s214, 2
          %s216 = smul.addr %s20, 96
          %s217 = sadd.s32 %s215, %s216
          %s218 = smul.addr %s217, 8
          %s219 = scalar_lea.vmem %s1, %s218
          // Predicated region
          $region25: #{tpu_custom_call.1} parent=23 // pred_check
            _
          $region26: #{tpu_custom_call.1} parent=23 // pred_check_branch
            %221 = sbr.rel (0) target = $region28
          $region27: #{tpu_custom_call.1} parent=23 // pred_region
            // Predicated region
            $region29: #{tpu_custom_call.1} parent=27 // pred_check
              _
            $region30: #{tpu_custom_call.1} parent=27 // pred_check_branch
              %223 = sbr.rel (0) target = $region32
            $region31: #{tpu_custom_call.1} parent=27 // pred_region
              // Predicated region
              $region44: #{tpu_custom_call.1} parent=31 // pred_check
                _
              $region45: #{tpu_custom_call.1} parent=31 // pred_check_branch
                %248 = sbr.rel (0) target = $region47
              $region46: #{tpu_custom_call.1} parent=31 // pred_region
                loop: start=0, step=1, limit=1
                $region48: #{tpu_custom_call.1} parent=46 // loop_pre_header
                  _
                $region49: #{tpu_custom_call.1} parent=46 // loop_header
                  %s250 = sphi 0, %s254
                  %p251 = scmp.ge.s32.totalorder %s250, 1
                  %s255 = sphi %s219, %s219
                  %s256 = sphi %s210, %s210
                $region50: #{tpu_custom_call.1} parent=46 // loop_header_branch
                  %253 = sbr.rel (%p251) target = $region54
                $region51: #{tpu_custom_call.1} parent=46 // loop_body
                  %v257 = vld [vmem:[%s255] sm:$0xff]
                  %258 = vst [vmem:[%s256] sm:$0xff] %v257
                  %v259 = vld [vmem:[%s255 + $0x8] sm:$0xff]
                  %260 = vst [vmem:[%s256 + $0x8] sm:$0xff] %v259
                  %v261 = vld [vmem:[%s255 + $0x100] sm:$0xff]
                  %262 = vst [vmem:[%s256 + $0x10] sm:$0xff] %v261
                  %v263 = vld [vmem:[%s255 + $0x108] sm:$0xff]
                  %264 = vst [vmem:[%s256 + $0x18] sm:$0xff] %v263
                  %v265 = vld [vmem:[%s255 + $0x200] sm:$0xff]
                  %266 = vst [vmem:[%s256 + $0x20] sm:$0xff] %v265
                  %v267 = vld [vmem:[%s255 + $0x208] sm:$0xff]
                  %268 = vst [vmem:[%s256 + $0x28] sm:$0xff] %v267
                $region52: #{tpu_custom_call.1} parent=46 // loop_footer
                  %s254 = sadd.s32 1, %s250
                $region53: #{tpu_custom_call.1} parent=46 // loop_footer_branch
                  %249 = sbr.rel target = $region49
                $region54: #{tpu_custom_call.1} parent=46 // loop_exit
                  _
              $region47: #{tpu_custom_call.1} parent=31 // pred_fallthru
                _
              // Predicated region
              $region55: #{tpu_custom_call.1} parent=31 // pred_check
                _
              $region56: #{tpu_custom_call.1} parent=31 // pred_check_branch
                %270 = sbr.rel target = $region58
              $region57: #{tpu_custom_call.1} parent=31 // pred_region
                _
              $region58: #{tpu_custom_call.1} parent=31 // pred_fallthru
                _
            $region32: #{tpu_custom_call.1} parent=27 // pred_fallthru
              _
            // Predicated region
            $region33: #{tpu_custom_call.1} parent=27 // pred_check
              _
            $region34: #{tpu_custom_call.1} parent=27 // pred_check_branch
              %225 = sbr.rel target = $region36
            $region35: #{tpu_custom_call.1} parent=27 // pred_region
              loop: start=0, step=1, limit=1
              $region37: #{tpu_custom_call.1} parent=35 // loop_pre_header
                _
              $region38: #{tpu_custom_call.1} parent=35 // loop_header
                %s228 = sphi 0, %s232
                %p229 = scmp.ge.s32.totalorder %s228, 1
                %s233 = sphi %s219, %s219
                %s234 = sphi %s210, %s210
              $region39: #{tpu_custom_call.1} parent=35 // loop_header_branch
                %231 = sbr.rel (%p229) target = $region43
              $region40: #{tpu_custom_call.1} parent=35 // loop_body
                %v235 = vld [vmem:[%s233] sm:$0xff]
                %236 = vst [vmem:[%s234] sm:$0xff] %v235
                %v237 = vld [vmem:[%s233 + $0x8] sm:$0xff]
                %238 = vst [vmem:[%s234 + $0x8] sm:$0xff] %v237
                %v239 = vld [vmem:[%s233 + $0x100] sm:$0xff]
                %240 = vst [vmem:[%s234 + $0x10] sm:$0xff] %v239
                %v241 = vld [vmem:[%s233 + $0x108] sm:$0xff]
                %242 = vst [vmem:[%s234 + $0x18] sm:$0xff] %v241
                %v243 = vld [vmem:[%s233 + $0x200] sm:$0xff]
                %244 = vst [vmem:[%s234 + $0x20] sm:$0xff] %v243
                %v245 = vld [vmem:[%s233 + $0x208] sm:$0xff]
                %246 = vst [vmem:[%s234 + $0x28] sm:$0xff] %v245
              $region41: #{tpu_custom_call.1} parent=35 // loop_footer
                %s232 = sadd.s32 1, %s228
              $region42: #{tpu_custom_call.1} parent=35 // loop_footer_branch
                %227 = sbr.rel target = $region38
              $region43: #{tpu_custom_call.1} parent=35 // loop_exit
                _
            $region36: #{tpu_custom_call.1} parent=27 // pred_fallthru
              _
          $region28: #{tpu_custom_call.1} parent=23 // pred_fallthru
            _
          %271 = vnop
        $region24: #{tpu_custom_call.1} parent=15 // pred_fallthru
          _
        // Predicated region
        $region59: #{tpu_custom_call.1} parent=15 // pred_check
          %p272 = pneg %p111
        $region60: #{tpu_custom_call.1} parent=15 // pred_check_branch
          %274 = sbr.rel (%p272) target = $region62
        $region61: #{tpu_custom_call.1} parent=15 // pred_region
          %s275 = smul.u32 16, %s21
          %p276 = scmp.lt.s32.totalorder %s20, 1
          %s277 = scalar_select %p276, %s20, 1
          %p278 = scmp.lt.s32.totalorder %s275, 15
          %s279 = scalar_select %p278, %s275, 15
          %s280 = smul.addr %s279, 2
          %s281 = smul.addr %s277, 32
          %s282 = sadd.s32 %s280, %s281
          %s283 = smul.addr %s282, 8
          %s284 = scalar_lea.vmem %s2, %s283
          %s285 = smul.u32 16, %s21
        $region62: #{tpu_custom_call.1} parent=15 // pred_fallthru
          _
        // Predicated region
        $region63: #{tpu_custom_call.1} parent=15 // pred_check
          %p286 = pneg %p139
        $region64: #{tpu_custom_call.1} parent=15 // pred_check_branch
          %288 = sbr.rel (%p286) target = $region66
        $region65: #{tpu_custom_call.1} parent=15 // pred_region
          %s289 = smul.u32 16, %s21
          %p290 = scmp.lt.s32.totalorder %s20, 1
          %s291 = scalar_select %p290, %s20, 1
          %p292 = scmp.lt.s32.totalorder %s289, 15
          %s293 = scalar_select %p292, %s289, 15
          %s294 = smul.addr %s293, 2
          %s295 = smul.addr %s291, 32
          %s296 = sadd.s32 %s294, %s295
          %s297 = smul.addr %s296, 8
          %s298 = scalar_lea.vmem %s3, %s297
          %s299 = smul.u32 16, %s21
        $region66: #{tpu_custom_call.1} parent=15 // pred_fallthru
          _
      $region16: #{tpu_custom_call.1} parent=5 // pred_fallthru
        _
      %p300 = scmp.le.s32.totalorder 1, %s13
      %p301 = scmp.lt.s32.totalorder %s13, 3
      %p302 = pnand %p300, %p301
      %p303 = pneg %p302
      // Predicated region
      $region67: #{tpu_custom_call.1} parent=5 // pred_check
        _
      $region68: #{tpu_custom_call.1} parent=5 // pred_check_branch
        %305 = sbr.rel (%p302) target = $region70
      $region69: #{tpu_custom_call.1} parent=5 // pred_region
        %s306 = ssub.s32 %s13, 1
        %s307 = sand.u32 %s76, 1
        %s308 = sand.u32 %s76, 1
        %s309 = smul.addr %s308, 48
        %s310 = scalar_lea.vmem [#allocation7], %s309
        // Predicated region
        $region71: #{tpu_custom_call.1} parent=69 // pred_check
          %p311 = pneg %p89
        $region72: #{tpu_custom_call.1} parent=69 // pred_check_branch
          %313 = sbr.rel (%p311) target = $region74
        $region73: #{tpu_custom_call.1} parent=69 // pred_region
          _
        $region74: #{tpu_custom_call.1} parent=69 // pred_fallthru
          _
        %s314 = smul.u32 16, %s23
        %p315 = scmp.lt.s32.totalorder %s22, 1
        %s316 = scalar_select %p315, %s22, 1
        %p317 = scmp.lt.s32.totalorder %s314, 15
        %s318 = scalar_select %p317, %s314, 15
        %s319 = smul.addr %s318, 2
        %s320 = smul.addr %s316, 96
        %s321 = sadd.s32 %s319, %s320
        %s322 = smul.addr %s321, 8
        %s323 = scalar_lea.vmem %s0, %s322
        %p324 = pneg %p53
        %p325 = pneg %p50
        %s326 = sand.u32 %s76, 1
        %s327 = sand.u32 %s76, 1
        %s328 = smul.addr %s327, 48
        %s329 = scalar_lea.vmem [#allocation7], %s328
        %p330 = pneg %p89
        %p331 = pneg %p86
        %s332 = smul.u32 16, %s23
        %p333 = scmp.lt.s32.totalorder %s22, 1
        %s334 = scalar_select %p333, %s22, 1
        %p335 = scmp.lt.s32.totalorder %s332, 15
        %s336 = scalar_select %p335, %s332, 15
        %s337 = smul.addr %s336, 2
        %s338 = smul.addr %s334, 32
        %s339 = sadd.s32 %s337, %s338
        %s340 = smul.addr %s339, 8
        %s341 = scalar_lea.vmem %s2, %s340
        %p342 = pneg %p117
        %p343 = pneg %p114
        %s344 = smul.u32 16, %s23
        %p345 = scmp.lt.s32.totalorder %s22, 1
        %s346 = scalar_select %p345, %s22, 1
        %p347 = scmp.lt.s32.totalorder %s344, 15
        %s348 = scalar_select %p347, %s344, 15
        %s349 = smul.addr %s348, 2
        %s350 = smul.addr %s346, 32
        %s351 = sadd.s32 %s349, %s350
        %s352 = smul.addr %s351, 8
        %s353 = scalar_lea.vmem %s3, %s352
        %p354 = pneg %p145
        %p355 = pneg %p142
        %p356 = pneg %p171
        %p357 = pneg %p168
        %s358 = sand.u32 %s158, 1
        %s359 = scalar_lea.sflag [#allocation9], %s358
        %s360 = sand.u32 %s158, 1
        %s361 = smul.addr %s360, 40
        %s362 = scalar_lea.vmem [#allocation8], %s361
        %s363 = smul.u32 16, %s23
        %p364 = scmp.lt.s32.totalorder %s22, 1
        %s365 = scalar_select %p364, %s22, 1
        %p366 = scmp.lt.s32.totalorder %s363, 15
        %s367 = scalar_select %p366, %s363, 15
        %s368 = smul.addr %s367, 2
        %s369 = smul.addr %s365, 96
        %s370 = sadd.s32 %s368, %s369
        %s371 = smul.addr %s370, 8
        %s372 = scalar_lea.vmem %s0, %s371
        %s373 = smul.u32 16, %s23
        %s374 = sadd.s32 %s23, 1
        %s375 = smul.u32 %s374, 16
        %p376 = scmp.lt.s32.totalorder %s375, 15
        %s377 = scalar_select %p376, %s375, 15
        %s378 = smul.u32 16, %s23
        %p379 = scmp.lt.s32.totalorder %s22, 1
        %s380 = scalar_select %p379, %s22, 1
        %p381 = scmp.lt.s32.totalorder %s378, 15
        %s382 = scalar_select %p381, %s378, 15
        %s383 = smul.addr %s382, 2
        %s384 = smul.addr %s380, 32
        %s385 = sadd.s32 %s383, %s384
        %s386 = smul.addr %s385, 8
        %s387 = scalar_lea.vmem %s2, %s386
        %s388 = smul.u32 16, %s23
        %s389 = smul.u32 16, %s23
        %p390 = scmp.lt.s32.totalorder %s22, 1
        %s391 = scalar_select %p390, %s22, 1
        %p392 = scmp.lt.s32.totalorder %s389, 15
        %s393 = scalar_select %p392, %s389, 15
        %s394 = smul.addr %s393, 2
        %s395 = smul.addr %s391, 32
        %s396 = sadd.s32 %s394, %s395
        %s397 = smul.addr %s396, 8
        %s398 = scalar_lea.vmem %s3, %s397
        %s399 = smul.u32 16, %s23
        %p400 = scmp.eq.s32.totalorder %s23, 0
        // Predicated region
        $region75: #{tpu_custom_call.1} parent=69 // pred_check
          %p401 = pneg %p400
        $region76: #{tpu_custom_call.1} parent=69 // pred_check_branch
          %403 = sbr.rel (%p401) target = $region78
        $region77: #{tpu_custom_call.1} parent=69 // pred_region
          %vm404 = vcmask 64512
          %405 = vst.msk [vmem:[#allocation2] sm:$0xff] %vm404, 0.0
          %406 = vst.msk [vmem:[#allocation2 + $0x8] sm:$0xff] %vm404, 0.0
          %407 = vst.msk [vmem:[#allocation3] sm:$0xff] %vm404, 0.0
          %408 = vst.msk [vmem:[#allocation3 + $0x8] sm:$0xff] %vm404, 0.0
          %409 = vst.msk [vmem:[#allocation4] sm:$0xff] %vm404, 0.0
          %vm410 = vcmask 63488
          %411 = vst.msk [vmem:[#allocation4 + $0x8] sm:$0x7f] %vm410, 0.0
          %vm412 = vcmask 56320
          %413 = vst.msk [vmem:[#allocation5] sm:$0xff] %vm412, 0.0
          %414 = vst.msk [vmem:[#allocation5 + $0x8] sm:$0xff] %vm412, 0.0
          %415 = vst.msk [vmem:[#allocation6] sm:$0xff] %vm412, 0.0
          %vm416 = vcmask 55296
          %417 = vst.msk [vmem:[#allocation6 + $0x8] sm:$0x7f] %vm416, 0.0
        $region78: #{tpu_custom_call.1} parent=69 // pred_fallthru
          _
        %v418 = vld [vmem:[%s387] sm:$0xff]
        %v419 = vld [vmem:[%s387 + $0x8] sm:$0xff]
        %v420 = vld [vmem:[%s387 + $0x10] sm:$0xff]
        %v421 = vld [vmem:[%s387 + $0x18] sm:$0xff]
        %v422 = vld [vmem:[%s387 + $0x20] sm:$0xff]
        %v423 = vld [vmem:[%s387 + $0x28] sm:$0xff]
        %v424 = vld [vmem:[%s387 + $0x30] sm:$0xff]
        %v425 = vld [vmem:[%s387 + $0x38] sm:$0xff]
        %v426 = vld [vmem:[%s387 + $0x40] sm:$0xff]
        %v427 = vld [vmem:[%s387 + $0x48] sm:$0xff]
        %v428 = vld [vmem:[%s387 + $0x50] sm:$0xff]
        %v429 = vld [vmem:[%s387 + $0x58] sm:$0xff]
        %v430 = vld [vmem:[%s387 + $0x60] sm:$0xff]
        %v431 = vld [vmem:[%s387 + $0x68] sm:$0xff]
        %v432 = vld [vmem:[%s387 + $0x70] sm:$0xff]
        %v433 = vld [vmem:[%s387 + $0x78] sm:$0xff]
        %v434 = vld [vmem:[%s387 + $0x80] sm:$0xff]
        %v435 = vld [vmem:[%s387 + $0x88] sm:$0xff]
        %v436 = vld [vmem:[%s387 + $0x90] sm:$0xff]
        %v437 = vld [vmem:[%s387 + $0x98] sm:$0xff]
        %v438 = vld [vmem:[%s387 + $0xa0] sm:$0xff]
        %v439 = vld [vmem:[%s387 + $0xa8] sm:$0xff]
        %v440 = vld [vmem:[%s387 + $0xb0] sm:$0xff]
        %v441 = vld [vmem:[%s387 + $0xb8] sm:$0xff]
        %v442 = vld [vmem:[%s387 + $0xc0] sm:$0xff]
        %v443 = vld [vmem:[%s387 + $0xc8] sm:$0xff]
        %v444 = vld [vmem:[%s387 + $0xd0] sm:$0xff]
        %v445 = vld [vmem:[%s387 + $0xd8] sm:$0xff]
        %v446 = vld [vmem:[%s387 + $0xe0] sm:$0xff]
        %v447 = vld [vmem:[%s387 + $0xe8] sm:$0xff]
        %v448 = vld [vmem:[%s387 + $0xf0] sm:$0xff]
        %v449 = vld [vmem:[%s387 + $0xf8] sm:$0xff]
        %v450 = vld [vmem:[%s398] sm:$0xff]
        %v451 = vld [vmem:[%s398 + $0x8] sm:$0xff]
        %v452 = vld [vmem:[%s398 + $0x10] sm:$0xff]
        %v453 = vld [vmem:[%s398 + $0x18] sm:$0xff]
        %v454 = vld [vmem:[%s398 + $0x20] sm:$0xff]
        %v455 = vld [vmem:[%s398 + $0x28] sm:$0xff]
        %v456 = vld [vmem:[%s398 + $0x30] sm:$0xff]
        %v457 = vld [vmem:[%s398 + $0x38] sm:$0xff]
        %v458 = vld [vmem:[%s398 + $0x40] sm:$0xff]
        %v459 = vld [vmem:[%s398 + $0x48] sm:$0xff]
        %v460 = vld [vmem:[%s398 + $0x50] sm:$0xff]
        %v461 = vld [vmem:[%s398 + $0x58] sm:$0xff]
        %v462 = vld [vmem:[%s398 + $0x60] sm:$0xff]
        %v463 = vld [vmem:[%s398 + $0x68] sm:$0xff]
        %v464 = vld [vmem:[%s398 + $0x70] sm:$0xff]
        %v465 = vld [vmem:[%s398 + $0x78] sm:$0xff]
        %v466 = vld [vmem:[%s398 + $0x80] sm:$0xff]
        %v467 = vld [vmem:[%s398 + $0x88] sm:$0xff]
        %v468 = vld [vmem:[%s398 + $0x90] sm:$0xff]
        %v469 = vld [vmem:[%s398 + $0x98] sm:$0xff]
        %v470 = vld [vmem:[%s398 + $0xa0] sm:$0xff]
        %v471 = vld [vmem:[%s398 + $0xa8] sm:$0xff]
        %v472 = vld [vmem:[%s398 + $0xb0] sm:$0xff]
        %v473 = vld [vmem:[%s398 + $0xb8] sm:$0xff]
        %v474 = vld [vmem:[%s398 + $0xc0] sm:$0xff]
        %v475 = vld [vmem:[%s398 + $0xc8] sm:$0xff]
        %v476 = vld [vmem:[%s398 + $0xd0] sm:$0xff]
        %v477 = vld [vmem:[%s398 + $0xd8] sm:$0xff]
        %v478 = vld [vmem:[%s398 + $0xe0] sm:$0xff]
        %v479 = vld [vmem:[%s398 + $0xe8] sm:$0xff]
        %v480 = vld [vmem:[%s398 + $0xf0] sm:$0xff]
        %v481 = vld [vmem:[%s398 + $0xf8] sm:$0xff]
        %v482 = vsub.f32 %v418, %v450
        %v483 = vsub.f32 %v419, %v451
        %v484 = vsub.f32 %v420, %v452
        %v485 = vsub.f32 %v421, %v453
        %v486 = vsub.f32 %v422, %v454
        %v487 = vsub.f32 %v423, %v455
        %v488 = vsub.f32 %v424, %v456
        %v489 = vsub.f32 %v425, %v457
        %v490 = vsub.f32 %v426, %v458
        %v491 = vsub.f32 %v427, %v459
        %v492 = vsub.f32 %v428, %v460
        %v493 = vsub.f32 %v429, %v461
        %v494 = vsub.f32 %v430, %v462
        %v495 = vsub.f32 %v431, %v463
        %v496 = vsub.f32 %v432, %v464
        %v497 = vsub.f32 %v433, %v465
        %v498 = vsub.f32 %v434, %v466
        %v499 = vsub.f32 %v435, %v467
        %v500 = vsub.f32 %v436, %v468
        %v501 = vsub.f32 %v437, %v469
        %v502 = vsub.f32 %v438, %v470
        %v503 = vsub.f32 %v439, %v471
        %v504 = vsub.f32 %v440, %v472
        %v505 = vsub.f32 %v441, %v473
        %v506 = vsub.f32 %v442, %v474
        %v507 = vsub.f32 %v443, %v475
        %v508 = vsub.f32 %v444, %v476
        %v509 = vsub.f32 %v445, %v477
        %v510 = vsub.f32 %v446, %v478
        %v511 = vsub.f32 %v447, %v479
        %v512 = vsub.f32 %v448, %v480
        %v513 = vsub.f32 %v449, %v481
        %v514 = vld [vmem:[#allocation2] sm:$0xff]
        %v515 = vld [vmem:[#allocation2 + $0x8] sm:$0xff]
        %v516 = vmul.f32 %v482, %v482
        %v517 = vmul.f32 %v483, %v483
        %v518 = vmul.f32 %v484, %v484
        %v519 = vmul.f32 %v485, %v485
        %v520 = vmul.f32 %v486, %v486
        %v521 = vmul.f32 %v487, %v487
        %v522 = vmul.f32 %v488, %v488
        %v523 = vmul.f32 %v489, %v489
        %v524 = vmul.f32 %v490, %v490
        %v525 = vmul.f32 %v491, %v491
        %v526 = vmul.f32 %v492, %v492
        %v527 = vmul.f32 %v493, %v493
        %v528 = vmul.f32 %v494, %v494
        %v529 = vmul.f32 %v495, %v495
        %v530 = vmul.f32 %v496, %v496
        %v531 = vmul.f32 %v497, %v497
        %v532 = vmul.f32 %v498, %v498
        %v533 = vmul.f32 %v499, %v499
        %v534 = vmul.f32 %v500, %v500
        %v535 = vmul.f32 %v501, %v501
        %v536 = vmul.f32 %v502, %v502
        %v537 = vmul.f32 %v503, %v503
        %v538 = vmul.f32 %v504, %v504
        %v539 = vmul.f32 %v505, %v505
        %v540 = vmul.f32 %v506, %v506
        %v541 = vmul.f32 %v507, %v507
        %v542 = vmul.f32 %v508, %v508
        %v543 = vmul.f32 %v509, %v509
        %v544 = vmul.f32 %v510, %v510
        %v545 = vmul.f32 %v511, %v511
        %v546 = vmul.f32 %v512, %v512
        %v547 = vmul.f32 %v513, %v513
        %vm548 = vcmask 64512
        %v549 = vsel %vm548, %v516, 0.0
        %v550 = vsel %vm548, %v518, 0.0
        %v551 = vadd.f32 %v549, %v550
        %v552 = vsel %vm548, %v520, 0.0
        %v553 = vadd.f32 %v551, %v552
        %v554 = vsel %vm548, %v522, 0.0
        %v555 = vadd.f32 %v553, %v554
        %v556 = vsel %vm548, %v524, 0.0
        %v557 = vadd.f32 %v555, %v556
        %v558 = vsel %vm548, %v526, 0.0
        %v559 = vadd.f32 %v557, %v558
        %v560 = vsel %vm548, %v528, 0.0
        %v561 = vadd.f32 %v559, %v560
        %v562 = vsel %vm548, %v530, 0.0
        %v563 = vadd.f32 %v561, %v562
        %v564 = vsel %vm548, %v532, 0.0
        %v565 = vadd.f32 %v563, %v564
        %v566 = vsel %vm548, %v534, 0.0
        %v567 = vadd.f32 %v565, %v566
        %v568 = vsel %vm548, %v536, 0.0
        %v569 = vadd.f32 %v567, %v568
        %v570 = vsel %vm548, %v538, 0.0
        %v571 = vadd.f32 %v569, %v570
        %v572 = vsel %vm548, %v540, 0.0
        %v573 = vadd.f32 %v571, %v572
        %v574 = vsel %vm548, %v542, 0.0
        %v575 = vadd.f32 %v573, %v574
        %v576 = vsel %vm548, %v544, 0.0
        %v577 = vadd.f32 %v575, %v576
        %v578 = vsel %vm548, %v546, 0.0
        %v579 = vadd.f32 %v577, %v578
        %v580 = vsel %vm548, %v517, 0.0
        %v581 = vsel %vm548, %v519, 0.0
        %v582 = vadd.f32 %v580, %v581
        %v583 = vsel %vm548, %v521, 0.0
        %v584 = vadd.f32 %v582, %v583
        %v585 = vsel %vm548, %v523, 0.0
        %v586 = vadd.f32 %v584, %v585
        %v587 = vsel %vm548, %v525, 0.0
        %v588 = vadd.f32 %v586, %v587
        %v589 = vsel %vm548, %v527, 0.0
        %v590 = vadd.f32 %v588, %v589
        %v591 = vsel %vm548, %v529, 0.0
        %v592 = vadd.f32 %v590, %v591
        %v593 = vsel %vm548, %v531, 0.0
        %v594 = vadd.f32 %v592, %v593
        %v595 = vsel %vm548, %v533, 0.0
        %v596 = vadd.f32 %v594, %v595
        %v597 = vsel %vm548, %v535, 0.0
        %v598 = vadd.f32 %v596, %v597
        %v599 = vsel %vm548, %v537, 0.0
        %v600 = vadd.f32 %v598, %v599
        %v601 = vsel %vm548, %v539, 0.0
        %v602 = vadd.f32 %v600, %v601
        %v603 = vsel %vm548, %v541, 0.0
        %v604 = vadd.f32 %v602, %v603
        %v605 = vsel %vm548, %v543, 0.0
        %v606 = vadd.f32 %v604, %v605
        %v607 = vsel %vm548, %v545, 0.0
        %v608 = vadd.f32 %v606, %v607
        %v609 = vsel %vm548, %v547, 0.0
        %v610 = vadd.f32 %v608, %v609
        %v611 = vadd.f32 %v514, %v579
        %v612 = vadd.f32 %v515, %v610
        %613 = vst.msk [vmem:[#allocation2] sm:$0xff] %vm548, %v611
        %614 = vst.msk [vmem:[#allocation2 + $0x8] sm:$0xff] %vm548, %v612
        %s615 = smul.u32 %s23, 16
        %v616 = vstv %s615
        %v617 = vadd.s32 %v616, 1
        %v618 = vadd.s32 %v616, 2
        %v619 = vadd.s32 %v616, 3
        %v620 = vadd.s32 %v616, 4
        %v621 = vadd.s32 %v616, 5
        %v622 = vadd.s32 %v616, 6
        %v623 = vadd.s32 %v616, 7
        %v624 = vadd.s32 %v616, 8
        %v625 = vadd.s32 %v616, 9
        %v626 = vadd.s32 %v616, 10
        %v627 = vadd.s32 %v616, 11
        %v628 = vadd.s32 %v616, 12
        %v629 = vadd.s32 %v616, 13
        %v630 = vadd.s32 %v616, 14
        %v631 = vadd.s32 %v616, 15
        %vm632 = vcmp.lt.s32.totalorder %v616, 15
        %vm633 = vcmp.lt.s32.totalorder %v617, 15
        %vm634 = vcmp.lt.s32.totalorder %v618, 15
        %vm635 = vcmp.lt.s32.totalorder %v619, 15
        %vm636 = vcmp.lt.s32.totalorder %v620, 15
        %vm637 = vcmp.lt.s32.totalorder %v621, 15
        %vm638 = vcmp.lt.s32.totalorder %v622, 15
        %vm639 = vcmp.lt.s32.totalorder %v623, 15
        %vm640 = vcmp.lt.s32.totalorder %v624, 15
        %vm641 = vcmp.lt.s32.totalorder %v625, 15
        %vm642 = vcmp.lt.s32.totalorder %v626, 15
        %vm643 = vcmp.lt.s32.totalorder %v627, 15
        %vm644 = vcmp.lt.s32.totalorder %v628, 15
        %vm645 = vcmp.lt.s32.totalorder %v629, 15
        %vm646 = vcmp.lt.s32.totalorder %v630, 15
        %vm647 = vcmp.lt.s32.totalorder %v631, 15
        %v648 = vsel %vm632, 1, 0
        %v649 = vsel %vm633, 1, 0
        %v650 = vsel %vm634, 1, 0
        %v651 = vsel %vm635, 1, 0
        %v652 = vsel %vm636, 1, 0
        %v653 = vsel %vm637, 1, 0
        %v654 = vsel %vm638, 1, 0
        %v655 = vsel %vm639, 1, 0
        %v656 = vsel %vm640, 1, 0
        %v657 = vsel %vm641, 1, 0
        %v658 = vsel %vm642, 1, 0
        %v659 = vsel %vm643, 1, 0
        %v660 = vsel %vm644, 1, 0
        %v661 = vsel %vm645, 1, 0
        %v662 = vsel %vm646, 1, 0
        %v663 = vsel %vm647, 1, 0
        %v664 = vcvt.s32.f32 %v648
        %v665 = vcvt.s32.f32 %v649
        %v666 = vcvt.s32.f32 %v650
        %v667 = vcvt.s32.f32 %v651
        %v668 = vcvt.s32.f32 %v652
        %v669 = vcvt.s32.f32 %v653
        %v670 = vcvt.s32.f32 %v654
        %v671 = vcvt.s32.f32 %v655
        %v672 = vcvt.s32.f32 %v656
        %v673 = vcvt.s32.f32 %v657
        %v674 = vcvt.s32.f32 %v658
        %v675 = vcvt.s32.f32 %v659
        %v676 = vcvt.s32.f32 %v660
        %v677 = vcvt.s32.f32 %v661
        %v678 = vcvt.s32.f32 %v662
        %v679 = vcvt.s32.f32 %v663
        %v680 = vld [vmem:[%s372] sm:$0xff]
        %v681 = vld [vmem:[%s372 + $0x8] sm:$0xff]
        %v682 = vld [vmem:[%s372 + $0x10] sm:$0xff]
        %v683 = vld [vmem:[%s372 + $0x18] sm:$0xff]
        %v684 = vld [vmem:[%s372 + $0x20] sm:$0xff]
        %v685 = vld [vmem:[%s372 + $0x28] sm:$0xff]
        %v686 = vld [vmem:[%s372 + $0x30] sm:$0xff]
        %v687 = vld [vmem:[%s372 + $0x38] sm:$0xff]
        %v688 = vld [vmem:[%s372 + $0x40] sm:$0xff]
        %v689 = vld [vmem:[%s372 + $0x48] sm:$0xff]
        %v690 = vld [vmem:[%s372 + $0x50] sm:$0xff]
        %v691 = vld [vmem:[%s372 + $0x58] sm:$0xff]
        %v692 = vld [vmem:[%s372 + $0x60] sm:$0xff]
        %v693 = vld [vmem:[%s372 + $0x68] sm:$0xff]
        %v694 = vld [vmem:[%s372 + $0x70] sm:$0xff]
        %v695 = vld [vmem:[%s372 + $0x78] sm:$0xff]
        %v696 = vld [vmem:[%s372 + $0x80] sm:$0xff]
        %v697 = vld [vmem:[%s372 + $0x88] sm:$0xff]
        %v698 = vld [vmem:[%s372 + $0x90] sm:$0xff]
        %v699 = vld [vmem:[%s372 + $0x98] sm:$0xff]
        %v700 = vld [vmem:[%s372 + $0xa0] sm:$0xff]
        %v701 = vld [vmem:[%s372 + $0xa8] sm:$0xff]
        %v702 = vld [vmem:[%s372 + $0xb0] sm:$0xff]
        %v703 = vld [vmem:[%s372 + $0xb8] sm:$0xff]
        %v704 = vld [vmem:[%s372 + $0xc0] sm:$0xff]
        %v705 = vld [vmem:[%s372 + $0xc8] sm:$0xff]
        %v706 = vld [vmem:[%s372 + $0xd0] sm:$0xff]
        %v707 = vld [vmem:[%s372 + $0xd8] sm:$0xff]
        %v708 = vld [vmem:[%s372 + $0xe0] sm:$0xff]
        %v709 = vld [vmem:[%s372 + $0xe8] sm:$0xff]
        %v710 = vld [vmem:[%s372 + $0xf0] sm:$0xff]
        %v711 = vld [vmem:[%s372 + $0xf8] sm:$0xff]
        %v712 = vld [vmem:[%s310] sm:$0xff]
        %v713 = vld [vmem:[%s310 + $0x8] sm:$0xff]
        %v714 = vsub.f32 %v682, %v680
        %v715 = vsub.f32 %v683, %v681
        %v716 = vsub.f32 %v684, %v682
        %v717 = vsub.f32 %v685, %v683
        %v718 = vsub.f32 %v686, %v684
        %v719 = vsub.f32 %v687, %v685
        %v720 = vsub.f32 %v688, %v686
        %v721 = vsub.f32 %v689, %v687
        %v722 = vsub.f32 %v690, %v688
        %v723 = vsub.f32 %v691, %v689
        %v724 = vsub.f32 %v692, %v690
        %v725 = vsub.f32 %v693, %v691
        %v726 = vsub.f32 %v694, %v692
        %v727 = vsub.f32 %v695, %v693
        %v728 = vsub.f32 %v696, %v694
        %v729 = vsub.f32 %v697, %v695
        %v730 = vsub.f32 %v698, %v696
        %v731 = vsub.f32 %v699, %v697
        %v732 = vsub.f32 %v700, %v698
        %v733 = vsub.f32 %v701, %v699
        %v734 = vsub.f32 %v702, %v700
        %v735 = vsub.f32 %v703, %v701
        %v736 = vsub.f32 %v704, %v702
        %v737 = vsub.f32 %v705, %v703
        %v738 = vsub.f32 %v706, %v704
        %v739 = vsub.f32 %v707, %v705
        %v740 = vsub.f32 %v708, %v706
        %v741 = vsub.f32 %v709, %v707
        %v742 = vsub.f32 %v710, %v708
        %v743 = vsub.f32 %v711, %v709
        %v744 = vsub.f32 %v712, %v710
        %v745 = vsub.f32 %v713, %v711
        %vm778 = vcmask 1040384
        %v779 = vrot.slane %v680, 7
        %v780 = vrot.slane %v681, 7
        %v781 = vsel %vm778, %v779, %v780
        %v782 = vrot.slane %v682, 7
        %v783 = vrot.slane %v683, 7
        %v784 = vsel %vm778, %v782, %v783
        %v785 = vrot.slane %v684, 7
        %v786 = vrot.slane %v685, 7
        %v787 = vsel %vm778, %v785, %v786
        %v788 = vrot.slane %v686, 7
        %v789 = vrot.slane %v687, 7
        %v790 = vsel %vm778, %v788, %v789
        %v791 = vrot.slane %v688, 7
        %v792 = vrot.slane %v689, 7
        %v793 = vsel %vm778, %v791, %v792
        %v794 = vrot.slane %v690, 7
        %v795 = vrot.slane %v691, 7
        %v796 = vsel %vm778, %v794, %v795
        %v797 = vrot.slane %v692, 7
        %v798 = vrot.slane %v693, 7
        %v799 = vsel %vm778, %v797, %v798
        %v800 = vrot.slane %v694, 7
        %v801 = vrot.slane %v695, 7
        %v802 = vsel %vm778, %v800, %v801
        %v803 = vrot.slane %v696, 7
        %v804 = vrot.slane %v697, 7
        %v805 = vsel %vm778, %v803, %v804
        %v806 = vrot.slane %v698, 7
        %v807 = vrot.slane %v699, 7
        %v808 = vsel %vm778, %v806, %v807
        %v809 = vrot.slane %v700, 7
        %v810 = vrot.slane %v701, 7
        %v811 = vsel %vm778, %v809, %v810
        %v812 = vrot.slane %v702, 7
        %v813 = vrot.slane %v703, 7
        %v814 = vsel %vm778, %v812, %v813
        %v815 = vrot.slane %v704, 7
        %v816 = vrot.slane %v705, 7
        %v817 = vsel %vm778, %v815, %v816
        %v818 = vrot.slane %v706, 7
        %v819 = vrot.slane %v707, 7
        %v820 = vsel %vm778, %v818, %v819
        %v821 = vrot.slane %v708, 7
        %v822 = vrot.slane %v709, 7
        %v823 = vsel %vm778, %v821, %v822
        %v824 = vrot.slane %v710, 7
        %v825 = vrot.slane %v711, 7
        %v826 = vsel %vm778, %v824, %v825
        %v859 = vsub.f32 %v680, %v779
        %v860 = vsub.f32 %v681, %v781
        %v861 = vsub.f32 %v682, %v782
        %v862 = vsub.f32 %v683, %v784
        %v863 = vsub.f32 %v684, %v785
        %v864 = vsub.f32 %v685, %v787
        %v865 = vsub.f32 %v686, %v788
        %v866 = vsub.f32 %v687, %v790
        %v867 = vsub.f32 %v688, %v791
        %v868 = vsub.f32 %v689, %v793
        %v869 = vsub.f32 %v690, %v794
        %v870 = vsub.f32 %v691, %v796
        %v871 = vsub.f32 %v692, %v797
        %v872 = vsub.f32 %v693, %v799
        %v873 = vsub.f32 %v694, %v800
        %v874 = vsub.f32 %v695, %v802
        %v875 = vsub.f32 %v696, %v803
        %v876 = vsub.f32 %v697, %v805
        %v877 = vsub.f32 %v698, %v806
        %v878 = vsub.f32 %v699, %v808
        %v879 = vsub.f32 %v700, %v809
        %v880 = vsub.f32 %v701, %v811
        %v881 = vsub.f32 %v702, %v812
        %v882 = vsub.f32 %v703, %v814
        %v883 = vsub.f32 %v704, %v815
        %v884 = vsub.f32 %v705, %v817
        %v885 = vsub.f32 %v706, %v818
        %v886 = vsub.f32 %v707, %v820
        %v887 = vsub.f32 %v708, %v821
        %v888 = vsub.f32 %v709, %v823
        %v889 = vsub.f32 %v710, %v824
        %v890 = vsub.f32 %v711, %v826
        %891 = vrot.lane.b32.xlu0 %v680, 1
        %v892 = vpop.permute.xlu0 %891
        %893 = vrot.lane.b32.xlu0 %v681, 1
        %v894 = vpop.permute.xlu0 %893
        %895 = vrot.lane.b32.xlu0 %v682, 1
        %v896 = vpop.permute.xlu0 %895
        %897 = vrot.lane.b32.xlu0 %v683, 1
        %v898 = vpop.permute.xlu0 %897
        %899 = vrot.lane.b32.xlu0 %v684, 1
        %v900 = vpop.permute.xlu0 %899
        %901 = vrot.lane.b32.xlu0 %v685, 1
        %v902 = vpop.permute.xlu0 %901
        %903 = vrot.lane.b32.xlu0 %v686, 1
        %v904 = vpop.permute.xlu0 %903
        %905 = vrot.lane.b32.xlu0 %v687, 1
        %v906 = vpop.permute.xlu0 %905
        %907 = vrot.lane.b32.xlu0 %v688, 1
        %v908 = vpop.permute.xlu0 %907
        %909 = vrot.lane.b32.xlu0 %v689, 1
        %v910 = vpop.permute.xlu0 %909
        %911 = vrot.lane.b32.xlu0 %v690, 1
        %v912 = vpop.permute.xlu0 %911
        %913 = vrot.lane.b32.xlu0 %v691, 1
        %v914 = vpop.permute.xlu0 %913
        %915 = vrot.lane.b32.xlu0 %v692, 1
        %v916 = vpop.permute.xlu0 %915
        %917 = vrot.lane.b32.xlu0 %v693, 1
        %v918 = vpop.permute.xlu0 %917
        %919 = vrot.lane.b32.xlu0 %v694, 1
        %v920 = vpop.permute.xlu0 %919
        %921 = vrot.lane.b32.xlu0 %v695, 1
        %v922 = vpop.permute.xlu0 %921
        %923 = vrot.lane.b32.xlu0 %v696, 1
        %v924 = vpop.permute.xlu0 %923
        %925 = vrot.lane.b32.xlu0 %v697, 1
        %v926 = vpop.permute.xlu0 %925
        %927 = vrot.lane.b32.xlu0 %v698, 1
        %v928 = vpop.permute.xlu0 %927
        %929 = vrot.lane.b32.xlu0 %v699, 1
        %v930 = vpop.permute.xlu0 %929
        %931 = vrot.lane.b32.xlu0 %v700, 1
        %v932 = vpop.permute.xlu0 %931
        %933 = vrot.lane.b32.xlu0 %v701, 1
        %v934 = vpop.permute.xlu0 %933
        %935 = vrot.lane.b32.xlu0 %v702, 1
        %v936 = vpop.permute.xlu0 %935
        %937 = vrot.lane.b32.xlu0 %v703, 1
        %v938 = vpop.permute.xlu0 %937
        %939 = vrot.lane.b32.xlu0 %v704, 1
        %v940 = vpop.permute.xlu0 %939
        %941 = vrot.lane.b32.xlu0 %v705, 1
        %v942 = vpop.permute.xlu0 %941
        %943 = vrot.lane.b32.xlu0 %v706, 1
        %v944 = vpop.permute.xlu0 %943
        %945 = vrot.lane.b32.xlu0 %v707, 1
        %v946 = vpop.permute.xlu0 %945
        %947 = vrot.lane.b32.xlu0 %v708, 1
        %v948 = vpop.permute.xlu0 %947
        %949 = vrot.lane.b32.xlu0 %v709, 1
        %v950 = vpop.permute.xlu0 %949
        %951 = vrot.lane.b32.xlu0 %v710, 1
        %v952 = vpop.permute.xlu0 %951
        %953 = vrot.lane.b32.xlu0 %v711, 1
        %v954 = vpop.permute.xlu0 %953
        %v987 = vsub.f32 %v680, %v892
        %v988 = vsub.f32 %v681, %v894
        %v989 = vsub.f32 %v682, %v896
        %v990 = vsub.f32 %v683, %v898
        %v991 = vsub.f32 %v684, %v900
        %v992 = vsub.f32 %v685, %v902
        %v993 = vsub.f32 %v686, %v904
        %v994 = vsub.f32 %v687, %v906
        %v995 = vsub.f32 %v688, %v908
        %v996 = vsub.f32 %v689, %v910
        %v997 = vsub.f32 %v690, %v912
        %v998 = vsub.f32 %v691, %v914
        %v999 = vsub.f32 %v692, %v916
        %v1000 = vsub.f32 %v693, %v918
        %v1001 = vsub.f32 %v694, %v920
        %v1002 = vsub.f32 %v695, %v922
        %v1003 = vsub.f32 %v696, %v924
        %v1004 = vsub.f32 %v697, %v926
        %v1005 = vsub.f32 %v698, %v928
        %v1006 = vsub.f32 %v699, %v930
        %v1007 = vsub.f32 %v700, %v932
        %v1008 = vsub.f32 %v701, %v934
        %v1009 = vsub.f32 %v702, %v936
        %v1010 = vsub.f32 %v703, %v938
        %v1011 = vsub.f32 %v704, %v940
        %v1012 = vsub.f32 %v705, %v942
        %v1013 = vsub.f32 %v706, %v944
        %v1014 = vsub.f32 %v707, %v946
        %v1015 = vsub.f32 %v708, %v948
        %v1016 = vsub.f32 %v709, %v950
        %v1017 = vsub.f32 %v710, %v952
        %v1018 = vsub.f32 %v711, %v954
        %v1019 = vmul.f32 %v714, %v714
        %v1020 = vmul.f32 %v715, %v715
        %v1021 = vmul.f32 %v716, %v716
        %v1022 = vmul.f32 %v717, %v717
        %v1023 = vmul.f32 %v718, %v718
        %v1024 = vmul.f32 %v719, %v719
        %v1025 = vmul.f32 %v720, %v720
        %v1026 = vmul.f32 %v721, %v721
        %v1027 = vmul.f32 %v722, %v722
        %v1028 = vmul.f32 %v723, %v723
        %v1029 = vmul.f32 %v724, %v724
        %v1030 = vmul.f32 %v725, %v725
        %v1031 = vmul.f32 %v726, %v726
        %v1032 = vmul.f32 %v727, %v727
        %v1033 = vmul.f32 %v728, %v728
        %v1034 = vmul.f32 %v729, %v729
        %v1035 = vmul.f32 %v730, %v730
        %v1036 = vmul.f32 %v731, %v731
        %v1037 = vmul.f32 %v732, %v732
        %v1038 = vmul.f32 %v733, %v733
        %v1039 = vmul.f32 %v734, %v734
        %v1040 = vmul.f32 %v735, %v735
        %v1041 = vmul.f32 %v736, %v736
        %v1042 = vmul.f32 %v737, %v737
        %v1043 = vmul.f32 %v738, %v738
        %v1044 = vmul.f32 %v739, %v739
        %v1045 = vmul.f32 %v740, %v740
        %v1046 = vmul.f32 %v741, %v741
        %v1047 = vmul.f32 %v742, %v742
        %v1048 = vmul.f32 %v743, %v743
        %v1049 = vmul.f32 %v744, %v744
        %v1050 = vmul.f32 %v745, %v745
        %v1051 = vsel %vm548, %v1019, 0.0
        %v1052 = vsel %vm548, %v1021, 0.0
        %v1053 = vadd.f32 %v1051, %v1052
        %v1054 = vsel %vm548, %v1023, 0.0
        %v1055 = vadd.f32 %v1053, %v1054
        %v1056 = vsel %vm548, %v1025, 0.0
        %v1057 = vadd.f32 %v1055, %v1056
        %v1058 = vsel %vm548, %v1027, 0.0
        %v1059 = vadd.f32 %v1057, %v1058
        %v1060 = vsel %vm548, %v1029, 0.0
        %v1061 = vadd.f32 %v1059, %v1060
        %v1062 = vsel %vm548, %v1031, 0.0
        %v1063 = vadd.f32 %v1061, %v1062
        %v1064 = vsel %vm548, %v1033, 0.0
        %v1065 = vadd.f32 %v1063, %v1064
        %v1066 = vsel %vm548, %v1035, 0.0
        %v1067 = vadd.f32 %v1065, %v1066
        %v1068 = vsel %vm548, %v1037, 0.0
        %v1069 = vadd.f32 %v1067, %v1068
        %v1070 = vsel %vm548, %v1039, 0.0
        %v1071 = vadd.f32 %v1069, %v1070
        %v1072 = vsel %vm548, %v1041, 0.0
        %v1073 = vadd.f32 %v1071, %v1072
        %v1074 = vsel %vm548, %v1043, 0.0
        %v1075 = vadd.f32 %v1073, %v1074
        %v1076 = vsel %vm548, %v1045, 0.0
        %v1077 = vadd.f32 %v1075, %v1076
        %v1078 = vsel %vm548, %v1047, 0.0
        %v1079 = vadd.f32 %v1077, %v1078
        %v1080 = vsel %vm548, %v1049, 0.0
        %v1081 = vadd.f32 %v1079, %v1080
        %v1082 = vsel %vm548, %v1020, 0.0
        %v1083 = vsel %vm548, %v1022, 0.0
        %v1084 = vadd.f32 %v1082, %v1083
        %v1085 = vsel %vm548, %v1024, 0.0
        %v1086 = vadd.f32 %v1084, %v1085
        %v1087 = vsel %vm548, %v1026, 0.0
        %v1088 = vadd.f32 %v1086, %v1087
        %v1089 = vsel %vm548, %v1028, 0.0
        %v1090 = vadd.f32 %v1088, %v1089
        %v1091 = vsel %vm548, %v1030, 0.0
        %v1092 = vadd.f32 %v1090, %v1091
        %v1093 = vsel %vm548, %v1032, 0.0
        %v1094 = vadd.f32 %v1092, %v1093
        %v1095 = vsel %vm548, %v1034, 0.0
        %v1096 = vadd.f32 %v1094, %v1095
        %v1097 = vsel %vm548, %v1036, 0.0
        %v1098 = vadd.f32 %v1096, %v1097
        %v1099 = vsel %vm548, %v1038, 0.0
        %v1100 = vadd.f32 %v1098, %v1099
        %v1101 = vsel %vm548, %v1040, 0.0
        %v1102 = vadd.f32 %v1100, %v1101
        %v1103 = vsel %vm548, %v1042, 0.0
        %v1104 = vadd.f32 %v1102, %v1103
        %v1105 = vsel %vm548, %v1044, 0.0
        %v1106 = vadd.f32 %v1104, %v1105
        %v1107 = vsel %vm548, %v1046, 0.0
        %v1108 = vadd.f32 %v1106, %v1107
        %v1109 = vsel %vm548, %v1048, 0.0
        %v1110 = vadd.f32 %v1108, %v1109
        %v1111 = vsel %vm548, %v1050, 0.0
        %v1112 = vadd.f32 %v1110, %v1111
        %v1113 = vadd.f32 %v1081, 0.0
        %v1114 = vadd.f32 %v1112, 0.0
        %v1115 = vmul.f32 %v859, %v859
        %v1116 = vmul.f32 %v860, %v860
        %v1117 = vmul.f32 %v861, %v861
        %v1118 = vmul.f32 %v862, %v862
        %v1119 = vmul.f32 %v863, %v863
        %v1120 = vmul.f32 %v864, %v864
        %v1121 = vmul.f32 %v865, %v865
        %v1122 = vmul.f32 %v866, %v866
        %v1123 = vmul.f32 %v867, %v867
        %v1124 = vmul.f32 %v868, %v868
        %v1125 = vmul.f32 %v869, %v869
        %v1126 = vmul.f32 %v870, %v870
        %v1127 = vmul.f32 %v871, %v871
        %v1128 = vmul.f32 %v872, %v872
        %v1129 = vmul.f32 %v873, %v873
        %v1130 = vmul.f32 %v874, %v874
        %v1131 = vmul.f32 %v875, %v875
        %v1132 = vmul.f32 %v876, %v876
        %v1133 = vmul.f32 %v877, %v877
        %v1134 = vmul.f32 %v878, %v878
        %v1135 = vmul.f32 %v879, %v879
        %v1136 = vmul.f32 %v880, %v880
        %v1137 = vmul.f32 %v881, %v881
        %v1138 = vmul.f32 %v882, %v882
        %v1139 = vmul.f32 %v883, %v883
        %v1140 = vmul.f32 %v884, %v884
        %v1141 = vmul.f32 %v885, %v885
        %v1142 = vmul.f32 %v886, %v886
        %v1143 = vmul.f32 %v887, %v887
        %v1144 = vmul.f32 %v888, %v888
        %v1145 = vmul.f32 %v889, %v889
        %v1146 = vmul.f32 %v890, %v890
        %vm1147 = vcmask 64513
        %v1148 = vsel %vm1147, %v1115, 0.0
        %v1149 = vsel %vm1147, %v1117, 0.0
        %v1150 = vadd.f32 %v1148, %v1149
        %v1151 = vsel %vm1147, %v1119, 0.0
        %v1152 = vadd.f32 %v1150, %v1151
        %v1153 = vsel %vm1147, %v1121, 0.0
        %v1154 = vadd.f32 %v1152, %v1153
        %v1155 = vsel %vm1147, %v1123, 0.0
        %v1156 = vadd.f32 %v1154, %v1155
        %v1157 = vsel %vm1147, %v1125, 0.0
        %v1158 = vadd.f32 %v1156, %v1157
        %v1159 = vsel %vm1147, %v1127, 0.0
        %v1160 = vadd.f32 %v1158, %v1159
        %v1161 = vsel %vm1147, %v1129, 0.0
        %v1162 = vadd.f32 %v1160, %v1161
        %v1163 = vsel %vm1147, %v1131, 0.0
        %v1164 = vadd.f32 %v1162, %v1163
        %v1165 = vsel %vm1147, %v1133, 0.0
        %v1166 = vadd.f32 %v1164, %v1165
        %v1167 = vsel %vm1147, %v1135, 0.0
        %v1168 = vadd.f32 %v1166, %v1167
        %v1169 = vsel %vm1147, %v1137, 0.0
        %v1170 = vadd.f32 %v1168, %v1169
        %v1171 = vsel %vm1147, %v1139, 0.0
        %v1172 = vadd.f32 %v1170, %v1171
        %v1173 = vsel %vm1147, %v1141, 0.0
        %v1174 = vadd.f32 %v1172, %v1173
        %v1175 = vsel %vm1147, %v1143, 0.0
        %v1176 = vadd.f32 %v1174, %v1175
        %v1177 = vsel %vm1147, %v1145, 0.0
        %v1178 = vadd.f32 %v1176, %v1177
        %v1179 = vsel %vm548, %v1116, 0.0
        %v1180 = vsel %vm548, %v1118, 0.0
        %v1181 = vadd.f32 %v1179, %v1180
        %v1182 = vsel %vm548, %v1120, 0.0
        %v1183 = vadd.f32 %v1181, %v1182
        %v1184 = vsel %vm548, %v1122, 0.0
        %v1185 = vadd.f32 %v1183, %v1184
        %v1186 = vsel %vm548, %v1124, 0.0
        %v1187 = vadd.f32 %v1185, %v1186
        %v1188 = vsel %vm548, %v1126, 0.0
        %v1189 = vadd.f32 %v1187, %v1188
        %v1190 = vsel %vm548, %v1128, 0.0
        %v1191 = vadd.f32 %v1189, %v1190
        %v1192 = vsel %vm548, %v1130, 0.0
        %v1193 = vadd.f32 %v1191, %v1192
        %v1194 = vsel %vm548, %v1132, 0.0
        %v1195 = vadd.f32 %v1193, %v1194
        %v1196 = vsel %vm548, %v1134, 0.0
        %v1197 = vadd.f32 %v1195, %v1196
        %v1198 = vsel %vm548, %v1136, 0.0
        %v1199 = vadd.f32 %v1197, %v1198
        %v1200 = vsel %vm548, %v1138, 0.0
        %v1201 = vadd.f32 %v1199, %v1200
        %v1202 = vsel %vm548, %v1140, 0.0
        %v1203 = vadd.f32 %v1201, %v1202
        %v1204 = vsel %vm548, %v1142, 0.0
        %v1205 = vadd.f32 %v1203, %v1204
        %v1206 = vsel %vm548, %v1144, 0.0
        %v1207 = vadd.f32 %v1205, %v1206
        %v1208 = vsel %vm548, %v1146, 0.0
        %v1209 = vadd.f32 %v1207, %v1208
        %v1210 = vadd.f32 %v1178, 0.0
        %v1211 = vadd.f32 %v1209, 0.0
        %v1212 = vmul.f32 %v987, %v987
        %v1213 = vmul.f32 %v988, %v988
        %v1214 = vmul.f32 %v989, %v989
        %v1215 = vmul.f32 %v990, %v990
        %v1216 = vmul.f32 %v991, %v991
        %v1217 = vmul.f32 %v992, %v992
        %v1218 = vmul.f32 %v993, %v993
        %v1219 = vmul.f32 %v994, %v994
        %v1220 = vmul.f32 %v995, %v995
        %v1221 = vmul.f32 %v996, %v996
        %v1222 = vmul.f32 %v997, %v997
        %v1223 = vmul.f32 %v998, %v998
        %v1224 = vmul.f32 %v999, %v999
        %v1225 = vmul.f32 %v1000, %v1000
        %v1226 = vmul.f32 %v1001, %v1001
        %v1227 = vmul.f32 %v1002, %v1002
        %v1228 = vmul.f32 %v1003, %v1003
        %v1229 = vmul.f32 %v1004, %v1004
        %v1230 = vmul.f32 %v1005, %v1005
        %v1231 = vmul.f32 %v1006, %v1006
        %v1232 = vmul.f32 %v1007, %v1007
        %v1233 = vmul.f32 %v1008, %v1008
        %v1234 = vmul.f32 %v1009, %v1009
        %v1235 = vmul.f32 %v1010, %v1010
        %v1236 = vmul.f32 %v1011, %v1011
        %v1237 = vmul.f32 %v1012, %v1012
        %v1238 = vmul.f32 %v1013, %v1013
        %v1239 = vmul.f32 %v1014, %v1014
        %v1240 = vmul.f32 %v1015, %v1015
        %v1241 = vmul.f32 %v1016, %v1016
        %v1242 = vmul.f32 %v1017, %v1017
        %v1243 = vmul.f32 %v1018, %v1018
        %vm1244 = vcmask 64520
        %v1245 = vsel %vm1244, %v1212, 0.0
        %v1246 = vsel %vm1244, %v1214, 0.0
        %v1247 = vadd.f32 %v1245, %v1246
        %v1248 = vsel %vm1244, %v1216, 0.0
        %v1249 = vadd.f32 %v1247, %v1248
        %v1250 = vsel %vm1244, %v1218, 0.0
        %v1251 = vadd.f32 %v1249, %v1250
        %v1252 = vsel %vm1244, %v1220, 0.0
        %v1253 = vadd.f32 %v1251, %v1252
        %v1254 = vsel %vm1244, %v1222, 0.0
        %v1255 = vadd.f32 %v1253, %v1254
        %v1256 = vsel %vm1244, %v1224, 0.0
        %v1257 = vadd.f32 %v1255, %v1256
        %v1258 = vsel %vm1244, %v1226, 0.0
        %v1259 = vadd.f32 %v1257, %v1258
        %v1260 = vsel %vm1244, %v1228, 0.0
        %v1261 = vadd.f32 %v1259, %v1260
        %v1262 = vsel %vm1244, %v1230, 0.0
        %v1263 = vadd.f32 %v1261, %v1262
        %v1264 = vsel %vm1244, %v1232, 0.0
        %v1265 = vadd.f32 %v1263, %v1264
        %v1266 = vsel %vm1244, %v1234, 0.0
        %v1267 = vadd.f32 %v1265, %v1266
        %v1268 = vsel %vm1244, %v1236, 0.0
        %v1269 = vadd.f32 %v1267, %v1268
        %v1270 = vsel %vm1244, %v1238, 0.0
        %v1271 = vadd.f32 %v1269, %v1270
        %v1272 = vsel %vm1244, %v1240, 0.0
        %v1273 = vadd.f32 %v1271, %v1272
        %v1274 = vsel %vm1244, %v1242, 0.0
        %v1275 = vadd.f32 %v1273, %v1274
        %v1276 = vsel %vm1244, %v1213, 0.0
        %v1277 = vsel %vm1244, %v1215, 0.0
        %v1278 = vadd.f32 %v1276, %v1277
        %v1279 = vsel %vm1244, %v1217, 0.0
        %v1280 = vadd.f32 %v1278, %v1279
        %v1281 = vsel %vm1244, %v1219, 0.0
        %v1282 = vadd.f32 %v1280, %v1281
        %v1283 = vsel %vm1244, %v1221, 0.0
        %v1284 = vadd.f32 %v1282, %v1283
        %v1285 = vsel %vm1244, %v1223, 0.0
        %v1286 = vadd.f32 %v1284, %v1285
        %v1287 = vsel %vm1244, %v1225, 0.0
        %v1288 = vadd.f32 %v1286, %v1287
        %v1289 = vsel %vm1244, %v1227, 0.0
        %v1290 = vadd.f32 %v1288, %v1289
        %v1291 = vsel %vm1244, %v1229, 0.0
        %v1292 = vadd.f32 %v1290, %v1291
        %v1293 = vsel %vm1244, %v1231, 0.0
        %v1294 = vadd.f32 %v1292, %v1293
        %v1295 = vsel %vm1244, %v1233, 0.0
        %v1296 = vadd.f32 %v1294, %v1295
        %v1297 = vsel %vm1244, %v1235, 0.0
        %v1298 = vadd.f32 %v1296, %v1297
        %v1299 = vsel %vm1244, %v1237, 0.0
        %v1300 = vadd.f32 %v1298, %v1299
        %v1301 = vsel %vm1244, %v1239, 0.0
        %v1302 = vadd.f32 %v1300, %v1301
        %v1303 = vsel %vm1244, %v1241, 0.0
        %v1304 = vadd.f32 %v1302, %v1303
        %v1305 = vsel %vm1244, %v1243, 0.0
        %v1306 = vadd.f32 %v1304, %v1305
        %v1307 = vadd.f32 %v1275, 0.0
        %v1308 = vadd.f32 %v1306, 0.0
        %v1309 = vmul.f32 %v714, 8.0
        %v1310 = vmul.f32 %v715, 8.0
        %v1311 = vmul.f32 %v716, 8.0
        %v1312 = vmul.f32 %v717, 8.0
        %v1313 = vmul.f32 %v718, 8.0
        %v1314 = vmul.f32 %v719, 8.0
        %v1315 = vmul.f32 %v720, 8.0
        %v1316 = vmul.f32 %v721, 8.0
        %v1317 = vmul.f32 %v722, 8.0
        %v1318 = vmul.f32 %v723, 8.0
        %v1319 = vmul.f32 %v724, 8.0
        %v1320 = vmul.f32 %v725, 8.0
        %v1321 = vmul.f32 %v726, 8.0
        %v1322 = vmul.f32 %v727, 8.0
        %v1323 = vmul.f32 %v728, 8.0
        %v1324 = vmul.f32 %v729, 8.0
        %v1325 = vmul.f32 %v730, 8.0
        %v1326 = vmul.f32 %v731, 8.0
        %v1327 = vmul.f32 %v732, 8.0
        %v1328 = vmul.f32 %v733, 8.0
        %v1329 = vmul.f32 %v734, 8.0
        %v1330 = vmul.f32 %v735, 8.0
        %v1331 = vmul.f32 %v736, 8.0
        %v1332 = vmul.f32 %v737, 8.0
        %v1333 = vmul.f32 %v738, 8.0
        %v1334 = vmul.f32 %v739, 8.0
        %v1335 = vmul.f32 %v740, 8.0
        %v1336 = vmul.f32 %v741, 8.0
        %v1337 = vmul.f32 %v742, 8.0
        %v1338 = vmul.f32 %v743, 8.0
        %v1339 = vmul.f32 %v744, 8.0
        %v1340 = vmul.f32 %v745, 8.0
        %v1341 = vmul.f32 %v859, 8.0
        %v1342 = vmul.f32 %v860, 8.0
        %v1343 = vmul.f32 %v861, 8.0
        %v1344 = vmul.f32 %v862, 8.0
        %v1345 = vmul.f32 %v863, 8.0
        %v1346 = vmul.f32 %v864, 8.0
        %v1347 = vmul.f32 %v865, 8.0
        %v1348 = vmul.f32 %v866, 8.0
        %v1349 = vmul.f32 %v867, 8.0
        %v1350 = vmul.f32 %v868, 8.0
        %v1351 = vmul.f32 %v869, 8.0
        %v1352 = vmul.f32 %v870, 8.0
        %v1353 = vmul.f32 %v871, 8.0
        %v1354 = vmul.f32 %v872, 8.0
        %v1355 = vmul.f32 %v873, 8.0
        %v1356 = vmul.f32 %v874, 8.0
        %v1357 = vmul.f32 %v875, 8.0
        %v1358 = vmul.f32 %v876, 8.0
        %v1359 = vmul.f32 %v877, 8.0
        %v1360 = vmul.f32 %v878, 8.0
        %v1361 = vmul.f32 %v879, 8.0
        %v1362 = vmul.f32 %v880, 8.0
        %v1363 = vmul.f32 %v881, 8.0
        %v1364 = vmul.f32 %v882, 8.0
        %v1365 = vmul.f32 %v883, 8.0
        %v1366 = vmul.f32 %v884, 8.0
        %v1367 = vmul.f32 %v885, 8.0
        %v1368 = vmul.f32 %v886, 8.0
        %v1369 = vmul.f32 %v887, 8.0
        %v1370 = vmul.f32 %v888, 8.0
        %v1371 = vmul.f32 %v889, 8.0
        %v1372 = vmul.f32 %v890, 8.0
        %v1373 = vmul.f32 %v987, 8.0
        %v1374 = vmul.f32 %v988, 8.0
        %v1375 = vmul.f32 %v989, 8.0
        %v1376 = vmul.f32 %v990, 8.0
        %v1377 = vmul.f32 %v991, 8.0
        %v1378 = vmul.f32 %v992, 8.0
        %v1379 = vmul.f32 %v993, 8.0
        %v1380 = vmul.f32 %v994, 8.0
        %v1381 = vmul.f32 %v995, 8.0
        %v1382 = vmul.f32 %v996, 8.0
        %v1383 = vmul.f32 %v997, 8.0
        %v1384 = vmul.f32 %v998, 8.0
        %v1385 = vmul.f32 %v999, 8.0
        %v1386 = vmul.f32 %v1000, 8.0
        %v1387 = vmul.f32 %v1001, 8.0
        %v1388 = vmul.f32 %v1002, 8.0
        %v1389 = vmul.f32 %v1003, 8.0
        %v1390 = vmul.f32 %v1004, 8.0
        %v1391 = vmul.f32 %v1005, 8.0
        %v1392 = vmul.f32 %v1006, 8.0
        %v1393 = vmul.f32 %v1007, 8.0
        %v1394 = vmul.f32 %v1008, 8.0
        %v1395 = vmul.f32 %v1009, 8.0
        %v1396 = vmul.f32 %v1010, 8.0
        %v1397 = vmul.f32 %v1011, 8.0
        %v1398 = vmul.f32 %v1012, 8.0
        %v1399 = vmul.f32 %v1013, 8.0
        %v1400 = vmul.f32 %v1014, 8.0
        %v1401 = vmul.f32 %v1015, 8.0
        %v1402 = vmul.f32 %v1016, 8.0
        %v1403 = vmul.f32 %v1017, 8.0
        %v1404 = vmul.f32 %v1018, 8.0
        %s1405 = scalar_lea.vmem %s372, 256
        %v1406 = vld [vmem:[%s1405] sm:$0xff]
        %v1407 = vld [vmem:[%s1405 + $0x8] sm:$0xff]
        %v1408 = vld [vmem:[%s1405 + $0x10] sm:$0xff]
        %v1409 = vld [vmem:[%s1405 + $0x18] sm:$0xff]
        %v1410 = vld [vmem:[%s1405 + $0x20] sm:$0xff]
        %v1411 = vld [vmem:[%s1405 + $0x28] sm:$0xff]
        %v1412 = vld [vmem:[%s1405 + $0x30] sm:$0xff]
        %v1413 = vld [vmem:[%s1405 + $0x38] sm:$0xff]
        %v1414 = vld [vmem:[%s1405 + $0x40] sm:$0xff]
        %v1415 = vld [vmem:[%s1405 + $0x48] sm:$0xff]
        %v1416 = vld [vmem:[%s1405 + $0x50] sm:$0xff]
        %v1417 = vld [vmem:[%s1405 + $0x58] sm:$0xff]
        %v1418 = vld [vmem:[%s1405 + $0x60] sm:$0xff]
        %v1419 = vld [vmem:[%s1405 + $0x68] sm:$0xff]
        %v1420 = vld [vmem:[%s1405 + $0x70] sm:$0xff]
        %v1421 = vld [vmem:[%s1405 + $0x78] sm:$0xff]
        %v1422 = vld [vmem:[%s1405 + $0x80] sm:$0xff]
        %v1423 = vld [vmem:[%s1405 + $0x88] sm:$0xff]
        %v1424 = vld [vmem:[%s1405 + $0x90] sm:$0xff]
        %v1425 = vld [vmem:[%s1405 + $0x98] sm:$0xff]
        %v1426 = vld [vmem:[%s1405 + $0xa0] sm:$0xff]
        %v1427 = vld [vmem:[%s1405 + $0xa8] sm:$0xff]
        %v1428 = vld [vmem:[%s1405 + $0xb0] sm:$0xff]
        %v1429 = vld [vmem:[%s1405 + $0xb8] sm:$0xff]
        %v1430 = vld [vmem:[%s1405 + $0xc0] sm:$0xff]
        %v1431 = vld [vmem:[%s1405 + $0xc8] sm:$0xff]
        %v1432 = vld [vmem:[%s1405 + $0xd0] sm:$0xff]
        %v1433 = vld [vmem:[%s1405 + $0xd8] sm:$0xff]
        %v1434 = vld [vmem:[%s1405 + $0xe0] sm:$0xff]
        %v1435 = vld [vmem:[%s1405 + $0xe8] sm:$0xff]
        %v1436 = vld [vmem:[%s1405 + $0xf0] sm:$0xff]
        %v1437 = vld [vmem:[%s1405 + $0xf8] sm:$0xff]
        %s1438 = scalar_lea.vmem %s310, 16 [#allocation7]
        %v1439 = vld [vmem:[%s1438] sm:$0xff]
        %v1440 = vld [vmem:[%s1438 + $0x8] sm:$0xff]
        %v1441 = vsub.f32 %v1408, %v1406
        %v1442 = vsub.f32 %v1409, %v1407
        %v1443 = vsub.f32 %v1410, %v1408
        %v1444 = vsub.f32 %v1411, %v1409
        %v1445 = vsub.f32 %v1412, %v1410
        %v1446 = vsub.f32 %v1413, %v1411
        %v1447 = vsub.f32 %v1414, %v1412
        %v1448 = vsub.f32 %v1415, %v1413
        %v1449 = vsub.f32 %v1416, %v1414
        %v1450 = vsub.f32 %v1417, %v1415
        %v1451 = vsub.f32 %v1418, %v1416
        %v1452 = vsub.f32 %v1419, %v1417
        %v1453 = vsub.f32 %v1420, %v1418
        %v1454 = vsub.f32 %v1421, %v1419
        %v1455 = vsub.f32 %v1422, %v1420
        %v1456 = vsub.f32 %v1423, %v1421
        %v1457 = vsub.f32 %v1424, %v1422
        %v1458 = vsub.f32 %v1425, %v1423
        %v1459 = vsub.f32 %v1426, %v1424
        %v1460 = vsub.f32 %v1427, %v1425
        %v1461 = vsub.f32 %v1428, %v1426
        %v1462 = vsub.f32 %v1429, %v1427
        %v1463 = vsub.f32 %v1430, %v1428
        %v1464 = vsub.f32 %v1431, %v1429
        %v1465 = vsub.f32 %v1432, %v1430
        %v1466 = vsub.f32 %v1433, %v1431
        %v1467 = vsub.f32 %v1434, %v1432
        %v1468 = vsub.f32 %v1435, %v1433
        %v1469 = vsub.f32 %v1436, %v1434
        %v1470 = vsub.f32 %v1437, %v1435
        %v1471 = vsub.f32 %v1439, %v1436
        %v1472 = vsub.f32 %v1440, %v1437
        %v1505 = vrot.slane %v1406, 7
        %v1506 = vrot.slane %v1407, 7
        %v1507 = vsel %vm778, %v1505, %v1506
        %v1508 = vrot.slane %v1408, 7
        %v1509 = vrot.slane %v1409, 7
        %v1510 = vsel %vm778, %v1508, %v1509
        %v1511 = vrot.slane %v1410, 7
        %v1512 = vrot.slane %v1411, 7
        %v1513 = vsel %vm778, %v1511, %v1512
        %v1514 = vrot.slane %v1412, 7
        %v1515 = vrot.slane %v1413, 7
        %v1516 = vsel %vm778, %v1514, %v1515
        %v1517 = vrot.slane %v1414, 7
        %v1518 = vrot.slane %v1415, 7
        %v1519 = vsel %vm778, %v1517, %v1518
        %v1520 = vrot.slane %v1416, 7
        %v1521 = vrot.slane %v1417, 7
        %v1522 = vsel %vm778, %v1520, %v1521
        %v1523 = vrot.slane %v1418, 7
        %v1524 = vrot.slane %v1419, 7
        %v1525 = vsel %vm778, %v1523, %v1524
        %v1526 = vrot.slane %v1420, 7
        %v1527 = vrot.slane %v1421, 7
        %v1528 = vsel %vm778, %v1526, %v1527
        %v1529 = vrot.slane %v1422, 7
        %v1530 = vrot.slane %v1423, 7
        %v1531 = vsel %vm778, %v1529, %v1530
        %v1532 = vrot.slane %v1424, 7
        %v1533 = vrot.slane %v1425, 7
        %v1534 = vsel %vm778, %v1532, %v1533
        %v1535 = vrot.slane %v1426, 7
        %v1536 = vrot.slane %v1427, 7
        %v1537 = vsel %vm778, %v1535, %v1536
        %v1538 = vrot.slane %v1428, 7
        %v1539 = vrot.slane %v1429, 7
        %v1540 = vsel %vm778, %v1538, %v1539
        %v1541 = vrot.slane %v1430, 7
        %v1542 = vrot.slane %v1431, 7
        %v1543 = vsel %vm778, %v1541, %v1542
        %v1544 = vrot.slane %v1432, 7
        %v1545 = vrot.slane %v1433, 7
        %v1546 = vsel %vm778, %v1544, %v1545
        %v1547 = vrot.slane %v1434, 7
        %v1548 = vrot.slane %v1435, 7
        %v1549 = vsel %vm778, %v1547, %v1548
        %v1550 = vrot.slane %v1436, 7
        %v1551 = vrot.slane %v1437, 7
        %v1552 = vsel %vm778, %v1550, %v1551
        %v1585 = vsub.f32 %v1406, %v1505
        %v1586 = vsub.f32 %v1407, %v1507
        %v1587 = vsub.f32 %v1408, %v1508
        %v1588 = vsub.f32 %v1409, %v1510
        %v1589 = vsub.f32 %v1410, %v1511
        %v1590 = vsub.f32 %v1411, %v1513
        %v1591 = vsub.f32 %v1412, %v1514
        %v1592 = vsub.f32 %v1413, %v1516
        %v1593 = vsub.f32 %v1414, %v1517
        %v1594 = vsub.f32 %v1415, %v1519
        %v1595 = vsub.f32 %v1416, %v1520
        %v1596 = vsub.f32 %v1417, %v1522
        %v1597 = vsub.f32 %v1418, %v1523
        %v1598 = vsub.f32 %v1419, %v1525
        %v1599 = vsub.f32 %v1420, %v1526
        %v1600 = vsub.f32 %v1421, %v1528
        %v1601 = vsub.f32 %v1422, %v1529
        %v1602 = vsub.f32 %v1423, %v1531
        %v1603 = vsub.f32 %v1424, %v1532
        %v1604 = vsub.f32 %v1425, %v1534
        %v1605 = vsub.f32 %v1426, %v1535
        %v1606 = vsub.f32 %v1427, %v1537
        %v1607 = vsub.f32 %v1428, %v1538
        %v1608 = vsub.f32 %v1429, %v1540
        %v1609 = vsub.f32 %v1430, %v1541
        %v1610 = vsub.f32 %v1431, %v1543
        %v1611 = vsub.f32 %v1432, %v1544
        %v1612 = vsub.f32 %v1433, %v1546
        %v1613 = vsub.f32 %v1434, %v1547
        %v1614 = vsub.f32 %v1435, %v1549
        %v1615 = vsub.f32 %v1436, %v1550
        %v1616 = vsub.f32 %v1437, %v1552
        %1617 = vrot.lane.b32.xlu0 %v1406, 1
        %v1618 = vpop.permute.xlu0 %1617
        %1619 = vrot.lane.b32.xlu0 %v1407, 1
        %v1620 = vpop.permute.xlu0 %1619
        %1621 = vrot.lane.b32.xlu0 %v1408, 1
        %v1622 = vpop.permute.xlu0 %1621
        %1623 = vrot.lane.b32.xlu0 %v1409, 1
        %v1624 = vpop.permute.xlu0 %1623
        %1625 = vrot.lane.b32.xlu0 %v1410, 1
        %v1626 = vpop.permute.xlu0 %1625
        %1627 = vrot.lane.b32.xlu0 %v1411, 1
        %v1628 = vpop.permute.xlu0 %1627
        %1629 = vrot.lane.b32.xlu0 %v1412, 1
        %v1630 = vpop.permute.xlu0 %1629
        %1631 = vrot.lane.b32.xlu0 %v1413, 1
        %v1632 = vpop.permute.xlu0 %1631
        %1633 = vrot.lane.b32.xlu0 %v1414, 1
        %v1634 = vpop.permute.xlu0 %1633
        %1635 = vrot.lane.b32.xlu0 %v1415, 1
        %v1636 = vpop.permute.xlu0 %1635
        %1637 = vrot.lane.b32.xlu0 %v1416, 1
        %v1638 = vpop.permute.xlu0 %1637
        %1639 = vrot.lane.b32.xlu0 %v1417, 1
        %v1640 = vpop.permute.xlu0 %1639
        %1641 = vrot.lane.b32.xlu0 %v1418, 1
        %v1642 = vpop.permute.xlu0 %1641
        %1643 = vrot.lane.b32.xlu0 %v1419, 1
        %v1644 = vpop.permute.xlu0 %1643
        %1645 = vrot.lane.b32.xlu0 %v1420, 1
        %v1646 = vpop.permute.xlu0 %1645
        %1647 = vrot.lane.b32.xlu0 %v1421, 1
        %v1648 = vpop.permute.xlu0 %1647
        %1649 = vrot.lane.b32.xlu0 %v1422, 1
        %v1650 = vpop.permute.xlu0 %1649
        %1651 = vrot.lane.b32.xlu0 %v1423, 1
        %v1652 = vpop.permute.xlu0 %1651
        %1653 = vrot.lane.b32.xlu0 %v1424, 1
        %v1654 = vpop.permute.xlu0 %1653
        %1655 = vrot.lane.b32.xlu0 %v1425, 1
        %v1656 = vpop.permute.xlu0 %1655
        %1657 = vrot.lane.b32.xlu0 %v1426, 1
        %v1658 = vpop.permute.xlu0 %1657
        %1659 = vrot.lane.b32.xlu0 %v1427, 1
        %v1660 = vpop.permute.xlu0 %1659
        %1661 = vrot.lane.b32.xlu0 %v1428, 1
        %v1662 = vpop.permute.xlu0 %1661
        %1663 = vrot.lane.b32.xlu0 %v1429, 1
        %v1664 = vpop.permute.xlu0 %1663
        %1665 = vrot.lane.b32.xlu0 %v1430, 1
        %v1666 = vpop.permute.xlu0 %1665
        %1667 = vrot.lane.b32.xlu0 %v1431, 1
        %v1668 = vpop.permute.xlu0 %1667
        %1669 = vrot.lane.b32.xlu0 %v1432, 1
        %v1670 = vpop.permute.xlu0 %1669
        %1671 = vrot.lane.b32.xlu0 %v1433, 1
        %v1672 = vpop.permute.xlu0 %1671
        %1673 = vrot.lane.b32.xlu0 %v1434, 1
        %v1674 = vpop.permute.xlu0 %1673
        %1675 = vrot.lane.b32.xlu0 %v1435, 1
        %v1676 = vpop.permute.xlu0 %1675
        %1677 = vrot.lane.b32.xlu0 %v1436, 1
        %v1678 = vpop.permute.xlu0 %1677
        %1679 = vrot.lane.b32.xlu0 %v1437, 1
        %v1680 = vpop.permute.xlu0 %1679
        %v1713 = vsub.f32 %v1406, %v1618
        %v1714 = vsub.f32 %v1407, %v1620
        %v1715 = vsub.f32 %v1408, %v1622
        %v1716 = vsub.f32 %v1409, %v1624
        %v1717 = vsub.f32 %v1410, %v1626
        %v1718 = vsub.f32 %v1411, %v1628
        %v1719 = vsub.f32 %v1412, %v1630
        %v1720 = vsub.f32 %v1413, %v1632
        %v1721 = vsub.f32 %v1414, %v1634
        %v1722 = vsub.f32 %v1415, %v1636
        %v1723 = vsub.f32 %v1416, %v1638
        %v1724 = vsub.f32 %v1417, %v1640
        %v1725 = vsub.f32 %v1418, %v1642
        %v1726 = vsub.f32 %v1419, %v1644
        %v1727 = vsub.f32 %v1420, %v1646
        %v1728 = vsub.f32 %v1421, %v1648
        %v1729 = vsub.f32 %v1422, %v1650
        %v1730 = vsub.f32 %v1423, %v1652
        %v1731 = vsub.f32 %v1424, %v1654
        %v1732 = vsub.f32 %v1425, %v1656
        %v1733 = vsub.f32 %v1426, %v1658
        %v1734 = vsub.f32 %v1427, %v1660
        %v1735 = vsub.f32 %v1428, %v1662
        %v1736 = vsub.f32 %v1429, %v1664
        %v1737 = vsub.f32 %v1430, %v1666
        %v1738 = vsub.f32 %v1431, %v1668
        %v1739 = vsub.f32 %v1432, %v1670
        %v1740 = vsub.f32 %v1433, %v1672
        %v1741 = vsub.f32 %v1434, %v1674
        %v1742 = vsub.f32 %v1435, %v1676
        %v1743 = vsub.f32 %v1436, %v1678
        %v1744 = vsub.f32 %v1437, %v1680
        %v1745 = vmul.f32 %v1441, %v1441
        %v1746 = vmul.f32 %v1442, %v1442
        %v1747 = vmul.f32 %v1443, %v1443
        %v1748 = vmul.f32 %v1444, %v1444
        %v1749 = vmul.f32 %v1445, %v1445
        %v1750 = vmul.f32 %v1446, %v1446
        %v1751 = vmul.f32 %v1447, %v1447
        %v1752 = vmul.f32 %v1448, %v1448
        %v1753 = vmul.f32 %v1449, %v1449
        %v1754 = vmul.f32 %v1450, %v1450
        %v1755 = vmul.f32 %v1451, %v1451
        %v1756 = vmul.f32 %v1452, %v1452
        %v1757 = vmul.f32 %v1453, %v1453
        %v1758 = vmul.f32 %v1454, %v1454
        %v1759 = vmul.f32 %v1455, %v1455
        %v1760 = vmul.f32 %v1456, %v1456
        %v1761 = vmul.f32 %v1457, %v1457
        %v1762 = vmul.f32 %v1458, %v1458
        %v1763 = vmul.f32 %v1459, %v1459
        %v1764 = vmul.f32 %v1460, %v1460
        %v1765 = vmul.f32 %v1461, %v1461
        %v1766 = vmul.f32 %v1462, %v1462
        %v1767 = vmul.f32 %v1463, %v1463
        %v1768 = vmul.f32 %v1464, %v1464
        %v1769 = vmul.f32 %v1465, %v1465
        %v1770 = vmul.f32 %v1466, %v1466
        %v1771 = vmul.f32 %v1467, %v1467
        %v1772 = vmul.f32 %v1468, %v1468
        %v1773 = vmul.f32 %v1469, %v1469
        %v1774 = vmul.f32 %v1470, %v1470
        %v1775 = vmul.f32 %v1471, %v1471
        %v1776 = vmul.f32 %v1472, %v1472
        %v1777 = vsel %vm548, %v1745, 0.0
        %v1778 = vsel %vm548, %v1747, 0.0
        %v1779 = vadd.f32 %v1777, %v1778
        %v1780 = vsel %vm548, %v1749, 0.0
        %v1781 = vadd.f32 %v1779, %v1780
        %v1782 = vsel %vm548, %v1751, 0.0
        %v1783 = vadd.f32 %v1781, %v1782
        %v1784 = vsel %vm548, %v1753, 0.0
        %v1785 = vadd.f32 %v1783, %v1784
        %v1786 = vsel %vm548, %v1755, 0.0
        %v1787 = vadd.f32 %v1785, %v1786
        %v1788 = vsel %vm548, %v1757, 0.0
        %v1789 = vadd.f32 %v1787, %v1788
        %v1790 = vsel %vm548, %v1759, 0.0
        %v1791 = vadd.f32 %v1789, %v1790
        %v1792 = vsel %vm548, %v1761, 0.0
        %v1793 = vadd.f32 %v1791, %v1792
        %v1794 = vsel %vm548, %v1763, 0.0
        %v1795 = vadd.f32 %v1793, %v1794
        %v1796 = vsel %vm548, %v1765, 0.0
        %v1797 = vadd.f32 %v1795, %v1796
        %v1798 = vsel %vm548, %v1767, 0.0
        %v1799 = vadd.f32 %v1797, %v1798
        %v1800 = vsel %vm548, %v1769, 0.0
        %v1801 = vadd.f32 %v1799, %v1800
        %v1802 = vsel %vm548, %v1771, 0.0
        %v1803 = vadd.f32 %v1801, %v1802
        %v1804 = vsel %vm548, %v1773, 0.0
        %v1805 = vadd.f32 %v1803, %v1804
        %v1806 = vsel %vm548, %v1775, 0.0
        %v1807 = vadd.f32 %v1805, %v1806
        %v1808 = vsel %vm548, %v1746, 0.0
        %v1809 = vsel %vm548, %v1748, 0.0
        %v1810 = vadd.f32 %v1808, %v1809
        %v1811 = vsel %vm548, %v1750, 0.0
        %v1812 = vadd.f32 %v1810, %v1811
        %v1813 = vsel %vm548, %v1752, 0.0
        %v1814 = vadd.f32 %v1812, %v1813
        %v1815 = vsel %vm548, %v1754, 0.0
        %v1816 = vadd.f32 %v1814, %v1815
        %v1817 = vsel %vm548, %v1756, 0.0
        %v1818 = vadd.f32 %v1816, %v1817
        %v1819 = vsel %vm548, %v1758, 0.0
        %v1820 = vadd.f32 %v1818, %v1819
        %v1821 = vsel %vm548, %v1760, 0.0
        %v1822 = vadd.f32 %v1820, %v1821
        %v1823 = vsel %vm548, %v1762, 0.0
        %v1824 = vadd.f32 %v1822, %v1823
        %v1825 = vsel %vm548, %v1764, 0.0
        %v1826 = vadd.f32 %v1824, %v1825
        %v1827 = vsel %vm548, %v1766, 0.0
        %v1828 = vadd.f32 %v1826, %v1827
        %v1829 = vsel %vm548, %v1768, 0.0
        %v1830 = vadd.f32 %v1828, %v1829
        %v1831 = vsel %vm548, %v1770, 0.0
        %v1832 = vadd.f32 %v1830, %v1831
        %v1833 = vsel %vm548, %v1772, 0.0
        %v1834 = vadd.f32 %v1832, %v1833
        %v1835 = vsel %vm548, %v1774, 0.0
        %v1836 = vadd.f32 %v1834, %v1835
        %v1837 = vsel %vm548, %v1776, 0.0
        %v1838 = vadd.f32 %v1836, %v1837
        %v1839 = vadd.f32 %v1113, %v1807
        %v1840 = vadd.f32 %v1114, %v1838
        %v1841 = vmul.f32 %v1585, %v1585
        %v1842 = vmul.f32 %v1586, %v1586
        %v1843 = vmul.f32 %v1587, %v1587
        %v1844 = vmul.f32 %v1588, %v1588
        %v1845 = vmul.f32 %v1589, %v1589
        %v1846 = vmul.f32 %v1590, %v1590
        %v1847 = vmul.f32 %v1591, %v1591
        %v1848 = vmul.f32 %v1592, %v1592
        %v1849 = vmul.f32 %v1593, %v1593
        %v1850 = vmul.f32 %v1594, %v1594
        %v1851 = vmul.f32 %v1595, %v1595
        %v1852 = vmul.f32 %v1596, %v1596
        %v1853 = vmul.f32 %v1597, %v1597
        %v1854 = vmul.f32 %v1598, %v1598
        %v1855 = vmul.f32 %v1599, %v1599
        %v1856 = vmul.f32 %v1600, %v1600
        %v1857 = vmul.f32 %v1601, %v1601
        %v1858 = vmul.f32 %v1602, %v1602
        %v1859 = vmul.f32 %v1603, %v1603
        %v1860 = vmul.f32 %v1604, %v1604
        %v1861 = vmul.f32 %v1605, %v1605
        %v1862 = vmul.f32 %v1606, %v1606
        %v1863 = vmul.f32 %v1607, %v1607
        %v1864 = vmul.f32 %v1608, %v1608
        %v1865 = vmul.f32 %v1609, %v1609
        %v1866 = vmul.f32 %v1610, %v1610
        %v1867 = vmul.f32 %v1611, %v1611
        %v1868 = vmul.f32 %v1612, %v1612
        %v1869 = vmul.f32 %v1613, %v1613
        %v1870 = vmul.f32 %v1614, %v1614
        %v1871 = vmul.f32 %v1615, %v1615
        %v1872 = vmul.f32 %v1616, %v1616
        %v1873 = vsel %vm1147, %v1841, 0.0
        %v1874 = vsel %vm1147, %v1843, 0.0
        %v1875 = vadd.f32 %v1873, %v1874
        %v1876 = vsel %vm1147, %v1845, 0.0
        %v1877 = vadd.f32 %v1875, %v1876
        %v1878 = vsel %vm1147, %v1847, 0.0
        %v1879 = vadd.f32 %v1877, %v1878
        %v1880 = vsel %vm1147, %v1849, 0.0
        %v1881 = vadd.f32 %v1879, %v1880
        %v1882 = vsel %vm1147, %v1851, 0.0
        %v1883 = vadd.f32 %v1881, %v1882
        %v1884 = vsel %vm1147, %v1853, 0.0
        %v1885 = vadd.f32 %v1883, %v1884
        %v1886 = vsel %vm1147, %v1855, 0.0
        %v1887 = vadd.f32 %v1885, %v1886
        %v1888 = vsel %vm1147, %v1857, 0.0
        %v1889 = vadd.f32 %v1887, %v1888
        %v1890 = vsel %vm1147, %v1859, 0.0
        %v1891 = vadd.f32 %v1889, %v1890
        %v1892 = vsel %vm1147, %v1861, 0.0
        %v1893 = vadd.f32 %v1891, %v1892
        %v1894 = vsel %vm1147, %v1863, 0.0
        %v1895 = vadd.f32 %v1893, %v1894
        %v1896 = vsel %vm1147, %v1865, 0.0
        %v1897 = vadd.f32 %v1895, %v1896
        %v1898 = vsel %vm1147, %v1867, 0.0
        %v1899 = vadd.f32 %v1897, %v1898
        %v1900 = vsel %vm1147, %v1869, 0.0
        %v1901 = vadd.f32 %v1899, %v1900
        %v1902 = vsel %vm1147, %v1871, 0.0
        %v1903 = vadd.f32 %v1901, %v1902
        %v1904 = vsel %vm548, %v1842, 0.0
        %v1905 = vsel %vm548, %v1844, 0.0
        %v1906 = vadd.f32 %v1904, %v1905
        %v1907 = vsel %vm548, %v1846, 0.0
        %v1908 = vadd.f32 %v1906, %v1907
        %v1909 = vsel %vm548, %v1848, 0.0
        %v1910 = vadd.f32 %v1908, %v1909
        %v1911 = vsel %vm548, %v1850, 0.0
        %v1912 = vadd.f32 %v1910, %v1911
        %v1913 = vsel %vm548, %v1852, 0.0
        %v1914 = vadd.f32 %v1912, %v1913
        %v1915 = vsel %vm548, %v1854, 0.0
        %v1916 = vadd.f32 %v1914, %v1915
        %v1917 = vsel %vm548, %v1856, 0.0
        %v1918 = vadd.f32 %v1916, %v1917
        %v1919 = vsel %vm548, %v1858, 0.0
        %v1920 = vadd.f32 %v1918, %v1919
        %v1921 = vsel %vm548, %v1860, 0.0
        %v1922 = vadd.f32 %v1920, %v1921
        %v1923 = vsel %vm548, %v1862, 0.0
        %v1924 = vadd.f32 %v1922, %v1923
        %v1925 = vsel %vm548, %v1864, 0.0
        %v1926 = vadd.f32 %v1924, %v1925
        %v1927 = vsel %vm548, %v1866, 0.0
        %v1928 = vadd.f32 %v1926, %v1927
        %v1929 = vsel %vm548, %v1868, 0.0
        %v1930 = vadd.f32 %v1928, %v1929
        %v1931 = vsel %vm548, %v1870, 0.0
        %v1932 = vadd.f32 %v1930, %v1931
        %v1933 = vsel %vm548, %v1872, 0.0
        %v1934 = vadd.f32 %v1932, %v1933
        %v1935 = vadd.f32 %v1210, %v1903
        %v1936 = vadd.f32 %v1211, %v1934
        %v1937 = vmul.f32 %v1713, %v1713
        %v1938 = vmul.f32 %v1714, %v1714
        %v1939 = vmul.f32 %v1715, %v1715
        %v1940 = vmul.f32 %v1716, %v1716
        %v1941 = vmul.f32 %v1717, %v1717
        %v1942 = vmul.f32 %v1718, %v1718
        %v1943 = vmul.f32 %v1719, %v1719
        %v1944 = vmul.f32 %v1720, %v1720
        %v1945 = vmul.f32 %v1721, %v1721
        %v1946 = vmul.f32 %v1722, %v1722
        %v1947 = vmul.f32 %v1723, %v1723
        %v1948 = vmul.f32 %v1724, %v1724
        %v1949 = vmul.f32 %v1725, %v1725
        %v1950 = vmul.f32 %v1726, %v1726
        %v1951 = vmul.f32 %v1727, %v1727
        %v1952 = vmul.f32 %v1728, %v1728
        %v1953 = vmul.f32 %v1729, %v1729
        %v1954 = vmul.f32 %v1730, %v1730
        %v1955 = vmul.f32 %v1731, %v1731
        %v1956 = vmul.f32 %v1732, %v1732
        %v1957 = vmul.f32 %v1733, %v1733
        %v1958 = vmul.f32 %v1734, %v1734
        %v1959 = vmul.f32 %v1735, %v1735
        %v1960 = vmul.f32 %v1736, %v1736
        %v1961 = vmul.f32 %v1737, %v1737
        %v1962 = vmul.f32 %v1738, %v1738
        %v1963 = vmul.f32 %v1739, %v1739
        %v1964 = vmul.f32 %v1740, %v1740
        %v1965 = vmul.f32 %v1741, %v1741
        %v1966 = vmul.f32 %v1742, %v1742
        %v1967 = vmul.f32 %v1743, %v1743
        %v1968 = vmul.f32 %v1744, %v1744
        %v1969 = vsel %vm1244, %v1937, 0.0
        %v1970 = vsel %vm1244, %v1939, 0.0
        %v1971 = vadd.f32 %v1969, %v1970
        %v1972 = vsel %vm1244, %v1941, 0.0
        %v1973 = vadd.f32 %v1971, %v1972
        %v1974 = vsel %vm1244, %v1943, 0.0
        %v1975 = vadd.f32 %v1973, %v1974
        %v1976 = vsel %vm1244, %v1945, 0.0
        %v1977 = vadd.f32 %v1975, %v1976
        %v1978 = vsel %vm1244, %v1947, 0.0
        %v1979 = vadd.f32 %v1977, %v1978
        %v1980 = vsel %vm1244, %v1949, 0.0
        %v1981 = vadd.f32 %v1979, %v1980
        %v1982 = vsel %vm1244, %v1951, 0.0
        %v1983 = vadd.f32 %v1981, %v1982
        %v1984 = vsel %vm1244, %v1953, 0.0
        %v1985 = vadd.f32 %v1983, %v1984
        %v1986 = vsel %vm1244, %v1955, 0.0
        %v1987 = vadd.f32 %v1985, %v1986
        %v1988 = vsel %vm1244, %v1957, 0.0
        %v1989 = vadd.f32 %v1987, %v1988
        %v1990 = vsel %vm1244, %v1959, 0.0
        %v1991 = vadd.f32 %v1989, %v1990
        %v1992 = vsel %vm1244, %v1961, 0.0
        %v1993 = vadd.f32 %v1991, %v1992
        %v1994 = vsel %vm1244, %v1963, 0.0
        %v1995 = vadd.f32 %v1993, %v1994
        %v1996 = vsel %vm1244, %v1965, 0.0
        %v1997 = vadd.f32 %v1995, %v1996
        %v1998 = vsel %vm1244, %v1967, 0.0
        %v1999 = vadd.f32 %v1997, %v1998
        %v2000 = vsel %vm1244, %v1938, 0.0
        %v2001 = vsel %vm1244, %v1940, 0.0
        %v2002 = vadd.f32 %v2000, %v2001
        %v2003 = vsel %vm1244, %v1942, 0.0
        %v2004 = vadd.f32 %v2002, %v2003
        %v2005 = vsel %vm1244, %v1944, 0.0
        %v2006 = vadd.f32 %v2004, %v2005
        %v2007 = vsel %vm1244, %v1946, 0.0
        %v2008 = vadd.f32 %v2006, %v2007
        %v2009 = vsel %vm1244, %v1948, 0.0
        %v2010 = vadd.f32 %v2008, %v2009
        %v2011 = vsel %vm1244, %v1950, 0.0
        %v2012 = vadd.f32 %v2010, %v2011
        %v2013 = vsel %vm1244, %v1952, 0.0
        %v2014 = vadd.f32 %v2012, %v2013
        %v2015 = vsel %vm1244, %v1954, 0.0
        %v2016 = vadd.f32 %v2014, %v2015
        %v2017 = vsel %vm1244, %v1956, 0.0
        %v2018 = vadd.f32 %v2016, %v2017
        %v2019 = vsel %vm1244, %v1958, 0.0
        %v2020 = vadd.f32 %v2018, %v2019
        %v2021 = vsel %vm1244, %v1960, 0.0
        %v2022 = vadd.f32 %v2020, %v2021
        %v2023 = vsel %vm1244, %v1962, 0.0
        %v2024 = vadd.f32 %v2022, %v2023
        %v2025 = vsel %vm1244, %v1964, 0.0
        %v2026 = vadd.f32 %v2024, %v2025
        %v2027 = vsel %vm1244, %v1966, 0.0
        %v2028 = vadd.f32 %v2026, %v2027
        %v2029 = vsel %vm1244, %v1968, 0.0
        %v2030 = vadd.f32 %v2028, %v2029
        %v2031 = vadd.f32 %v1307, %v1999
        %v2032 = vadd.f32 %v1308, %v2030
        %v2033 = vmul.f32 %v1441, 8.0
        %v2034 = vmul.f32 %v1442, 8.0
        %v2035 = vmul.f32 %v1443, 8.0
        %v2036 = vmul.f32 %v1444, 8.0
        %v2037 = vmul.f32 %v1445, 8.0
        %v2038 = vmul.f32 %v1446, 8.0
        %v2039 = vmul.f32 %v1447, 8.0
        %v2040 = vmul.f32 %v1448, 8.0
        %v2041 = vmul.f32 %v1449, 8.0
        %v2042 = vmul.f32 %v1450, 8.0
        %v2043 = vmul.f32 %v1451, 8.0
        %v2044 = vmul.f32 %v1452, 8.0
        %v2045 = vmul.f32 %v1453, 8.0
        %v2046 = vmul.f32 %v1454, 8.0
        %v2047 = vmul.f32 %v1455, 8.0
        %v2048 = vmul.f32 %v1456, 8.0
        %v2049 = vmul.f32 %v1457, 8.0
        %v2050 = vmul.f32 %v1458, 8.0
        %v2051 = vmul.f32 %v1459, 8.0
        %v2052 = vmul.f32 %v1460, 8.0
        %v2053 = vmul.f32 %v1461, 8.0
        %v2054 = vmul.f32 %v1462, 8.0
        %v2055 = vmul.f32 %v1463, 8.0
        %v2056 = vmul.f32 %v1464, 8.0
        %v2057 = vmul.f32 %v1465, 8.0
        %v2058 = vmul.f32 %v1466, 8.0
        %v2059 = vmul.f32 %v1467, 8.0
        %v2060 = vmul.f32 %v1468, 8.0
        %v2061 = vmul.f32 %v1469, 8.0
        %v2062 = vmul.f32 %v1470, 8.0
        %v2063 = vmul.f32 %v1471, 8.0
        %v2064 = vmul.f32 %v1472, 8.0
        %v2065 = vmul.f32 %v1585, 8.0
        %v2066 = vmul.f32 %v1586, 8.0
        %v2067 = vmul.f32 %v1587, 8.0
        %v2068 = vmul.f32 %v1588, 8.0
        %v2069 = vmul.f32 %v1589, 8.0
        %v2070 = vmul.f32 %v1590, 8.0
        %v2071 = vmul.f32 %v1591, 8.0
        %v2072 = vmul.f32 %v1592, 8.0
        %v2073 = vmul.f32 %v1593, 8.0
        %v2074 = vmul.f32 %v1594, 8.0
        %v2075 = vmul.f32 %v1595, 8.0
        %v2076 = vmul.f32 %v1596, 8.0
        %v2077 = vmul.f32 %v1597, 8.0
        %v2078 = vmul.f32 %v1598, 8.0
        %v2079 = vmul.f32 %v1599, 8.0
        %v2080 = vmul.f32 %v1600, 8.0
        %v2081 = vmul.f32 %v1601, 8.0
        %v2082 = vmul.f32 %v1602, 8.0
        %v2083 = vmul.f32 %v1603, 8.0
        %v2084 = vmul.f32 %v1604, 8.0
        %v2085 = vmul.f32 %v1605, 8.0
        %v2086 = vmul.f32 %v1606, 8.0
        %v2087 = vmul.f32 %v1607, 8.0
        %v2088 = vmul.f32 %v1608, 8.0
        %v2089 = vmul.f32 %v1609, 8.0
        %v2090 = vmul.f32 %v1610, 8.0
        %v2091 = vmul.f32 %v1611, 8.0
        %v2092 = vmul.f32 %v1612, 8.0
        %v2093 = vmul.f32 %v1613, 8.0
        %v2094 = vmul.f32 %v1614, 8.0
        %v2095 = vmul.f32 %v1615, 8.0
        %v2096 = vmul.f32 %v1616, 8.0
        %v2097 = vmul.f32 %v1713, 8.0
        %v2098 = vmul.f32 %v1714, 8.0
        %v2099 = vmul.f32 %v1715, 8.0
        %v2100 = vmul.f32 %v1716, 8.0
        %v2101 = vmul.f32 %v1717, 8.0
        %v2102 = vmul.f32 %v1718, 8.0
        %v2103 = vmul.f32 %v1719, 8.0
        %v2104 = vmul.f32 %v1720, 8.0
        %v2105 = vmul.f32 %v1721, 8.0
        %v2106 = vmul.f32 %v1722, 8.0
        %v2107 = vmul.f32 %v1723, 8.0
        %v2108 = vmul.f32 %v1724, 8.0
        %v2109 = vmul.f32 %v1725, 8.0
        %v2110 = vmul.f32 %v1726, 8.0
        %v2111 = vmul.f32 %v1727, 8.0
        %v2112 = vmul.f32 %v1728, 8.0
        %v2113 = vmul.f32 %v1729, 8.0
        %v2114 = vmul.f32 %v1730, 8.0
        %v2115 = vmul.f32 %v1731, 8.0
        %v2116 = vmul.f32 %v1732, 8.0
        %v2117 = vmul.f32 %v1733, 8.0
        %v2118 = vmul.f32 %v1734, 8.0
        %v2119 = vmul.f32 %v1735, 8.0
        %v2120 = vmul.f32 %v1736, 8.0
        %v2121 = vmul.f32 %v1737, 8.0
        %v2122 = vmul.f32 %v1738, 8.0
        %v2123 = vmul.f32 %v1739, 8.0
        %v2124 = vmul.f32 %v1740, 8.0
        %v2125 = vmul.f32 %v1741, 8.0
        %v2126 = vmul.f32 %v1742, 8.0
        %v2127 = vmul.f32 %v1743, 8.0
        %v2128 = vmul.f32 %v1744, 8.0
        %s2129 = scalar_lea.vmem %s372, 512
        %v2130 = vld [vmem:[%s2129] sm:$0xff]
        %v2131 = vld [vmem:[%s2129 + $0x8] sm:$0xff]
        %v2132 = vld [vmem:[%s2129 + $0x10] sm:$0xff]
        %v2133 = vld [vmem:[%s2129 + $0x18] sm:$0xff]
        %v2134 = vld [vmem:[%s2129 + $0x20] sm:$0xff]
        %v2135 = vld [vmem:[%s2129 + $0x28] sm:$0xff]
        %v2136 = vld [vmem:[%s2129 + $0x30] sm:$0xff]
        %v2137 = vld [vmem:[%s2129 + $0x38] sm:$0xff]
        %v2138 = vld [vmem:[%s2129 + $0x40] sm:$0xff]
        %v2139 = vld [vmem:[%s2129 + $0x48] sm:$0xff]
        %v2140 = vld [vmem:[%s2129 + $0x50] sm:$0xff]
        %v2141 = vld [vmem:[%s2129 + $0x58] sm:$0xff]
        %v2142 = vld [vmem:[%s2129 + $0x60] sm:$0xff]
        %v2143 = vld [vmem:[%s2129 + $0x68] sm:$0xff]
        %v2144 = vld [vmem:[%s2129 + $0x70] sm:$0xff]
        %v2145 = vld [vmem:[%s2129 + $0x78] sm:$0xff]
        %v2146 = vld [vmem:[%s2129 + $0x80] sm:$0xff]
        %v2147 = vld [vmem:[%s2129 + $0x88] sm:$0xff]
        %v2148 = vld [vmem:[%s2129 + $0x90] sm:$0xff]
        %v2149 = vld [vmem:[%s2129 + $0x98] sm:$0xff]
        %v2150 = vld [vmem:[%s2129 + $0xa0] sm:$0xff]
        %v2151 = vld [vmem:[%s2129 + $0xa8] sm:$0xff]
        %v2152 = vld [vmem:[%s2129 + $0xb0] sm:$0xff]
        %v2153 = vld [vmem:[%s2129 + $0xb8] sm:$0xff]
        %v2154 = vld [vmem:[%s2129 + $0xc0] sm:$0xff]
        %v2155 = vld [vmem:[%s2129 + $0xc8] sm:$0xff]
        %v2156 = vld [vmem:[%s2129 + $0xd0] sm:$0xff]
        %v2157 = vld [vmem:[%s2129 + $0xd8] sm:$0xff]
        %v2158 = vld [vmem:[%s2129 + $0xe0] sm:$0xff]
        %v2159 = vld [vmem:[%s2129 + $0xe8] sm:$0xff]
        %v2160 = vld [vmem:[%s2129 + $0xf0] sm:$0xff]
        %v2161 = vld [vmem:[%s2129 + $0xf8] sm:$0xff]
        %s2162 = scalar_lea.vmem %s310, 32 [#allocation7]
        %v2163 = vld [vmem:[%s2162] sm:$0xff]
        %v2164 = vld [vmem:[%s2162 + $0x8] sm:$0xff]
        %v2165 = vsub.f32 %v2132, %v2130
        %v2166 = vsub.f32 %v2133, %v2131
        %v2167 = vsub.f32 %v2134, %v2132
        %v2168 = vsub.f32 %v2135, %v2133
        %v2169 = vsub.f32 %v2136, %v2134
        %v2170 = vsub.f32 %v2137, %v2135
        %v2171 = vsub.f32 %v2138, %v2136
        %v2172 = vsub.f32 %v2139, %v2137
        %v2173 = vsub.f32 %v2140, %v2138
        %v2174 = vsub.f32 %v2141, %v2139
        %v2175 = vsub.f32 %v2142, %v2140
        %v2176 = vsub.f32 %v2143, %v2141
        %v2177 = vsub.f32 %v2144, %v2142
        %v2178 = vsub.f32 %v2145, %v2143
        %v2179 = vsub.f32 %v2146, %v2144
        %v2180 = vsub.f32 %v2147, %v2145
        %v2181 = vsub.f32 %v2148, %v2146
        %v2182 = vsub.f32 %v2149, %v2147
        %v2183 = vsub.f32 %v2150, %v2148
        %v2184 = vsub.f32 %v2151, %v2149
        %v2185 = vsub.f32 %v2152, %v2150
        %v2186 = vsub.f32 %v2153, %v2151
        %v2187 = vsub.f32 %v2154, %v2152
        %v2188 = vsub.f32 %v2155, %v2153
        %v2189 = vsub.f32 %v2156, %v2154
        %v2190 = vsub.f32 %v2157, %v2155
        %v2191 = vsub.f32 %v2158, %v2156
        %v2192 = vsub.f32 %v2159, %v2157
        %v2193 = vsub.f32 %v2160, %v2158
        %v2194 = vsub.f32 %v2161, %v2159
        %v2195 = vsub.f32 %v2163, %v2160
        %v2196 = vsub.f32 %v2164, %v2161
        %v2229 = vrot.slane %v2130, 7
        %v2230 = vrot.slane %v2131, 7
        %v2231 = vsel %vm778, %v2229, %v2230
        %v2232 = vrot.slane %v2132, 7
        %v2233 = vrot.slane %v2133, 7
        %v2234 = vsel %vm778, %v2232, %v2233
        %v2235 = vrot.slane %v2134, 7
        %v2236 = vrot.slane %v2135, 7
        %v2237 = vsel %vm778, %v2235, %v2236
        %v2238 = vrot.slane %v2136, 7
        %v2239 = vrot.slane %v2137, 7
        %v2240 = vsel %vm778, %v2238, %v2239
        %v2241 = vrot.slane %v2138, 7
        %v2242 = vrot.slane %v2139, 7
        %v2243 = vsel %vm778, %v2241, %v2242
        %v2244 = vrot.slane %v2140, 7
        %v2245 = vrot.slane %v2141, 7
        %v2246 = vsel %vm778, %v2244, %v2245
        %v2247 = vrot.slane %v2142, 7
        %v2248 = vrot.slane %v2143, 7
        %v2249 = vsel %vm778, %v2247, %v2248
        %v2250 = vrot.slane %v2144, 7
        %v2251 = vrot.slane %v2145, 7
        %v2252 = vsel %vm778, %v2250, %v2251
        %v2253 = vrot.slane %v2146, 7
        %v2254 = vrot.slane %v2147, 7
        %v2255 = vsel %vm778, %v2253, %v2254
        %v2256 = vrot.slane %v2148, 7
        %v2257 = vrot.slane %v2149, 7
        %v2258 = vsel %vm778, %v2256, %v2257
        %v2259 = vrot.slane %v2150, 7
        %v2260 = vrot.slane %v2151, 7
        %v2261 = vsel %vm778, %v2259, %v2260
        %v2262 = vrot.slane %v2152, 7
        %v2263 = vrot.slane %v2153, 7
        %v2264 = vsel %vm778, %v2262, %v2263
        %v2265 = vrot.slane %v2154, 7
        %v2266 = vrot.slane %v2155, 7
        %v2267 = vsel %vm778, %v2265, %v2266
        %v2268 = vrot.slane %v2156, 7
        %v2269 = vrot.slane %v2157, 7
        %v2270 = vsel %vm778, %v2268, %v2269
        %v2271 = vrot.slane %v2158, 7
        %v2272 = vrot.slane %v2159, 7
        %v2273 = vsel %vm778, %v2271, %v2272
        %v2274 = vrot.slane %v2160, 7
        %v2275 = vrot.slane %v2161, 7
        %v2276 = vsel %vm778, %v2274, %v2275
        %v2309 = vsub.f32 %v2130, %v2229
        %v2310 = vsub.f32 %v2131, %v2231
        %v2311 = vsub.f32 %v2132, %v2232
        %v2312 = vsub.f32 %v2133, %v2234
        %v2313 = vsub.f32 %v2134, %v2235
        %v2314 = vsub.f32 %v2135, %v2237
        %v2315 = vsub.f32 %v2136, %v2238
        %v2316 = vsub.f32 %v2137, %v2240
        %v2317 = vsub.f32 %v2138, %v2241
        %v2318 = vsub.f32 %v2139, %v2243
        %v2319 = vsub.f32 %v2140, %v2244
        %v2320 = vsub.f32 %v2141, %v2246
        %v2321 = vsub.f32 %v2142, %v2247
        %v2322 = vsub.f32 %v2143, %v2249
        %v2323 = vsub.f32 %v2144, %v2250
        %v2324 = vsub.f32 %v2145, %v2252
        %v2325 = vsub.f32 %v2146, %v2253
        %v2326 = vsub.f32 %v2147, %v2255
        %v2327 = vsub.f32 %v2148, %v2256
        %v2328 = vsub.f32 %v2149, %v2258
        %v2329 = vsub.f32 %v2150, %v2259
        %v2330 = vsub.f32 %v2151, %v2261
        %v2331 = vsub.f32 %v2152, %v2262
        %v2332 = vsub.f32 %v2153, %v2264
        %v2333 = vsub.f32 %v2154, %v2265
        %v2334 = vsub.f32 %v2155, %v2267
        %v2335 = vsub.f32 %v2156, %v2268
        %v2336 = vsub.f32 %v2157, %v2270
        %v2337 = vsub.f32 %v2158, %v2271
        %v2338 = vsub.f32 %v2159, %v2273
        %v2339 = vsub.f32 %v2160, %v2274
        %v2340 = vsub.f32 %v2161, %v2276
        %2341 = vrot.lane.b32.xlu0 %v2130, 1
        %v2342 = vpop.permute.xlu0 %2341
        %2343 = vrot.lane.b32.xlu0 %v2131, 1
        %v2344 = vpop.permute.xlu0 %2343
        %2345 = vrot.lane.b32.xlu0 %v2132, 1
        %v2346 = vpop.permute.xlu0 %2345
        %2347 = vrot.lane.b32.xlu0 %v2133, 1
        %v2348 = vpop.permute.xlu0 %2347
        %2349 = vrot.lane.b32.xlu0 %v2134, 1
        %v2350 = vpop.permute.xlu0 %2349
        %2351 = vrot.lane.b32.xlu0 %v2135, 1
        %v2352 = vpop.permute.xlu0 %2351
        %2353 = vrot.lane.b32.xlu0 %v2136, 1
        %v2354 = vpop.permute.xlu0 %2353
        %2355 = vrot.lane.b32.xlu0 %v2137, 1
        %v2356 = vpop.permute.xlu0 %2355
        %2357 = vrot.lane.b32.xlu0 %v2138, 1
        %v2358 = vpop.permute.xlu0 %2357
        %2359 = vrot.lane.b32.xlu0 %v2139, 1
        %v2360 = vpop.permute.xlu0 %2359
        %2361 = vrot.lane.b32.xlu0 %v2140, 1
        %v2362 = vpop.permute.xlu0 %2361
        %2363 = vrot.lane.b32.xlu0 %v2141, 1
        %v2364 = vpop.permute.xlu0 %2363
        %2365 = vrot.lane.b32.xlu0 %v2142, 1
        %v2366 = vpop.permute.xlu0 %2365
        %2367 = vrot.lane.b32.xlu0 %v2143, 1
        %v2368 = vpop.permute.xlu0 %2367
        %2369 = vrot.lane.b32.xlu0 %v2144, 1
        %v2370 = vpop.permute.xlu0 %2369
        %2371 = vrot.lane.b32.xlu0 %v2145, 1
        %v2372 = vpop.permute.xlu0 %2371
        %2373 = vrot.lane.b32.xlu0 %v2146, 1
        %v2374 = vpop.permute.xlu0 %2373
        %2375 = vrot.lane.b32.xlu0 %v2147, 1
        %v2376 = vpop.permute.xlu0 %2375
        %2377 = vrot.lane.b32.xlu0 %v2148, 1
        %v2378 = vpop.permute.xlu0 %2377
        %2379 = vrot.lane.b32.xlu0 %v2149, 1
        %v2380 = vpop.permute.xlu0 %2379
        %2381 = vrot.lane.b32.xlu0 %v2150, 1
        %v2382 = vpop.permute.xlu0 %2381
        %2383 = vrot.lane.b32.xlu0 %v2151, 1
        %v2384 = vpop.permute.xlu0 %2383
        %2385 = vrot.lane.b32.xlu0 %v2152, 1
        %v2386 = vpop.permute.xlu0 %2385
        %2387 = vrot.lane.b32.xlu0 %v2153, 1
        %v2388 = vpop.permute.xlu0 %2387
        %2389 = vrot.lane.b32.xlu0 %v2154, 1
        %v2390 = vpop.permute.xlu0 %2389
        %2391 = vrot.lane.b32.xlu0 %v2155, 1
        %v2392 = vpop.permute.xlu0 %2391
        %2393 = vrot.lane.b32.xlu0 %v2156, 1
        %v2394 = vpop.permute.xlu0 %2393
        %2395 = vrot.lane.b32.xlu0 %v2157, 1
        %v2396 = vpop.permute.xlu0 %2395
        %2397 = vrot.lane.b32.xlu0 %v2158, 1
        %v2398 = vpop.permute.xlu0 %2397
        %2399 = vrot.lane.b32.xlu0 %v2159, 1
        %v2400 = vpop.permute.xlu0 %2399
        %2401 = vrot.lane.b32.xlu0 %v2160, 1
        %v2402 = vpop.permute.xlu0 %2401
        %2403 = vrot.lane.b32.xlu0 %v2161, 1
        %v2404 = vpop.permute.xlu0 %2403
        %v2437 = vsub.f32 %v2130, %v2342
        %v2438 = vsub.f32 %v2131, %v2344
        %v2439 = vsub.f32 %v2132, %v2346
        %v2440 = vsub.f32 %v2133, %v2348
        %v2441 = vsub.f32 %v2134, %v2350
        %v2442 = vsub.f32 %v2135, %v2352
        %v2443 = vsub.f32 %v2136, %v2354
        %v2444 = vsub.f32 %v2137, %v2356
        %v2445 = vsub.f32 %v2138, %v2358
        %v2446 = vsub.f32 %v2139, %v2360
        %v2447 = vsub.f32 %v2140, %v2362
        %v2448 = vsub.f32 %v2141, %v2364
        %v2449 = vsub.f32 %v2142, %v2366
        %v2450 = vsub.f32 %v2143, %v2368
        %v2451 = vsub.f32 %v2144, %v2370
        %v2452 = vsub.f32 %v2145, %v2372
        %v2453 = vsub.f32 %v2146, %v2374
        %v2454 = vsub.f32 %v2147, %v2376
        %v2455 = vsub.f32 %v2148, %v2378
        %v2456 = vsub.f32 %v2149, %v2380
        %v2457 = vsub.f32 %v2150, %v2382
        %v2458 = vsub.f32 %v2151, %v2384
        %v2459 = vsub.f32 %v2152, %v2386
        %v2460 = vsub.f32 %v2153, %v2388
        %v2461 = vsub.f32 %v2154, %v2390
        %v2462 = vsub.f32 %v2155, %v2392
        %v2463 = vsub.f32 %v2156, %v2394
        %v2464 = vsub.f32 %v2157, %v2396
        %v2465 = vsub.f32 %v2158, %v2398
        %v2466 = vsub.f32 %v2159, %v2400
        %v2467 = vsub.f32 %v2160, %v2402
        %v2468 = vsub.f32 %v2161, %v2404
        %v2469 = vmul.f32 %v2165, %v2165
        %v2470 = vmul.f32 %v2166, %v2166
        %v2471 = vmul.f32 %v2167, %v2167
        %v2472 = vmul.f32 %v2168, %v2168
        %v2473 = vmul.f32 %v2169, %v2169
        %v2474 = vmul.f32 %v2170, %v2170
        %v2475 = vmul.f32 %v2171, %v2171
        %v2476 = vmul.f32 %v2172, %v2172
        %v2477 = vmul.f32 %v2173, %v2173
        %v2478 = vmul.f32 %v2174, %v2174
        %v2479 = vmul.f32 %v2175, %v2175
        %v2480 = vmul.f32 %v2176, %v2176
        %v2481 = vmul.f32 %v2177, %v2177
        %v2482 = vmul.f32 %v2178, %v2178
        %v2483 = vmul.f32 %v2179, %v2179
        %v2484 = vmul.f32 %v2180, %v2180
        %v2485 = vmul.f32 %v2181, %v2181
        %v2486 = vmul.f32 %v2182, %v2182
        %v2487 = vmul.f32 %v2183, %v2183
        %v2488 = vmul.f32 %v2184, %v2184
        %v2489 = vmul.f32 %v2185, %v2185
        %v2490 = vmul.f32 %v2186, %v2186
        %v2491 = vmul.f32 %v2187, %v2187
        %v2492 = vmul.f32 %v2188, %v2188
        %v2493 = vmul.f32 %v2189, %v2189
        %v2494 = vmul.f32 %v2190, %v2190
        %v2495 = vmul.f32 %v2191, %v2191
        %v2496 = vmul.f32 %v2192, %v2192
        %v2497 = vmul.f32 %v2193, %v2193
        %v2498 = vmul.f32 %v2194, %v2194
        %v2499 = vmul.f32 %v2195, %v2195
        %v2500 = vmul.f32 %v2196, %v2196
        %v2501 = vsel %vm548, %v2469, 0.0
        %v2502 = vsel %vm548, %v2471, 0.0
        %v2503 = vadd.f32 %v2501, %v2502
        %v2504 = vsel %vm548, %v2473, 0.0
        %v2505 = vadd.f32 %v2503, %v2504
        %v2506 = vsel %vm548, %v2475, 0.0
        %v2507 = vadd.f32 %v2505, %v2506
        %v2508 = vsel %vm548, %v2477, 0.0
        %v2509 = vadd.f32 %v2507, %v2508
        %v2510 = vsel %vm548, %v2479, 0.0
        %v2511 = vadd.f32 %v2509, %v2510
        %v2512 = vsel %vm548, %v2481, 0.0
        %v2513 = vadd.f32 %v2511, %v2512
        %v2514 = vsel %vm548, %v2483, 0.0
        %v2515 = vadd.f32 %v2513, %v2514
        %v2516 = vsel %vm548, %v2485, 0.0
        %v2517 = vadd.f32 %v2515, %v2516
        %v2518 = vsel %vm548, %v2487, 0.0
        %v2519 = vadd.f32 %v2517, %v2518
        %v2520 = vsel %vm548, %v2489, 0.0
        %v2521 = vadd.f32 %v2519, %v2520
        %v2522 = vsel %vm548, %v2491, 0.0
        %v2523 = vadd.f32 %v2521, %v2522
        %v2524 = vsel %vm548, %v2493, 0.0
        %v2525 = vadd.f32 %v2523, %v2524
        %v2526 = vsel %vm548, %v2495, 0.0
        %v2527 = vadd.f32 %v2525, %v2526
        %v2528 = vsel %vm548, %v2497, 0.0
        %v2529 = vadd.f32 %v2527, %v2528
        %v2530 = vsel %vm548, %v2499, 0.0
        %v2531 = vadd.f32 %v2529, %v2530
        %v2532 = vsel %vm548, %v2470, 0.0
        %v2533 = vsel %vm548, %v2472, 0.0
        %v2534 = vadd.f32 %v2532, %v2533
        %v2535 = vsel %vm548, %v2474, 0.0
        %v2536 = vadd.f32 %v2534, %v2535
        %v2537 = vsel %vm548, %v2476, 0.0
        %v2538 = vadd.f32 %v2536, %v2537
        %v2539 = vsel %vm548, %v2478, 0.0
        %v2540 = vadd.f32 %v2538, %v2539
        %v2541 = vsel %vm548, %v2480, 0.0
        %v2542 = vadd.f32 %v2540, %v2541
        %v2543 = vsel %vm548, %v2482, 0.0
        %v2544 = vadd.f32 %v2542, %v2543
        %v2545 = vsel %vm548, %v2484, 0.0
        %v2546 = vadd.f32 %v2544, %v2545
        %v2547 = vsel %vm548, %v2486, 0.0
        %v2548 = vadd.f32 %v2546, %v2547
        %v2549 = vsel %vm548, %v2488, 0.0
        %v2550 = vadd.f32 %v2548, %v2549
        %v2551 = vsel %vm548, %v2490, 0.0
        %v2552 = vadd.f32 %v2550, %v2551
        %v2553 = vsel %vm548, %v2492, 0.0
        %v2554 = vadd.f32 %v2552, %v2553
        %v2555 = vsel %vm548, %v2494, 0.0
        %v2556 = vadd.f32 %v2554, %v2555
        %v2557 = vsel %vm548, %v2496, 0.0
        %v2558 = vadd.f32 %v2556, %v2557
        %v2559 = vsel %vm548, %v2498, 0.0
        %v2560 = vadd.f32 %v2558, %v2559
        %v2561 = vsel %vm548, %v2500, 0.0
        %v2562 = vadd.f32 %v2560, %v2561
        %v2563 = vadd.f32 %v1839, %v2531
        %v2564 = vadd.f32 %v1840, %v2562
        %v2565 = vmul.f32 %v2309, %v2309
        %v2566 = vmul.f32 %v2310, %v2310
        %v2567 = vmul.f32 %v2311, %v2311
        %v2568 = vmul.f32 %v2312, %v2312
        %v2569 = vmul.f32 %v2313, %v2313
        %v2570 = vmul.f32 %v2314, %v2314
        %v2571 = vmul.f32 %v2315, %v2315
        %v2572 = vmul.f32 %v2316, %v2316
        %v2573 = vmul.f32 %v2317, %v2317
        %v2574 = vmul.f32 %v2318, %v2318
        %v2575 = vmul.f32 %v2319, %v2319
        %v2576 = vmul.f32 %v2320, %v2320
        %v2577 = vmul.f32 %v2321, %v2321
        %v2578 = vmul.f32 %v2322, %v2322
        %v2579 = vmul.f32 %v2323, %v2323
        %v2580 = vmul.f32 %v2324, %v2324
        %v2581 = vmul.f32 %v2325, %v2325
        %v2582 = vmul.f32 %v2326, %v2326
        %v2583 = vmul.f32 %v2327, %v2327
        %v2584 = vmul.f32 %v2328, %v2328
        %v2585 = vmul.f32 %v2329, %v2329
        %v2586 = vmul.f32 %v2330, %v2330
        %v2587 = vmul.f32 %v2331, %v2331
        %v2588 = vmul.f32 %v2332, %v2332
        %v2589 = vmul.f32 %v2333, %v2333
        %v2590 = vmul.f32 %v2334, %v2334
        %v2591 = vmul.f32 %v2335, %v2335
        %v2592 = vmul.f32 %v2336, %v2336
        %v2593 = vmul.f32 %v2337, %v2337
        %v2594 = vmul.f32 %v2338, %v2338
        %v2595 = vmul.f32 %v2339, %v2339
        %v2596 = vmul.f32 %v2340, %v2340
        %v2597 = vsel %vm1147, %v2565, 0.0
        %v2598 = vsel %vm1147, %v2567, 0.0
        %v2599 = vadd.f32 %v2597, %v2598
        %v2600 = vsel %vm1147, %v2569, 0.0
        %v2601 = vadd.f32 %v2599, %v2600
        %v2602 = vsel %vm1147, %v2571, 0.0
        %v2603 = vadd.f32 %v2601, %v2602
        %v2604 = vsel %vm1147, %v2573, 0.0
        %v2605 = vadd.f32 %v2603, %v2604
        %v2606 = vsel %vm1147, %v2575, 0.0
        %v2607 = vadd.f32 %v2605, %v2606
        %v2608 = vsel %vm1147, %v2577, 0.0
        %v2609 = vadd.f32 %v2607, %v2608
        %v2610 = vsel %vm1147, %v2579, 0.0
        %v2611 = vadd.f32 %v2609, %v2610
        %v2612 = vsel %vm1147, %v2581, 0.0
        %v2613 = vadd.f32 %v2611, %v2612
        %v2614 = vsel %vm1147, %v2583, 0.0
        %v2615 = vadd.f32 %v2613, %v2614
        %v2616 = vsel %vm1147, %v2585, 0.0
        %v2617 = vadd.f32 %v2615, %v2616
        %v2618 = vsel %vm1147, %v2587, 0.0
        %v2619 = vadd.f32 %v2617, %v2618
        %v2620 = vsel %vm1147, %v2589, 0.0
        %v2621 = vadd.f32 %v2619, %v2620
        %v2622 = vsel %vm1147, %v2591, 0.0
        %v2623 = vadd.f32 %v2621, %v2622
        %v2624 = vsel %vm1147, %v2593, 0.0
        %v2625 = vadd.f32 %v2623, %v2624
        %v2626 = vsel %vm1147, %v2595, 0.0
        %v2627 = vadd.f32 %v2625, %v2626
        %v2628 = vsel %vm548, %v2566, 0.0
        %v2629 = vsel %vm548, %v2568, 0.0
        %v2630 = vadd.f32 %v2628, %v2629
        %v2631 = vsel %vm548, %v2570, 0.0
        %v2632 = vadd.f32 %v2630, %v2631
        %v2633 = vsel %vm548, %v2572, 0.0
        %v2634 = vadd.f32 %v2632, %v2633
        %v2635 = vsel %vm548, %v2574, 0.0
        %v2636 = vadd.f32 %v2634, %v2635
        %v2637 = vsel %vm548, %v2576, 0.0
        %v2638 = vadd.f32 %v2636, %v2637
        %v2639 = vsel %vm548, %v2578, 0.0
        %v2640 = vadd.f32 %v2638, %v2639
        %v2641 = vsel %vm548, %v2580, 0.0
        %v2642 = vadd.f32 %v2640, %v2641
        %v2643 = vsel %vm548, %v2582, 0.0
        %v2644 = vadd.f32 %v2642, %v2643
        %v2645 = vsel %vm548, %v2584, 0.0
        %v2646 = vadd.f32 %v2644, %v2645
        %v2647 = vsel %vm548, %v2586, 0.0
        %v2648 = vadd.f32 %v2646, %v2647
        %v2649 = vsel %vm548, %v2588, 0.0
        %v2650 = vadd.f32 %v2648, %v2649
        %v2651 = vsel %vm548, %v2590, 0.0
        %v2652 = vadd.f32 %v2650, %v2651
        %v2653 = vsel %vm548, %v2592, 0.0
        %v2654 = vadd.f32 %v2652, %v2653
        %v2655 = vsel %vm548, %v2594, 0.0
        %v2656 = vadd.f32 %v2654, %v2655
        %v2657 = vsel %vm548, %v2596, 0.0
        %v2658 = vadd.f32 %v2656, %v2657
        %v2659 = vadd.f32 %v1935, %v2627
        %v2660 = vadd.f32 %v1936, %v2658
        %v2661 = vmul.f32 %v2437, %v2437
        %v2662 = vmul.f32 %v2438, %v2438
        %v2663 = vmul.f32 %v2439, %v2439
        %v2664 = vmul.f32 %v2440, %v2440
        %v2665 = vmul.f32 %v2441, %v2441
        %v2666 = vmul.f32 %v2442, %v2442
        %v2667 = vmul.f32 %v2443, %v2443
        %v2668 = vmul.f32 %v2444, %v2444
        %v2669 = vmul.f32 %v2445, %v2445
        %v2670 = vmul.f32 %v2446, %v2446
        %v2671 = vmul.f32 %v2447, %v2447
        %v2672 = vmul.f32 %v2448, %v2448
        %v2673 = vmul.f32 %v2449, %v2449
        %v2674 = vmul.f32 %v2450, %v2450
        %v2675 = vmul.f32 %v2451, %v2451
        %v2676 = vmul.f32 %v2452, %v2452
        %v2677 = vmul.f32 %v2453, %v2453
        %v2678 = vmul.f32 %v2454, %v2454
        %v2679 = vmul.f32 %v2455, %v2455
        %v2680 = vmul.f32 %v2456, %v2456
        %v2681 = vmul.f32 %v2457, %v2457
        %v2682 = vmul.f32 %v2458, %v2458
        %v2683 = vmul.f32 %v2459, %v2459
        %v2684 = vmul.f32 %v2460, %v2460
        %v2685 = vmul.f32 %v2461, %v2461
        %v2686 = vmul.f32 %v2462, %v2462
        %v2687 = vmul.f32 %v2463, %v2463
        %v2688 = vmul.f32 %v2464, %v2464
        %v2689 = vmul.f32 %v2465, %v2465
        %v2690 = vmul.f32 %v2466, %v2466
        %v2691 = vmul.f32 %v2467, %v2467
        %v2692 = vmul.f32 %v2468, %v2468
        %v2693 = vsel %vm1244, %v2661, 0.0
        %v2694 = vsel %vm1244, %v2663, 0.0
        %v2695 = vadd.f32 %v2693, %v2694
        %v2696 = vsel %vm1244, %v2665, 0.0
        %v2697 = vadd.f32 %v2695, %v2696
        %v2698 = vsel %vm1244, %v2667, 0.0
        %v2699 = vadd.f32 %v2697, %v2698
        %v2700 = vsel %vm1244, %v2669, 0.0
        %v2701 = vadd.f32 %v2699, %v2700
        %v2702 = vsel %vm1244, %v2671, 0.0
        %v2703 = vadd.f32 %v2701, %v2702
        %v2704 = vsel %vm1244, %v2673, 0.0
        %v2705 = vadd.f32 %v2703, %v2704
        %v2706 = vsel %vm1244, %v2675, 0.0
        %v2707 = vadd.f32 %v2705, %v2706
        %v2708 = vsel %vm1244, %v2677, 0.0
        %v2709 = vadd.f32 %v2707, %v2708
        %v2710 = vsel %vm1244, %v2679, 0.0
        %v2711 = vadd.f32 %v2709, %v2710
        %v2712 = vsel %vm1244, %v2681, 0.0
        %v2713 = vadd.f32 %v2711, %v2712
        %v2714 = vsel %vm1244, %v2683, 0.0
        %v2715 = vadd.f32 %v2713, %v2714
        %v2716 = vsel %vm1244, %v2685, 0.0
        %v2717 = vadd.f32 %v2715, %v2716
        %v2718 = vsel %vm1244, %v2687, 0.0
        %v2719 = vadd.f32 %v2717, %v2718
        %v2720 = vsel %vm1244, %v2689, 0.0
        %v2721 = vadd.f32 %v2719, %v2720
        %v2722 = vsel %vm1244, %v2691, 0.0
        %v2723 = vadd.f32 %v2721, %v2722
        %v2724 = vsel %vm1244, %v2662, 0.0
        %v2725 = vsel %vm1244, %v2664, 0.0
        %v2726 = vadd.f32 %v2724, %v2725
        %v2727 = vsel %vm1244, %v2666, 0.0
        %v2728 = vadd.f32 %v2726, %v2727
        %v2729 = vsel %vm1244, %v2668, 0.0
        %v2730 = vadd.f32 %v2728, %v2729
        %v2731 = vsel %vm1244, %v2670, 0.0
        %v2732 = vadd.f32 %v2730, %v2731
        %v2733 = vsel %vm1244, %v2672, 0.0
        %v2734 = vadd.f32 %v2732, %v2733
        %v2735 = vsel %vm1244, %v2674, 0.0
        %v2736 = vadd.f32 %v2734, %v2735
        %v2737 = vsel %vm1244, %v2676, 0.0
        %v2738 = vadd.f32 %v2736, %v2737
        %v2739 = vsel %vm1244, %v2678, 0.0
        %v2740 = vadd.f32 %v2738, %v2739
        %v2741 = vsel %vm1244, %v2680, 0.0
        %v2742 = vadd.f32 %v2740, %v2741
        %v2743 = vsel %vm1244, %v2682, 0.0
        %v2744 = vadd.f32 %v2742, %v2743
        %v2745 = vsel %vm1244, %v2684, 0.0
        %v2746 = vadd.f32 %v2744, %v2745
        %v2747 = vsel %vm1244, %v2686, 0.0
        %v2748 = vadd.f32 %v2746, %v2747
        %v2749 = vsel %vm1244, %v2688, 0.0
        %v2750 = vadd.f32 %v2748, %v2749
        %v2751 = vsel %vm1244, %v2690, 0.0
        %v2752 = vadd.f32 %v2750, %v2751
        %v2753 = vsel %vm1244, %v2692, 0.0
        %v2754 = vadd.f32 %v2752, %v2753
        %v2755 = vadd.f32 %v2031, %v2723
        %v2756 = vadd.f32 %v2032, %v2754
        %v2757 = vmul.f32 %v2165, 4.0
        %v2758 = vmul.f32 %v2166, 4.0
        %v2759 = vmul.f32 %v2167, 4.0
        %v2760 = vmul.f32 %v2168, 4.0
        %v2761 = vmul.f32 %v2169, 4.0
        %v2762 = vmul.f32 %v2170, 4.0
        %v2763 = vmul.f32 %v2171, 4.0
        %v2764 = vmul.f32 %v2172, 4.0
        %v2765 = vmul.f32 %v2173, 4.0
        %v2766 = vmul.f32 %v2174, 4.0
        %v2767 = vmul.f32 %v2175, 4.0
        %v2768 = vmul.f32 %v2176, 4.0
        %v2769 = vmul.f32 %v2177, 4.0
        %v2770 = vmul.f32 %v2178, 4.0
        %v2771 = vmul.f32 %v2179, 4.0
        %v2772 = vmul.f32 %v2180, 4.0
        %v2773 = vmul.f32 %v2181, 4.0
        %v2774 = vmul.f32 %v2182, 4.0
        %v2775 = vmul.f32 %v2183, 4.0
        %v2776 = vmul.f32 %v2184, 4.0
        %v2777 = vmul.f32 %v2185, 4.0
        %v2778 = vmul.f32 %v2186, 4.0
        %v2779 = vmul.f32 %v2187, 4.0
        %v2780 = vmul.f32 %v2188, 4.0
        %v2781 = vmul.f32 %v2189, 4.0
        %v2782 = vmul.f32 %v2190, 4.0
        %v2783 = vmul.f32 %v2191, 4.0
        %v2784 = vmul.f32 %v2192, 4.0
        %v2785 = vmul.f32 %v2193, 4.0
        %v2786 = vmul.f32 %v2194, 4.0
        %v2787 = vmul.f32 %v2195, 4.0
        %v2788 = vmul.f32 %v2196, 4.0
        %v2789 = vmul.f32 %v2309, 4.0
        %v2790 = vmul.f32 %v2310, 4.0
        %v2791 = vmul.f32 %v2311, 4.0
        %v2792 = vmul.f32 %v2312, 4.0
        %v2793 = vmul.f32 %v2313, 4.0
        %v2794 = vmul.f32 %v2314, 4.0
        %v2795 = vmul.f32 %v2315, 4.0
        %v2796 = vmul.f32 %v2316, 4.0
        %v2797 = vmul.f32 %v2317, 4.0
        %v2798 = vmul.f32 %v2318, 4.0
        %v2799 = vmul.f32 %v2319, 4.0
        %v2800 = vmul.f32 %v2320, 4.0
        %v2801 = vmul.f32 %v2321, 4.0
        %v2802 = vmul.f32 %v2322, 4.0
        %v2803 = vmul.f32 %v2323, 4.0
        %v2804 = vmul.f32 %v2324, 4.0
        %v2805 = vmul.f32 %v2325, 4.0
        %v2806 = vmul.f32 %v2326, 4.0
        %v2807 = vmul.f32 %v2327, 4.0
        %v2808 = vmul.f32 %v2328, 4.0
        %v2809 = vmul.f32 %v2329, 4.0
        %v2810 = vmul.f32 %v2330, 4.0
        %v2811 = vmul.f32 %v2331, 4.0
        %v2812 = vmul.f32 %v2332, 4.0
        %v2813 = vmul.f32 %v2333, 4.0
        %v2814 = vmul.f32 %v2334, 4.0
        %v2815 = vmul.f32 %v2335, 4.0
        %v2816 = vmul.f32 %v2336, 4.0
        %v2817 = vmul.f32 %v2337, 4.0
        %v2818 = vmul.f32 %v2338, 4.0
        %v2819 = vmul.f32 %v2339, 4.0
        %v2820 = vmul.f32 %v2340, 4.0
        %v2821 = vmul.f32 %v2437, 4.0
        %v2822 = vmul.f32 %v2438, 4.0
        %v2823 = vmul.f32 %v2439, 4.0
        %v2824 = vmul.f32 %v2440, 4.0
        %v2825 = vmul.f32 %v2441, 4.0
        %v2826 = vmul.f32 %v2442, 4.0
        %v2827 = vmul.f32 %v2443, 4.0
        %v2828 = vmul.f32 %v2444, 4.0
        %v2829 = vmul.f32 %v2445, 4.0
        %v2830 = vmul.f32 %v2446, 4.0
        %v2831 = vmul.f32 %v2447, 4.0
        %v2832 = vmul.f32 %v2448, 4.0
        %v2833 = vmul.f32 %v2449, 4.0
        %v2834 = vmul.f32 %v2450, 4.0
        %v2835 = vmul.f32 %v2451, 4.0
        %v2836 = vmul.f32 %v2452, 4.0
        %v2837 = vmul.f32 %v2453, 4.0
        %v2838 = vmul.f32 %v2454, 4.0
        %v2839 = vmul.f32 %v2455, 4.0
        %v2840 = vmul.f32 %v2456, 4.0
        %v2841 = vmul.f32 %v2457, 4.0
        %v2842 = vmul.f32 %v2458, 4.0
        %v2843 = vmul.f32 %v2459, 4.0
        %v2844 = vmul.f32 %v2460, 4.0
        %v2845 = vmul.f32 %v2461, 4.0
        %v2846 = vmul.f32 %v2462, 4.0
        %v2847 = vmul.f32 %v2463, 4.0
        %v2848 = vmul.f32 %v2464, 4.0
        %v2849 = vmul.f32 %v2465, 4.0
        %v2850 = vmul.f32 %v2466, 4.0
        %v2851 = vmul.f32 %v2467, 4.0
        %v2852 = vmul.f32 %v2468, 4.0
        %v2853 = vld [vmem:[#allocation3] sm:$0xff]
        %v2854 = vld [vmem:[#allocation3 + $0x8] sm:$0xff]
        %v2855 = vadd.f32 %v2853, %v2563
        %v2856 = vadd.f32 %v2854, %v2564
        %2857 = vst.msk [vmem:[#allocation3] sm:$0xff] %vm548, %v2855
        %2858 = vst.msk [vmem:[#allocation3 + $0x8] sm:$0xff] %vm548, %v2856
        %v2859 = vld [vmem:[#allocation4] sm:$0xff]
        %v2860 = vld [vmem:[#allocation4 + $0x8] sm:$0x7f]
        %vm2863 = vcmask 1046528
        %v2864 = vrot.slane %v2659, 1
        %v2865 = vrot.slane %v2660, 1
        %v2866 = vsel %vm2863, %v2864, %v2865
        %v2869 = vadd.f32 %v2859, %v2866
        %v2870 = vadd.f32 %v2860, %v2865
        %2871 = vst.msk [vmem:[#allocation4] sm:$0xff] %vm548, %v2869
        %vm2872 = vcmask 63488
        %2873 = vst.msk [vmem:[#allocation4 + $0x8] sm:$0x7f] %vm2872, %v2870
        %v2874 = vld [vmem:[#allocation5] sm:$0xff]
        %v2875 = vld [vmem:[#allocation5 + $0x8] sm:$0xff]
        %2878 = vrot.lane.b32.xlu0 %v2755, 127
        %v2879 = vpop.permute.xlu0 %2878
        %2880 = vrot.lane.b32.xlu0 %v2756, 127
        %v2881 = vpop.permute.xlu0 %2880
        %v2884 = vadd.f32 %v2874, %v2879
        %v2885 = vadd.f32 %v2875, %v2881
        %vm2886 = vcmask 56320
        %2887 = vst.msk [vmem:[#allocation5] sm:$0xff] %vm2886, %v2884
        %2888 = vst.msk [vmem:[#allocation5 + $0x8] sm:$0xff] %vm2886, %v2885
        %v2889 = vadd.f32 %v2065, 1.0
        %v2890 = vadd.f32 %v2066, 1.0
        %v2891 = vadd.f32 %v2067, 1.0
        %v2892 = vadd.f32 %v2068, 1.0
        %v2893 = vadd.f32 %v2069, 1.0
        %v2894 = vadd.f32 %v2070, 1.0
        %v2895 = vadd.f32 %v2071, 1.0
        %v2896 = vadd.f32 %v2072, 1.0
        %v2897 = vadd.f32 %v2073, 1.0
        %v2898 = vadd.f32 %v2074, 1.0
        %v2899 = vadd.f32 %v2075, 1.0
        %v2900 = vadd.f32 %v2076, 1.0
        %v2901 = vadd.f32 %v2077, 1.0
        %v2902 = vadd.f32 %v2078, 1.0
        %v2903 = vadd.f32 %v2079, 1.0
        %v2904 = vadd.f32 %v2080, 1.0
        %v2905 = vadd.f32 %v2081, 1.0
        %v2906 = vadd.f32 %v2082, 1.0
        %v2907 = vadd.f32 %v2083, 1.0
        %v2908 = vadd.f32 %v2084, 1.0
        %v2909 = vadd.f32 %v2085, 1.0
        %v2910 = vadd.f32 %v2086, 1.0
        %v2911 = vadd.f32 %v2087, 1.0
        %v2912 = vadd.f32 %v2088, 1.0
        %v2913 = vadd.f32 %v2089, 1.0
        %v2914 = vadd.f32 %v2090, 1.0
        %v2915 = vadd.f32 %v2091, 1.0
        %v2916 = vadd.f32 %v2092, 1.0
        %v2917 = vadd.f32 %v2093, 1.0
        %v2918 = vadd.f32 %v2094, 1.0
        %v2919 = vadd.f32 %v2095, 1.0
        %v2920 = vadd.f32 %v2096, 1.0
        %v2921 = vadd.f32 %v2821, 1.0
        %v2922 = vadd.f32 %v2822, 1.0
        %v2923 = vadd.f32 %v2823, 1.0
        %v2924 = vadd.f32 %v2824, 1.0
        %v2925 = vadd.f32 %v2825, 1.0
        %v2926 = vadd.f32 %v2826, 1.0
        %v2927 = vadd.f32 %v2827, 1.0
        %v2928 = vadd.f32 %v2828, 1.0
        %v2929 = vadd.f32 %v2829, 1.0
        %v2930 = vadd.f32 %v2830, 1.0
        %v2931 = vadd.f32 %v2831, 1.0
        %v2932 = vadd.f32 %v2832, 1.0
        %v2933 = vadd.f32 %v2833, 1.0
        %v2934 = vadd.f32 %v2834, 1.0
        %v2935 = vadd.f32 %v2835, 1.0
        %v2936 = vadd.f32 %v2836, 1.0
        %v2937 = vadd.f32 %v2837, 1.0
        %v2938 = vadd.f32 %v2838, 1.0
        %v2939 = vadd.f32 %v2839, 1.0
        %v2940 = vadd.f32 %v2840, 1.0
        %v2941 = vadd.f32 %v2841, 1.0
        %v2942 = vadd.f32 %v2842, 1.0
        %v2943 = vadd.f32 %v2843, 1.0
        %v2944 = vadd.f32 %v2844, 1.0
        %v2945 = vadd.f32 %v2845, 1.0
        %v2946 = vadd.f32 %v2846, 1.0
        %v2947 = vadd.f32 %v2847, 1.0
        %v2948 = vadd.f32 %v2848, 1.0
        %v2949 = vadd.f32 %v2849, 1.0
        %v2950 = vadd.f32 %v2850, 1.0
        %v2951 = vadd.f32 %v2851, 1.0
        %v2952 = vadd.f32 %v2852, 1.0
        %v2985 = vrot.slane %v2921, 7
        %v2986 = vrot.slane %v2922, 7
        %v2987 = vsel %vm778, %v2985, %v2986
        %v2988 = vrot.slane %v2923, 7
        %v2989 = vrot.slane %v2924, 7
        %v2990 = vsel %vm778, %v2988, %v2989
        %v2991 = vrot.slane %v2925, 7
        %v2992 = vrot.slane %v2926, 7
        %v2993 = vsel %vm778, %v2991, %v2992
        %v2994 = vrot.slane %v2927, 7
        %v2995 = vrot.slane %v2928, 7
        %v2996 = vsel %vm778, %v2994, %v2995
        %v2997 = vrot.slane %v2929, 7
        %v2998 = vrot.slane %v2930, 7
        %v2999 = vsel %vm778, %v2997, %v2998
        %v3000 = vrot.slane %v2931, 7
        %v3001 = vrot.slane %v2932, 7
        %v3002 = vsel %vm778, %v3000, %v3001
        %v3003 = vrot.slane %v2933, 7
        %v3004 = vrot.slane %v2934, 7
        %v3005 = vsel %vm778, %v3003, %v3004
        %v3006 = vrot.slane %v2935, 7
        %v3007 = vrot.slane %v2936, 7
        %v3008 = vsel %vm778, %v3006, %v3007
        %v3009 = vrot.slane %v2937, 7
        %v3010 = vrot.slane %v2938, 7
        %v3011 = vsel %vm778, %v3009, %v3010
        %v3012 = vrot.slane %v2939, 7
        %v3013 = vrot.slane %v2940, 7
        %v3014 = vsel %vm778, %v3012, %v3013
        %v3015 = vrot.slane %v2941, 7
        %v3016 = vrot.slane %v2942, 7
        %v3017 = vsel %vm778, %v3015, %v3016
        %v3018 = vrot.slane %v2943, 7
        %v3019 = vrot.slane %v2944, 7
        %v3020 = vsel %vm778, %v3018, %v3019
        %v3021 = vrot.slane %v2945, 7
        %v3022 = vrot.slane %v2946, 7
        %v3023 = vsel %vm778, %v3021, %v3022
        %v3024 = vrot.slane %v2947, 7
        %v3025 = vrot.slane %v2948, 7
        %v3026 = vsel %vm778, %v3024, %v3025
        %v3027 = vrot.slane %v2949, 7
        %v3028 = vrot.slane %v2950, 7
        %v3029 = vsel %vm778, %v3027, %v3028
        %v3030 = vrot.slane %v2951, 7
        %v3031 = vrot.slane %v2952, 7
        %v3032 = vsel %vm778, %v3030, %v3031
        %3033 = vrot.lane.b32.xlu0 %v2985, 127
        %v3034 = vpop.permute.xlu0 %3033
        %3035 = vrot.lane.b32.xlu0 %v2987, 127
        %v3036 = vpop.permute.xlu0 %3035
        %3037 = vrot.lane.b32.xlu0 %v2988, 127
        %v3038 = vpop.permute.xlu0 %3037
        %3039 = vrot.lane.b32.xlu0 %v2990, 127
        %v3040 = vpop.permute.xlu0 %3039
        %3041 = vrot.lane.b32.xlu0 %v2991, 127
        %v3042 = vpop.permute.xlu0 %3041
        %3043 = vrot.lane.b32.xlu0 %v2993, 127
        %v3044 = vpop.permute.xlu0 %3043
        %3045 = vrot.lane.b32.xlu0 %v2994, 127
        %v3046 = vpop.permute.xlu0 %3045
        %3047 = vrot.lane.b32.xlu0 %v2996, 127
        %v3048 = vpop.permute.xlu0 %3047
        %3049 = vrot.lane.b32.xlu0 %v2997, 127
        %v3050 = vpop.permute.xlu0 %3049
        %3051 = vrot.lane.b32.xlu0 %v2999, 127
        %v3052 = vpop.permute.xlu0 %3051
        %3053 = vrot.lane.b32.xlu0 %v3000, 127
        %v3054 = vpop.permute.xlu0 %3053
        %3055 = vrot.lane.b32.xlu0 %v3002, 127
        %v3056 = vpop.permute.xlu0 %3055
        %3057 = vrot.lane.b32.xlu0 %v3003, 127
        %v3058 = vpop.permute.xlu0 %3057
        %3059 = vrot.lane.b32.xlu0 %v3005, 127
        %v3060 = vpop.permute.xlu0 %3059
        %3061 = vrot.lane.b32.xlu0 %v3006, 127
        %v3062 = vpop.permute.xlu0 %3061
        %3063 = vrot.lane.b32.xlu0 %v3008, 127
        %v3064 = vpop.permute.xlu0 %3063
        %3065 = vrot.lane.b32.xlu0 %v3009, 127
        %v3066 = vpop.permute.xlu0 %3065
        %3067 = vrot.lane.b32.xlu0 %v3011, 127
        %v3068 = vpop.permute.xlu0 %3067
        %3069 = vrot.lane.b32.xlu0 %v3012, 127
        %v3070 = vpop.permute.xlu0 %3069
        %3071 = vrot.lane.b32.xlu0 %v3014, 127
        %v3072 = vpop.permute.xlu0 %3071
        %3073 = vrot.lane.b32.xlu0 %v3015, 127
        %v3074 = vpop.permute.xlu0 %3073
        %3075 = vrot.lane.b32.xlu0 %v3017, 127
        %v3076 = vpop.permute.xlu0 %3075
        %3077 = vrot.lane.b32.xlu0 %v3018, 127
        %v3078 = vpop.permute.xlu0 %3077
        %3079 = vrot.lane.b32.xlu0 %v3020, 127
        %v3080 = vpop.permute.xlu0 %3079
        %3081 = vrot.lane.b32.xlu0 %v3021, 127
        %v3082 = vpop.permute.xlu0 %3081
        %3083 = vrot.lane.b32.xlu0 %v3023, 127
        %v3084 = vpop.permute.xlu0 %3083
        %3085 = vrot.lane.b32.xlu0 %v3024, 127
        %v3086 = vpop.permute.xlu0 %3085
        %3087 = vrot.lane.b32.xlu0 %v3026, 127
        %v3088 = vpop.permute.xlu0 %3087
        %3089 = vrot.lane.b32.xlu0 %v3027, 127
        %v3090 = vpop.permute.xlu0 %3089
        %3091 = vrot.lane.b32.xlu0 %v3029, 127
        %v3092 = vpop.permute.xlu0 %3091
        %3093 = vrot.lane.b32.xlu0 %v3030, 127
        %v3094 = vpop.permute.xlu0 %3093
        %3095 = vrot.lane.b32.xlu0 %v3032, 127
        %v3096 = vpop.permute.xlu0 %3095
        %v3129 = vmul.f32 %v2889, %v3034
        %v3130 = vmul.f32 %v2890, %v3036
        %v3131 = vmul.f32 %v2891, %v3038
        %v3132 = vmul.f32 %v2892, %v3040
        %v3133 = vmul.f32 %v2893, %v3042
        %v3134 = vmul.f32 %v2894, %v3044
        %v3135 = vmul.f32 %v2895, %v3046
        %v3136 = vmul.f32 %v2896, %v3048
        %v3137 = vmul.f32 %v2897, %v3050
        %v3138 = vmul.f32 %v2898, %v3052
        %v3139 = vmul.f32 %v2899, %v3054
        %v3140 = vmul.f32 %v2900, %v3056
        %v3141 = vmul.f32 %v2901, %v3058
        %v3142 = vmul.f32 %v2902, %v3060
        %v3143 = vmul.f32 %v2903, %v3062
        %v3144 = vmul.f32 %v2904, %v3064
        %v3145 = vmul.f32 %v2905, %v3066
        %v3146 = vmul.f32 %v2906, %v3068
        %v3147 = vmul.f32 %v2907, %v3070
        %v3148 = vmul.f32 %v2908, %v3072
        %v3149 = vmul.f32 %v2909, %v3074
        %v3150 = vmul.f32 %v2910, %v3076
        %v3151 = vmul.f32 %v2911, %v3078
        %v3152 = vmul.f32 %v2912, %v3080
        %v3153 = vmul.f32 %v2913, %v3082
        %v3154 = vmul.f32 %v2914, %v3084
        %v3155 = vmul.f32 %v2915, %v3086
        %v3156 = vmul.f32 %v2916, %v3088
        %v3157 = vmul.f32 %v2917, %v3090
        %v3158 = vmul.f32 %v2918, %v3092
        %v3159 = vmul.f32 %v2919, %v3094
        %v3160 = vmul.f32 %v2920, %v3096
        %v3193 = vrot.slane %v2789, 1
        %v3194 = vrot.slane %v2790, 1
        %v3195 = vsel %vm2863, %v3193, %v3194
        %v3196 = vrot.slane %v2791, 1
        %v3197 = vrot.slane %v2792, 1
        %v3198 = vsel %vm2863, %v3196, %v3197
        %v3199 = vrot.slane %v2793, 1
        %v3200 = vrot.slane %v2794, 1
        %v3201 = vsel %vm2863, %v3199, %v3200
        %v3202 = vrot.slane %v2795, 1
        %v3203 = vrot.slane %v2796, 1
        %v3204 = vsel %vm2863, %v3202, %v3203
        %v3205 = vrot.slane %v2797, 1
        %v3206 = vrot.slane %v2798, 1
        %v3207 = vsel %vm2863, %v3205, %v3206
        %v3208 = vrot.slane %v2799, 1
        %v3209 = vrot.slane %v2800, 1
        %v3210 = vsel %vm2863, %v3208, %v3209
        %v3211 = vrot.slane %v2801, 1
        %v3212 = vrot.slane %v2802, 1
        %v3213 = vsel %vm2863, %v3211, %v3212
        %v3214 = vrot.slane %v2803, 1
        %v3215 = vrot.slane %v2804, 1
        %v3216 = vsel %vm2863, %v3214, %v3215
        %v3217 = vrot.slane %v2805, 1
        %v3218 = vrot.slane %v2806, 1
        %v3219 = vsel %vm2863, %v3217, %v3218
        %v3220 = vrot.slane %v2807, 1
        %v3221 = vrot.slane %v2808, 1
        %v3222 = vsel %vm2863, %v3220, %v3221
        %v3223 = vrot.slane %v2809, 1
        %v3224 = vrot.slane %v2810, 1
        %v3225 = vsel %vm2863, %v3223, %v3224
        %v3226 = vrot.slane %v2811, 1
        %v3227 = vrot.slane %v2812, 1
        %v3228 = vsel %vm2863, %v3226, %v3227
        %v3229 = vrot.slane %v2813, 1
        %v3230 = vrot.slane %v2814, 1
        %v3231 = vsel %vm2863, %v3229, %v3230
        %v3232 = vrot.slane %v2815, 1
        %v3233 = vrot.slane %v2816, 1
        %v3234 = vsel %vm2863, %v3232, %v3233
        %v3235 = vrot.slane %v2817, 1
        %v3236 = vrot.slane %v2818, 1
        %v3237 = vsel %vm2863, %v3235, %v3236
        %v3238 = vrot.slane %v2819, 1
        %v3239 = vrot.slane %v2820, 1
        %v3240 = vsel %vm2863, %v3238, %v3239
        %3241 = vrot.lane.b32.xlu0 %v3195, 1
        %v3242 = vpop.permute.xlu0 %3241
        %3243 = vrot.lane.b32.xlu0 %v3194, 1
        %v3244 = vpop.permute.xlu0 %3243
        %3245 = vrot.lane.b32.xlu0 %v3198, 1
        %v3246 = vpop.permute.xlu0 %3245
        %3247 = vrot.lane.b32.xlu0 %v3197, 1
        %v3248 = vpop.permute.xlu0 %3247
        %3249 = vrot.lane.b32.xlu0 %v3201, 1
        %v3250 = vpop.permute.xlu0 %3249
        %3251 = vrot.lane.b32.xlu0 %v3200, 1
        %v3252 = vpop.permute.xlu0 %3251
        %3253 = vrot.lane.b32.xlu0 %v3204, 1
        %v3254 = vpop.permute.xlu0 %3253
        %3255 = vrot.lane.b32.xlu0 %v3203, 1
        %v3256 = vpop.permute.xlu0 %3255
        %3257 = vrot.lane.b32.xlu0 %v3207, 1
        %v3258 = vpop.permute.xlu0 %3257
        %3259 = vrot.lane.b32.xlu0 %v3206, 1
        %v3260 = vpop.permute.xlu0 %3259
        %3261 = vrot.lane.b32.xlu0 %v3210, 1
        %v3262 = vpop.permute.xlu0 %3261
        %3263 = vrot.lane.b32.xlu0 %v3209, 1
        %v3264 = vpop.permute.xlu0 %3263
        %3265 = vrot.lane.b32.xlu0 %v3213, 1
        %v3266 = vpop.permute.xlu0 %3265
        %3267 = vrot.lane.b32.xlu0 %v3212, 1
        %v3268 = vpop.permute.xlu0 %3267
        %3269 = vrot.lane.b32.xlu0 %v3216, 1
        %v3270 = vpop.permute.xlu0 %3269
        %3271 = vrot.lane.b32.xlu0 %v3215, 1
        %v3272 = vpop.permute.xlu0 %3271
        %3273 = vrot.lane.b32.xlu0 %v3219, 1
        %v3274 = vpop.permute.xlu0 %3273
        %3275 = vrot.lane.b32.xlu0 %v3218, 1
        %v3276 = vpop.permute.xlu0 %3275
        %3277 = vrot.lane.b32.xlu0 %v3222, 1
        %v3278 = vpop.permute.xlu0 %3277
        %3279 = vrot.lane.b32.xlu0 %v3221, 1
        %v3280 = vpop.permute.xlu0 %3279
        %3281 = vrot.lane.b32.xlu0 %v3225, 1
        %v3282 = vpop.permute.xlu0 %3281
        %3283 = vrot.lane.b32.xlu0 %v3224, 1
        %v3284 = vpop.permute.xlu0 %3283
        %3285 = vrot.lane.b32.xlu0 %v3228, 1
        %v3286 = vpop.permute.xlu0 %3285
        %3287 = vrot.lane.b32.xlu0 %v3227, 1
        %v3288 = vpop.permute.xlu0 %3287
        %3289 = vrot.lane.b32.xlu0 %v3231, 1
        %v3290 = vpop.permute.xlu0 %3289
        %3291 = vrot.lane.b32.xlu0 %v3230, 1
        %v3292 = vpop.permute.xlu0 %3291
        %3293 = vrot.lane.b32.xlu0 %v3234, 1
        %v3294 = vpop.permute.xlu0 %3293
        %3295 = vrot.lane.b32.xlu0 %v3233, 1
        %v3296 = vpop.permute.xlu0 %3295
        %3297 = vrot.lane.b32.xlu0 %v3237, 1
        %v3298 = vpop.permute.xlu0 %3297
        %3299 = vrot.lane.b32.xlu0 %v3236, 1
        %v3300 = vpop.permute.xlu0 %3299
        %3301 = vrot.lane.b32.xlu0 %v3240, 1
        %v3302 = vpop.permute.xlu0 %3301
        %3303 = vrot.lane.b32.xlu0 %v3239, 1
        %v3304 = vpop.permute.xlu0 %3303
        %v3337 = vmul.f32 %v2097, %v3242
        %v3338 = vmul.f32 %v2098, %v3244
        %v3339 = vmul.f32 %v2099, %v3246
        %v3340 = vmul.f32 %v2100, %v3248
        %v3341 = vmul.f32 %v2101, %v3250
        %v3342 = vmul.f32 %v2102, %v3252
        %v3343 = vmul.f32 %v2103, %v3254
        %v3344 = vmul.f32 %v2104, %v3256
        %v3345 = vmul.f32 %v2105, %v3258
        %v3346 = vmul.f32 %v2106, %v3260
        %v3347 = vmul.f32 %v2107, %v3262
        %v3348 = vmul.f32 %v2108, %v3264
        %v3349 = vmul.f32 %v2109, %v3266
        %v3350 = vmul.f32 %v2110, %v3268
        %v3351 = vmul.f32 %v2111, %v3270
        %v3352 = vmul.f32 %v2112, %v3272
        %v3353 = vmul.f32 %v2113, %v3274
        %v3354 = vmul.f32 %v2114, %v3276
        %v3355 = vmul.f32 %v2115, %v3278
        %v3356 = vmul.f32 %v2116, %v3280
        %v3357 = vmul.f32 %v2117, %v3282
        %v3358 = vmul.f32 %v2118, %v3284
        %v3359 = vmul.f32 %v2119, %v3286
        %v3360 = vmul.f32 %v2120, %v3288
        %v3361 = vmul.f32 %v2121, %v3290
        %v3362 = vmul.f32 %v2122, %v3292
        %v3363 = vmul.f32 %v2123, %v3294
        %v3364 = vmul.f32 %v2124, %v3296
        %v3365 = vmul.f32 %v2125, %v3298
        %v3366 = vmul.f32 %v2126, %v3300
        %v3367 = vmul.f32 %v2127, %v3302
        %v3368 = vmul.f32 %v2128, %v3304
        %v3401 = vrot.slane %v3337, 7
        %v3402 = vrot.slane %v3338, 7
        %v3403 = vsel %vm778, %v3401, %v3402
        %v3404 = vrot.slane %v3339, 7
        %v3405 = vrot.slane %v3340, 7
        %v3406 = vsel %vm778, %v3404, %v3405
        %v3407 = vrot.slane %v3341, 7
        %v3408 = vrot.slane %v3342, 7
        %v3409 = vsel %vm778, %v3407, %v3408
        %v3410 = vrot.slane %v3343, 7
        %v3411 = vrot.slane %v3344, 7
        %v3412 = vsel %vm778, %v3410, %v3411
        %v3413 = vrot.slane %v3345, 7
        %v3414 = vrot.slane %v3346, 7
        %v3415 = vsel %vm778, %v3413, %v3414
        %v3416 = vrot.slane %v3347, 7
        %v3417 = vrot.slane %v3348, 7
        %v3418 = vsel %vm778, %v3416, %v3417
        %v3419 = vrot.slane %v3349, 7
        %v3420 = vrot.slane %v3350, 7
        %v3421 = vsel %vm778, %v3419, %v3420
        %v3422 = vrot.slane %v3351, 7
        %v3423 = vrot.slane %v3352, 7
        %v3424 = vsel %vm778, %v3422, %v3423
        %v3425 = vrot.slane %v3353, 7
        %v3426 = vrot.slane %v3354, 7
        %v3427 = vsel %vm778, %v3425, %v3426
        %v3428 = vrot.slane %v3355, 7
        %v3429 = vrot.slane %v3356, 7
        %v3430 = vsel %vm778, %v3428, %v3429
        %v3431 = vrot.slane %v3357, 7
        %v3432 = vrot.slane %v3358, 7
        %v3433 = vsel %vm778, %v3431, %v3432
        %v3434 = vrot.slane %v3359, 7
        %v3435 = vrot.slane %v3360, 7
        %v3436 = vsel %vm778, %v3434, %v3435
        %v3437 = vrot.slane %v3361, 7
        %v3438 = vrot.slane %v3362, 7
        %v3439 = vsel %vm778, %v3437, %v3438
        %v3440 = vrot.slane %v3363, 7
        %v3441 = vrot.slane %v3364, 7
        %v3442 = vsel %vm778, %v3440, %v3441
        %v3443 = vrot.slane %v3365, 7
        %v3444 = vrot.slane %v3366, 7
        %v3445 = vsel %vm778, %v3443, %v3444
        %v3446 = vrot.slane %v3367, 7
        %v3447 = vrot.slane %v3368, 7
        %v3448 = vsel %vm778, %v3446, %v3447
        %3449 = vrot.lane.b32.xlu0 %v3401, 127
        %v3450 = vpop.permute.xlu0 %3449
        %3451 = vrot.lane.b32.xlu0 %v3403, 127
        %v3452 = vpop.permute.xlu0 %3451
        %3453 = vrot.lane.b32.xlu0 %v3404, 127
        %v3454 = vpop.permute.xlu0 %3453
        %3455 = vrot.lane.b32.xlu0 %v3406, 127
        %v3456 = vpop.permute.xlu0 %3455
        %3457 = vrot.lane.b32.xlu0 %v3407, 127
        %v3458 = vpop.permute.xlu0 %3457
        %3459 = vrot.lane.b32.xlu0 %v3409, 127
        %v3460 = vpop.permute.xlu0 %3459
        %3461 = vrot.lane.b32.xlu0 %v3410, 127
        %v3462 = vpop.permute.xlu0 %3461
        %3463 = vrot.lane.b32.xlu0 %v3412, 127
        %v3464 = vpop.permute.xlu0 %3463
        %3465 = vrot.lane.b32.xlu0 %v3413, 127
        %v3466 = vpop.permute.xlu0 %3465
        %3467 = vrot.lane.b32.xlu0 %v3415, 127
        %v3468 = vpop.permute.xlu0 %3467
        %3469 = vrot.lane.b32.xlu0 %v3416, 127
        %v3470 = vpop.permute.xlu0 %3469
        %3471 = vrot.lane.b32.xlu0 %v3418, 127
        %v3472 = vpop.permute.xlu0 %3471
        %3473 = vrot.lane.b32.xlu0 %v3419, 127
        %v3474 = vpop.permute.xlu0 %3473
        %3475 = vrot.lane.b32.xlu0 %v3421, 127
        %v3476 = vpop.permute.xlu0 %3475
        %3477 = vrot.lane.b32.xlu0 %v3422, 127
        %v3478 = vpop.permute.xlu0 %3477
        %3479 = vrot.lane.b32.xlu0 %v3424, 127
        %v3480 = vpop.permute.xlu0 %3479
        %3481 = vrot.lane.b32.xlu0 %v3425, 127
        %v3482 = vpop.permute.xlu0 %3481
        %3483 = vrot.lane.b32.xlu0 %v3427, 127
        %v3484 = vpop.permute.xlu0 %3483
        %3485 = vrot.lane.b32.xlu0 %v3428, 127
        %v3486 = vpop.permute.xlu0 %3485
        %3487 = vrot.lane.b32.xlu0 %v3430, 127
        %v3488 = vpop.permute.xlu0 %3487
        %3489 = vrot.lane.b32.xlu0 %v3431, 127
        %v3490 = vpop.permute.xlu0 %3489
        %3491 = vrot.lane.b32.xlu0 %v3433, 127
        %v3492 = vpop.permute.xlu0 %3491
        %3493 = vrot.lane.b32.xlu0 %v3434, 127
        %v3494 = vpop.permute.xlu0 %3493
        %3495 = vrot.lane.b32.xlu0 %v3436, 127
        %v3496 = vpop.permute.xlu0 %3495
        %3497 = vrot.lane.b32.xlu0 %v3437, 127
        %v3498 = vpop.permute.xlu0 %3497
        %3499 = vrot.lane.b32.xlu0 %v3439, 127
        %v3500 = vpop.permute.xlu0 %3499
        %3501 = vrot.lane.b32.xlu0 %v3440, 127
        %v3502 = vpop.permute.xlu0 %3501
        %3503 = vrot.lane.b32.xlu0 %v3442, 127
        %v3504 = vpop.permute.xlu0 %3503
        %3505 = vrot.lane.b32.xlu0 %v3443, 127
        %v3506 = vpop.permute.xlu0 %3505
        %3507 = vrot.lane.b32.xlu0 %v3445, 127
        %v3508 = vpop.permute.xlu0 %3507
        %3509 = vrot.lane.b32.xlu0 %v3446, 127
        %v3510 = vpop.permute.xlu0 %3509
        %3511 = vrot.lane.b32.xlu0 %v3448, 127
        %v3512 = vpop.permute.xlu0 %3511
        %v3545 = vsub.f32 %v3129, %v3450
        %v3546 = vsub.f32 %v3130, %v3452
        %v3547 = vsub.f32 %v3131, %v3454
        %v3548 = vsub.f32 %v3132, %v3456
        %v3549 = vsub.f32 %v3133, %v3458
        %v3550 = vsub.f32 %v3134, %v3460
        %v3551 = vsub.f32 %v3135, %v3462
        %v3552 = vsub.f32 %v3136, %v3464
        %v3553 = vsub.f32 %v3137, %v3466
        %v3554 = vsub.f32 %v3138, %v3468
        %v3555 = vsub.f32 %v3139, %v3470
        %v3556 = vsub.f32 %v3140, %v3472
        %v3557 = vsub.f32 %v3141, %v3474
        %v3558 = vsub.f32 %v3142, %v3476
        %v3559 = vsub.f32 %v3143, %v3478
        %v3560 = vsub.f32 %v3144, %v3480
        %v3561 = vsub.f32 %v3145, %v3482
        %v3562 = vsub.f32 %v3146, %v3484
        %v3563 = vsub.f32 %v3147, %v3486
        %v3564 = vsub.f32 %v3148, %v3488
        %v3565 = vsub.f32 %v3149, %v3490
        %v3566 = vsub.f32 %v3150, %v3492
        %v3567 = vsub.f32 %v3151, %v3494
        %v3568 = vsub.f32 %v3152, %v3496
        %v3569 = vsub.f32 %v3153, %v3498
        %v3570 = vsub.f32 %v3154, %v3500
        %v3571 = vsub.f32 %v3155, %v3502
        %v3572 = vsub.f32 %v3156, %v3504
        %v3573 = vsub.f32 %v3157, %v3506
        %v3574 = vsub.f32 %v3158, %v3508
        %v3575 = vsub.f32 %v3159, %v3510
        %v3576 = vsub.f32 %v3160, %v3512
        %3577 = vrot.lane.b32.xlu0 %v2921, 127
        %v3578 = vpop.permute.xlu0 %3577
        %3579 = vrot.lane.b32.xlu0 %v2922, 127
        %v3580 = vpop.permute.xlu0 %3579
        %3581 = vrot.lane.b32.xlu0 %v2923, 127
        %v3582 = vpop.permute.xlu0 %3581
        %3583 = vrot.lane.b32.xlu0 %v2924, 127
        %v3584 = vpop.permute.xlu0 %3583
        %3585 = vrot.lane.b32.xlu0 %v2925, 127
        %v3586 = vpop.permute.xlu0 %3585
        %3587 = vrot.lane.b32.xlu0 %v2926, 127
        %v3588 = vpop.permute.xlu0 %3587
        %3589 = vrot.lane.b32.xlu0 %v2927, 127
        %v3590 = vpop.permute.xlu0 %3589
        %3591 = vrot.lane.b32.xlu0 %v2928, 127
        %v3592 = vpop.permute.xlu0 %3591
        %3593 = vrot.lane.b32.xlu0 %v2929, 127
        %v3594 = vpop.permute.xlu0 %3593
        %3595 = vrot.lane.b32.xlu0 %v2930, 127
        %v3596 = vpop.permute.xlu0 %3595
        %3597 = vrot.lane.b32.xlu0 %v2931, 127
        %v3598 = vpop.permute.xlu0 %3597
        %3599 = vrot.lane.b32.xlu0 %v2932, 127
        %v3600 = vpop.permute.xlu0 %3599
        %3601 = vrot.lane.b32.xlu0 %v2933, 127
        %v3602 = vpop.permute.xlu0 %3601
        %3603 = vrot.lane.b32.xlu0 %v2934, 127
        %v3604 = vpop.permute.xlu0 %3603
        %3605 = vrot.lane.b32.xlu0 %v2935, 127
        %v3606 = vpop.permute.xlu0 %3605
        %3607 = vrot.lane.b32.xlu0 %v2936, 127
        %v3608 = vpop.permute.xlu0 %3607
        %3609 = vrot.lane.b32.xlu0 %v2937, 127
        %v3610 = vpop.permute.xlu0 %3609
        %3611 = vrot.lane.b32.xlu0 %v2938, 127
        %v3612 = vpop.permute.xlu0 %3611
        %3613 = vrot.lane.b32.xlu0 %v2939, 127
        %v3614 = vpop.permute.xlu0 %3613
        %3615 = vrot.lane.b32.xlu0 %v2940, 127
        %v3616 = vpop.permute.xlu0 %3615
        %3617 = vrot.lane.b32.xlu0 %v2941, 127
        %v3618 = vpop.permute.xlu0 %3617
        %3619 = vrot.lane.b32.xlu0 %v2942, 127
        %v3620 = vpop.permute.xlu0 %3619
        %3621 = vrot.lane.b32.xlu0 %v2943, 127
        %v3622 = vpop.permute.xlu0 %3621
        %3623 = vrot.lane.b32.xlu0 %v2944, 127
        %v3624 = vpop.permute.xlu0 %3623
        %3625 = vrot.lane.b32.xlu0 %v2945, 127
        %v3626 = vpop.permute.xlu0 %3625
        %3627 = vrot.lane.b32.xlu0 %v2946, 127
        %v3628 = vpop.permute.xlu0 %3627
        %3629 = vrot.lane.b32.xlu0 %v2947, 127
        %v3630 = vpop.permute.xlu0 %3629
        %3631 = vrot.lane.b32.xlu0 %v2948, 127
        %v3632 = vpop.permute.xlu0 %3631
        %3633 = vrot.lane.b32.xlu0 %v2949, 127
        %v3634 = vpop.permute.xlu0 %3633
        %3635 = vrot.lane.b32.xlu0 %v2950, 127
        %v3636 = vpop.permute.xlu0 %3635
        %3637 = vrot.lane.b32.xlu0 %v2951, 127
        %v3638 = vpop.permute.xlu0 %3637
        %3639 = vrot.lane.b32.xlu0 %v2952, 127
        %v3640 = vpop.permute.xlu0 %3639
        %v3673 = vmul.f32 %v2033, %v3578
        %v3674 = vmul.f32 %v2034, %v3580
        %v3675 = vmul.f32 %v2035, %v3582
        %v3676 = vmul.f32 %v2036, %v3584
        %v3677 = vmul.f32 %v2037, %v3586
        %v3678 = vmul.f32 %v2038, %v3588
        %v3679 = vmul.f32 %v2039, %v3590
        %v3680 = vmul.f32 %v2040, %v3592
        %v3681 = vmul.f32 %v2041, %v3594
        %v3682 = vmul.f32 %v2042, %v3596
        %v3683 = vmul.f32 %v2043, %v3598
        %v3684 = vmul.f32 %v2044, %v3600
        %v3685 = vmul.f32 %v2045, %v3602
        %v3686 = vmul.f32 %v2046, %v3604
        %v3687 = vmul.f32 %v2047, %v3606
        %v3688 = vmul.f32 %v2048, %v3608
        %v3689 = vmul.f32 %v2049, %v3610
        %v3690 = vmul.f32 %v2050, %v3612
        %v3691 = vmul.f32 %v2051, %v3614
        %v3692 = vmul.f32 %v2052, %v3616
        %v3693 = vmul.f32 %v2053, %v3618
        %v3694 = vmul.f32 %v2054, %v3620
        %v3695 = vmul.f32 %v2055, %v3622
        %v3696 = vmul.f32 %v2056, %v3624
        %v3697 = vmul.f32 %v2057, %v3626
        %v3698 = vmul.f32 %v2058, %v3628
        %v3699 = vmul.f32 %v2059, %v3630
        %v3700 = vmul.f32 %v2060, %v3632
        %v3701 = vmul.f32 %v2061, %v3634
        %v3702 = vmul.f32 %v2062, %v3636
        %v3703 = vmul.f32 %v2063, %v3638
        %v3704 = vmul.f32 %v2064, %v3640
        %3737 = vrot.lane.b32.xlu0 %v2757, 1
        %v3738 = vpop.permute.xlu0 %3737
        %3739 = vrot.lane.b32.xlu0 %v2758, 1
        %v3740 = vpop.permute.xlu0 %3739
        %3741 = vrot.lane.b32.xlu0 %v2759, 1
        %v3742 = vpop.permute.xlu0 %3741
        %3743 = vrot.lane.b32.xlu0 %v2760, 1
        %v3744 = vpop.permute.xlu0 %3743
        %3745 = vrot.lane.b32.xlu0 %v2761, 1
        %v3746 = vpop.permute.xlu0 %3745
        %3747 = vrot.lane.b32.xlu0 %v2762, 1
        %v3748 = vpop.permute.xlu0 %3747
        %3749 = vrot.lane.b32.xlu0 %v2763, 1
        %v3750 = vpop.permute.xlu0 %3749
        %3751 = vrot.lane.b32.xlu0 %v2764, 1
        %v3752 = vpop.permute.xlu0 %3751
        %3753 = vrot.lane.b32.xlu0 %v2765, 1
        %v3754 = vpop.permute.xlu0 %3753
        %3755 = vrot.lane.b32.xlu0 %v2766, 1
        %v3756 = vpop.permute.xlu0 %3755
        %3757 = vrot.lane.b32.xlu0 %v2767, 1
        %v3758 = vpop.permute.xlu0 %3757
        %3759 = vrot.lane.b32.xlu0 %v2768, 1
        %v3760 = vpop.permute.xlu0 %3759
        %3761 = vrot.lane.b32.xlu0 %v2769, 1
        %v3762 = vpop.permute.xlu0 %3761
        %3763 = vrot.lane.b32.xlu0 %v2770, 1
        %v3764 = vpop.permute.xlu0 %3763
        %3765 = vrot.lane.b32.xlu0 %v2771, 1
        %v3766 = vpop.permute.xlu0 %3765
        %3767 = vrot.lane.b32.xlu0 %v2772, 1
        %v3768 = vpop.permute.xlu0 %3767
        %3769 = vrot.lane.b32.xlu0 %v2773, 1
        %v3770 = vpop.permute.xlu0 %3769
        %3771 = vrot.lane.b32.xlu0 %v2774, 1
        %v3772 = vpop.permute.xlu0 %3771
        %3773 = vrot.lane.b32.xlu0 %v2775, 1
        %v3774 = vpop.permute.xlu0 %3773
        %3775 = vrot.lane.b32.xlu0 %v2776, 1
        %v3776 = vpop.permute.xlu0 %3775
        %3777 = vrot.lane.b32.xlu0 %v2777, 1
        %v3778 = vpop.permute.xlu0 %3777
        %3779 = vrot.lane.b32.xlu0 %v2778, 1
        %v3780 = vpop.permute.xlu0 %3779
        %3781 = vrot.lane.b32.xlu0 %v2779, 1
        %v3782 = vpop.permute.xlu0 %3781
        %3783 = vrot.lane.b32.xlu0 %v2780, 1
        %v3784 = vpop.permute.xlu0 %3783
        %3785 = vrot.lane.b32.xlu0 %v2781, 1
        %v3786 = vpop.permute.xlu0 %3785
        %3787 = vrot.lane.b32.xlu0 %v2782, 1
        %v3788 = vpop.permute.xlu0 %3787
        %3789 = vrot.lane.b32.xlu0 %v2783, 1
        %v3790 = vpop.permute.xlu0 %3789
        %3791 = vrot.lane.b32.xlu0 %v2784, 1
        %v3792 = vpop.permute.xlu0 %3791
        %3793 = vrot.lane.b32.xlu0 %v2785, 1
        %v3794 = vpop.permute.xlu0 %3793
        %3795 = vrot.lane.b32.xlu0 %v2786, 1
        %v3796 = vpop.permute.xlu0 %3795
        %3797 = vrot.lane.b32.xlu0 %v2787, 1
        %v3798 = vpop.permute.xlu0 %3797
        %3799 = vrot.lane.b32.xlu0 %v2788, 1
        %v3800 = vpop.permute.xlu0 %3799
        %v3833 = vmul.f32 %v2097, %v3738
        %v3834 = vmul.f32 %v2098, %v3740
        %v3835 = vmul.f32 %v2099, %v3742
        %v3836 = vmul.f32 %v2100, %v3744
        %v3837 = vmul.f32 %v2101, %v3746
        %v3838 = vmul.f32 %v2102, %v3748
        %v3839 = vmul.f32 %v2103, %v3750
        %v3840 = vmul.f32 %v2104, %v3752
        %v3841 = vmul.f32 %v2105, %v3754
        %v3842 = vmul.f32 %v2106, %v3756
        %v3843 = vmul.f32 %v2107, %v3758
        %v3844 = vmul.f32 %v2108, %v3760
        %v3845 = vmul.f32 %v2109, %v3762
        %v3846 = vmul.f32 %v2110, %v3764
        %v3847 = vmul.f32 %v2111, %v3766
        %v3848 = vmul.f32 %v2112, %v3768
        %v3849 = vmul.f32 %v2113, %v3770
        %v3850 = vmul.f32 %v2114, %v3772
        %v3851 = vmul.f32 %v2115, %v3774
        %v3852 = vmul.f32 %v2116, %v3776
        %v3853 = vmul.f32 %v2117, %v3778
        %v3854 = vmul.f32 %v2118, %v3780
        %v3855 = vmul.f32 %v2119, %v3782
        %v3856 = vmul.f32 %v2120, %v3784
        %v3857 = vmul.f32 %v2121, %v3786
        %v3858 = vmul.f32 %v2122, %v3788
        %v3859 = vmul.f32 %v2123, %v3790
        %v3860 = vmul.f32 %v2124, %v3792
        %v3861 = vmul.f32 %v2125, %v3794
        %v3862 = vmul.f32 %v2126, %v3796
        %v3863 = vmul.f32 %v2127, %v3798
        %v3864 = vmul.f32 %v2128, %v3800
        %3897 = vrot.lane.b32.xlu0 %v3833, 127
        %v3898 = vpop.permute.xlu0 %3897
        %3899 = vrot.lane.b32.xlu0 %v3834, 127
        %v3900 = vpop.permute.xlu0 %3899
        %3901 = vrot.lane.b32.xlu0 %v3835, 127
        %v3902 = vpop.permute.xlu0 %3901
        %3903 = vrot.lane.b32.xlu0 %v3836, 127
        %v3904 = vpop.permute.xlu0 %3903
        %3905 = vrot.lane.b32.xlu0 %v3837, 127
        %v3906 = vpop.permute.xlu0 %3905
        %3907 = vrot.lane.b32.xlu0 %v3838, 127
        %v3908 = vpop.permute.xlu0 %3907
        %3909 = vrot.lane.b32.xlu0 %v3839, 127
        %v3910 = vpop.permute.xlu0 %3909
        %3911 = vrot.lane.b32.xlu0 %v3840, 127
        %v3912 = vpop.permute.xlu0 %3911
        %3913 = vrot.lane.b32.xlu0 %v3841, 127
        %v3914 = vpop.permute.xlu0 %3913
        %3915 = vrot.lane.b32.xlu0 %v3842, 127
        %v3916 = vpop.permute.xlu0 %3915
        %3917 = vrot.lane.b32.xlu0 %v3843, 127
        %v3918 = vpop.permute.xlu0 %3917
        %3919 = vrot.lane.b32.xlu0 %v3844, 127
        %v3920 = vpop.permute.xlu0 %3919
        %3921 = vrot.lane.b32.xlu0 %v3845, 127
        %v3922 = vpop.permute.xlu0 %3921
        %3923 = vrot.lane.b32.xlu0 %v3846, 127
        %v3924 = vpop.permute.xlu0 %3923
        %3925 = vrot.lane.b32.xlu0 %v3847, 127
        %v3926 = vpop.permute.xlu0 %3925
        %3927 = vrot.lane.b32.xlu0 %v3848, 127
        %v3928 = vpop.permute.xlu0 %3927
        %3929 = vrot.lane.b32.xlu0 %v3849, 127
        %v3930 = vpop.permute.xlu0 %3929
        %3931 = vrot.lane.b32.xlu0 %v3850, 127
        %v3932 = vpop.permute.xlu0 %3931
        %3933 = vrot.lane.b32.xlu0 %v3851, 127
        %v3934 = vpop.permute.xlu0 %3933
        %3935 = vrot.lane.b32.xlu0 %v3852, 127
        %v3936 = vpop.permute.xlu0 %3935
        %3937 = vrot.lane.b32.xlu0 %v3853, 127
        %v3938 = vpop.permute.xlu0 %3937
        %3939 = vrot.lane.b32.xlu0 %v3854, 127
        %v3940 = vpop.permute.xlu0 %3939
        %3941 = vrot.lane.b32.xlu0 %v3855, 127
        %v3942 = vpop.permute.xlu0 %3941
        %3943 = vrot.lane.b32.xlu0 %v3856, 127
        %v3944 = vpop.permute.xlu0 %3943
        %3945 = vrot.lane.b32.xlu0 %v3857, 127
        %v3946 = vpop.permute.xlu0 %3945
        %3947 = vrot.lane.b32.xlu0 %v3858, 127
        %v3948 = vpop.permute.xlu0 %3947
        %3949 = vrot.lane.b32.xlu0 %v3859, 127
        %v3950 = vpop.permute.xlu0 %3949
        %3951 = vrot.lane.b32.xlu0 %v3860, 127
        %v3952 = vpop.permute.xlu0 %3951
        %3953 = vrot.lane.b32.xlu0 %v3861, 127
        %v3954 = vpop.permute.xlu0 %3953
        %3955 = vrot.lane.b32.xlu0 %v3862, 127
        %v3956 = vpop.permute.xlu0 %3955
        %3957 = vrot.lane.b32.xlu0 %v3863, 127
        %v3958 = vpop.permute.xlu0 %3957
        %3959 = vrot.lane.b32.xlu0 %v3864, 127
        %v3960 = vpop.permute.xlu0 %3959
        %v3993 = vsub.f32 %v3673, %v3898
        %v3994 = vsub.f32 %v3674, %v3900
        %v3995 = vsub.f32 %v3675, %v3902
        %v3996 = vsub.f32 %v3676, %v3904
        %v3997 = vsub.f32 %v3677, %v3906
        %v3998 = vsub.f32 %v3678, %v3908
        %v3999 = vsub.f32 %v3679, %v3910
        %v4000 = vsub.f32 %v3680, %v3912
        %v4001 = vsub.f32 %v3681, %v3914
        %v4002 = vsub.f32 %v3682, %v3916
        %v4003 = vsub.f32 %v3683, %v3918
        %v4004 = vsub.f32 %v3684, %v3920
        %v4005 = vsub.f32 %v3685, %v3922
        %v4006 = vsub.f32 %v3686, %v3924
        %v4007 = vsub.f32 %v3687, %v3926
        %v4008 = vsub.f32 %v3688, %v3928
        %v4009 = vsub.f32 %v3689, %v3930
        %v4010 = vsub.f32 %v3690, %v3932
        %v4011 = vsub.f32 %v3691, %v3934
        %v4012 = vsub.f32 %v3692, %v3936
        %v4013 = vsub.f32 %v3693, %v3938
        %v4014 = vsub.f32 %v3694, %v3940
        %v4015 = vsub.f32 %v3695, %v3942
        %v4016 = vsub.f32 %v3696, %v3944
        %v4017 = vsub.f32 %v3697, %v3946
        %v4018 = vsub.f32 %v3698, %v3948
        %v4019 = vsub.f32 %v3699, %v3950
        %v4020 = vsub.f32 %v3700, %v3952
        %v4021 = vsub.f32 %v3701, %v3954
        %v4022 = vsub.f32 %v3702, %v3956
        %v4023 = vsub.f32 %v3703, %v3958
        %v4024 = vsub.f32 %v3704, %v3960
        %v4057 = vmul.f32 %v2033, %v3195
        %v4058 = vmul.f32 %v2034, %v3194
        %v4059 = vmul.f32 %v2035, %v3198
        %v4060 = vmul.f32 %v2036, %v3197
        %v4061 = vmul.f32 %v2037, %v3201
        %v4062 = vmul.f32 %v2038, %v3200
        %v4063 = vmul.f32 %v2039, %v3204
        %v4064 = vmul.f32 %v2040, %v3203
        %v4065 = vmul.f32 %v2041, %v3207
        %v4066 = vmul.f32 %v2042, %v3206
        %v4067 = vmul.f32 %v2043, %v3210
        %v4068 = vmul.f32 %v2044, %v3209
        %v4069 = vmul.f32 %v2045, %v3213
        %v4070 = vmul.f32 %v2046, %v3212
        %v4071 = vmul.f32 %v2047, %v3216
        %v4072 = vmul.f32 %v2048, %v3215
        %v4073 = vmul.f32 %v2049, %v3219
        %v4074 = vmul.f32 %v2050, %v3218
        %v4075 = vmul.f32 %v2051, %v3222
        %v4076 = vmul.f32 %v2052, %v3221
        %v4077 = vmul.f32 %v2053, %v3225
        %v4078 = vmul.f32 %v2054, %v3224
        %v4079 = vmul.f32 %v2055, %v3228
        %v4080 = vmul.f32 %v2056, %v3227
        %v4081 = vmul.f32 %v2057, %v3231
        %v4082 = vmul.f32 %v2058, %v3230
        %v4083 = vmul.f32 %v2059, %v3234
        %v4084 = vmul.f32 %v2060, %v3233
        %v4085 = vmul.f32 %v2061, %v3237
        %v4086 = vmul.f32 %v2062, %v3236
        %v4087 = vmul.f32 %v2063, %v3240
        %v4088 = vmul.f32 %v2064, %v3239
        %v4089 = vrot.slane %v2757, 7
        %v4090 = vrot.slane %v2758, 7
        %v4091 = vsel %vm778, %v4089, %v4090
        %v4092 = vrot.slane %v2759, 7
        %v4093 = vrot.slane %v2760, 7
        %v4094 = vsel %vm778, %v4092, %v4093
        %v4095 = vrot.slane %v2761, 7
        %v4096 = vrot.slane %v2762, 7
        %v4097 = vsel %vm778, %v4095, %v4096
        %v4098 = vrot.slane %v2763, 7
        %v4099 = vrot.slane %v2764, 7
        %v4100 = vsel %vm778, %v4098, %v4099
        %v4101 = vrot.slane %v2765, 7
        %v4102 = vrot.slane %v2766, 7
        %v4103 = vsel %vm778, %v4101, %v4102
        %v4104 = vrot.slane %v2767, 7
        %v4105 = vrot.slane %v2768, 7
        %v4106 = vsel %vm778, %v4104, %v4105
        %v4107 = vrot.slane %v2769, 7
        %v4108 = vrot.slane %v2770, 7
        %v4109 = vsel %vm778, %v4107, %v4108
        %v4110 = vrot.slane %v2771, 7
        %v4111 = vrot.slane %v2772, 7
        %v4112 = vsel %vm778, %v4110, %v4111
        %v4113 = vrot.slane %v2773, 7
        %v4114 = vrot.slane %v2774, 7
        %v4115 = vsel %vm778, %v4113, %v4114
        %v4116 = vrot.slane %v2775, 7
        %v4117 = vrot.slane %v2776, 7
        %v4118 = vsel %vm778, %v4116, %v4117
        %v4119 = vrot.slane %v2777, 7
        %v4120 = vrot.slane %v2778, 7
        %v4121 = vsel %vm778, %v4119, %v4120
        %v4122 = vrot.slane %v2779, 7
        %v4123 = vrot.slane %v2780, 7
        %v4124 = vsel %vm778, %v4122, %v4123
        %v4125 = vrot.slane %v2781, 7
        %v4126 = vrot.slane %v2782, 7
        %v4127 = vsel %vm778, %v4125, %v4126
        %v4128 = vrot.slane %v2783, 7
        %v4129 = vrot.slane %v2784, 7
        %v4130 = vsel %vm778, %v4128, %v4129
        %v4131 = vrot.slane %v2785, 7
        %v4132 = vrot.slane %v2786, 7
        %v4133 = vsel %vm778, %v4131, %v4132
        %v4134 = vrot.slane %v2787, 7
        %v4135 = vrot.slane %v2788, 7
        %v4136 = vsel %vm778, %v4134, %v4135
        %v4169 = vmul.f32 %v2889, %v4089
        %v4170 = vmul.f32 %v2890, %v4091
        %v4171 = vmul.f32 %v2891, %v4092
        %v4172 = vmul.f32 %v2892, %v4094
        %v4173 = vmul.f32 %v2893, %v4095
        %v4174 = vmul.f32 %v2894, %v4097
        %v4175 = vmul.f32 %v2895, %v4098
        %v4176 = vmul.f32 %v2896, %v4100
        %v4177 = vmul.f32 %v2897, %v4101
        %v4178 = vmul.f32 %v2898, %v4103
        %v4179 = vmul.f32 %v2899, %v4104
        %v4180 = vmul.f32 %v2900, %v4106
        %v4181 = vmul.f32 %v2901, %v4107
        %v4182 = vmul.f32 %v2902, %v4109
        %v4183 = vmul.f32 %v2903, %v4110
        %v4184 = vmul.f32 %v2904, %v4112
        %v4185 = vmul.f32 %v2905, %v4113
        %v4186 = vmul.f32 %v2906, %v4115
        %v4187 = vmul.f32 %v2907, %v4116
        %v4188 = vmul.f32 %v2908, %v4118
        %v4189 = vmul.f32 %v2909, %v4119
        %v4190 = vmul.f32 %v2910, %v4121
        %v4191 = vmul.f32 %v2911, %v4122
        %v4192 = vmul.f32 %v2912, %v4124
        %v4193 = vmul.f32 %v2913, %v4125
        %v4194 = vmul.f32 %v2914, %v4127
        %v4195 = vmul.f32 %v2915, %v4128
        %v4196 = vmul.f32 %v2916, %v4130
        %v4197 = vmul.f32 %v2917, %v4131
        %v4198 = vmul.f32 %v2918, %v4133
        %v4199 = vmul.f32 %v2919, %v4134
        %v4200 = vmul.f32 %v2920, %v4136
        %v4233 = vrot.slane %v4169, 1
        %v4234 = vrot.slane %v4170, 1
        %v4235 = vsel %vm2863, %v4233, %v4234
        %v4236 = vrot.slane %v4171, 1
        %v4237 = vrot.slane %v4172, 1
        %v4238 = vsel %vm2863, %v4236, %v4237
        %v4239 = vrot.slane %v4173, 1
        %v4240 = vrot.slane %v4174, 1
        %v4241 = vsel %vm2863, %v4239, %v4240
        %v4242 = vrot.slane %v4175, 1
        %v4243 = vrot.slane %v4176, 1
        %v4244 = vsel %vm2863, %v4242, %v4243
        %v4245 = vrot.slane %v4177, 1
        %v4246 = vrot.slane %v4178, 1
        %v4247 = vsel %vm2863, %v4245, %v4246
        %v4248 = vrot.slane %v4179, 1
        %v4249 = vrot.slane %v4180, 1
        %v4250 = vsel %vm2863, %v4248, %v4249
        %v4251 = vrot.slane %v4181, 1
        %v4252 = vrot.slane %v4182, 1
        %v4253 = vsel %vm2863, %v4251, %v4252
        %v4254 = vrot.slane %v4183, 1
        %v4255 = vrot.slane %v4184, 1
        %v4256 = vsel %vm2863, %v4254, %v4255
        %v4257 = vrot.slane %v4185, 1
        %v4258 = vrot.slane %v4186, 1
        %v4259 = vsel %vm2863, %v4257, %v4258
        %v4260 = vrot.slane %v4187, 1
        %v4261 = vrot.slane %v4188, 1
        %v4262 = vsel %vm2863, %v4260, %v4261
        %v4263 = vrot.slane %v4189, 1
        %v4264 = vrot.slane %v4190, 1
        %v4265 = vsel %vm2863, %v4263, %v4264
        %v4266 = vrot.slane %v4191, 1
        %v4267 = vrot.slane %v4192, 1
        %v4268 = vsel %vm2863, %v4266, %v4267
        %v4269 = vrot.slane %v4193, 1
        %v4270 = vrot.slane %v4194, 1
        %v4271 = vsel %vm2863, %v4269, %v4270
        %v4272 = vrot.slane %v4195, 1
        %v4273 = vrot.slane %v4196, 1
        %v4274 = vsel %vm2863, %v4272, %v4273
        %v4275 = vrot.slane %v4197, 1
        %v4276 = vrot.slane %v4198, 1
        %v4277 = vsel %vm2863, %v4275, %v4276
        %v4278 = vrot.slane %v4199, 1
        %v4279 = vrot.slane %v4200, 1
        %v4280 = vsel %vm2863, %v4278, %v4279
        %v4313 = vsub.f32 %v4057, %v4235
        %v4314 = vsub.f32 %v4058, %v4234
        %v4315 = vsub.f32 %v4059, %v4238
        %v4316 = vsub.f32 %v4060, %v4237
        %v4317 = vsub.f32 %v4061, %v4241
        %v4318 = vsub.f32 %v4062, %v4240
        %v4319 = vsub.f32 %v4063, %v4244
        %v4320 = vsub.f32 %v4064, %v4243
        %v4321 = vsub.f32 %v4065, %v4247
        %v4322 = vsub.f32 %v4066, %v4246
        %v4323 = vsub.f32 %v4067, %v4250
        %v4324 = vsub.f32 %v4068, %v4249
        %v4325 = vsub.f32 %v4069, %v4253
        %v4326 = vsub.f32 %v4070, %v4252
        %v4327 = vsub.f32 %v4071, %v4256
        %v4328 = vsub.f32 %v4072, %v4255
        %v4329 = vsub.f32 %v4073, %v4259
        %v4330 = vsub.f32 %v4074, %v4258
        %v4331 = vsub.f32 %v4075, %v4262
        %v4332 = vsub.f32 %v4076, %v4261
        %v4333 = vsub.f32 %v4077, %v4265
        %v4334 = vsub.f32 %v4078, %v4264
        %v4335 = vsub.f32 %v4079, %v4268
        %v4336 = vsub.f32 %v4080, %v4267
        %v4337 = vsub.f32 %v4081, %v4271
        %v4338 = vsub.f32 %v4082, %v4270
        %v4339 = vsub.f32 %v4083, %v4274
        %v4340 = vsub.f32 %v4084, %v4273
        %v4341 = vsub.f32 %v4085, %v4277
        %v4342 = vsub.f32 %v4086, %v4276
        %v4343 = vsub.f32 %v4087, %v4280
        %v4344 = vsub.f32 %v4088, %v4279
        %v4345 = vadd.f32 %v1309, 1.0
        %v4346 = vadd.f32 %v1310, 1.0
        %v4347 = vadd.f32 %v1311, 1.0
        %v4348 = vadd.f32 %v1312, 1.0
        %v4349 = vadd.f32 %v1313, 1.0
        %v4350 = vadd.f32 %v1314, 1.0
        %v4351 = vadd.f32 %v1315, 1.0
        %v4352 = vadd.f32 %v1316, 1.0
        %v4353 = vadd.f32 %v1317, 1.0
        %v4354 = vadd.f32 %v1318, 1.0
        %v4355 = vadd.f32 %v1319, 1.0
        %v4356 = vadd.f32 %v1320, 1.0
        %v4357 = vadd.f32 %v1321, 1.0
        %v4358 = vadd.f32 %v1322, 1.0
        %v4359 = vadd.f32 %v1323, 1.0
        %v4360 = vadd.f32 %v1324, 1.0
        %v4361 = vadd.f32 %v1325, 1.0
        %v4362 = vadd.f32 %v1326, 1.0
        %v4363 = vadd.f32 %v1327, 1.0
        %v4364 = vadd.f32 %v1328, 1.0
        %v4365 = vadd.f32 %v1329, 1.0
        %v4366 = vadd.f32 %v1330, 1.0
        %v4367 = vadd.f32 %v1331, 1.0
        %v4368 = vadd.f32 %v1332, 1.0
        %v4369 = vadd.f32 %v1333, 1.0
        %v4370 = vadd.f32 %v1334, 1.0
        %v4371 = vadd.f32 %v1335, 1.0
        %v4372 = vadd.f32 %v1336, 1.0
        %v4373 = vadd.f32 %v1337, 1.0
        %v4374 = vadd.f32 %v1338, 1.0
        %v4375 = vadd.f32 %v1339, 1.0
        %v4376 = vadd.f32 %v1340, 1.0
        %v4409 = vrot.slane %v3545, 1
        %v4410 = vrot.slane %v3546, 1
        %v4411 = vsel %vm2863, %v4409, %v4410
        %v4412 = vrot.slane %v3547, 1
        %v4413 = vrot.slane %v3548, 1
        %v4414 = vsel %vm2863, %v4412, %v4413
        %v4415 = vrot.slane %v3549, 1
        %v4416 = vrot.slane %v3550, 1
        %v4417 = vsel %vm2863, %v4415, %v4416
        %v4418 = vrot.slane %v3551, 1
        %v4419 = vrot.slane %v3552, 1
        %v4420 = vsel %vm2863, %v4418, %v4419
        %v4421 = vrot.slane %v3553, 1
        %v4422 = vrot.slane %v3554, 1
        %v4423 = vsel %vm2863, %v4421, %v4422
        %v4424 = vrot.slane %v3555, 1
        %v4425 = vrot.slane %v3556, 1
        %v4426 = vsel %vm2863, %v4424, %v4425
        %v4427 = vrot.slane %v3557, 1
        %v4428 = vrot.slane %v3558, 1
        %v4429 = vsel %vm2863, %v4427, %v4428
        %v4430 = vrot.slane %v3559, 1
        %v4431 = vrot.slane %v3560, 1
        %v4432 = vsel %vm2863, %v4430, %v4431
        %v4433 = vrot.slane %v3561, 1
        %v4434 = vrot.slane %v3562, 1
        %v4435 = vsel %vm2863, %v4433, %v4434
        %v4436 = vrot.slane %v3563, 1
        %v4437 = vrot.slane %v3564, 1
        %v4438 = vsel %vm2863, %v4436, %v4437
        %v4439 = vrot.slane %v3565, 1
        %v4440 = vrot.slane %v3566, 1
        %v4441 = vsel %vm2863, %v4439, %v4440
        %v4442 = vrot.slane %v3567, 1
        %v4443 = vrot.slane %v3568, 1
        %v4444 = vsel %vm2863, %v4442, %v4443
        %v4445 = vrot.slane %v3569, 1
        %v4446 = vrot.slane %v3570, 1
        %v4447 = vsel %vm2863, %v4445, %v4446
        %v4448 = vrot.slane %v3571, 1
        %v4449 = vrot.slane %v3572, 1
        %v4450 = vsel %vm2863, %v4448, %v4449
        %v4451 = vrot.slane %v3573, 1
        %v4452 = vrot.slane %v3574, 1
        %v4453 = vsel %vm2863, %v4451, %v4452
        %v4454 = vrot.slane %v3575, 1
        %v4455 = vrot.slane %v3576, 1
        %v4456 = vsel %vm2863, %v4454, %v4455
        %v4489 = vmul.f32 %v4345, %v4411
        %v4490 = vmul.f32 %v4346, %v4410
        %v4491 = vmul.f32 %v4347, %v4414
        %v4492 = vmul.f32 %v4348, %v4413
        %v4493 = vmul.f32 %v4349, %v4417
        %v4494 = vmul.f32 %v4350, %v4416
        %v4495 = vmul.f32 %v4351, %v4420
        %v4496 = vmul.f32 %v4352, %v4419
        %v4497 = vmul.f32 %v4353, %v4423
        %v4498 = vmul.f32 %v4354, %v4422
        %v4499 = vmul.f32 %v4355, %v4426
        %v4500 = vmul.f32 %v4356, %v4425
        %v4501 = vmul.f32 %v4357, %v4429
        %v4502 = vmul.f32 %v4358, %v4428
        %v4503 = vmul.f32 %v4359, %v4432
        %v4504 = vmul.f32 %v4360, %v4431
        %v4505 = vmul.f32 %v4361, %v4435
        %v4506 = vmul.f32 %v4362, %v4434
        %v4507 = vmul.f32 %v4363, %v4438
        %v4508 = vmul.f32 %v4364, %v4437
        %v4509 = vmul.f32 %v4365, %v4441
        %v4510 = vmul.f32 %v4366, %v4440
        %v4511 = vmul.f32 %v4367, %v4444
        %v4512 = vmul.f32 %v4368, %v4443
        %v4513 = vmul.f32 %v4369, %v4447
        %v4514 = vmul.f32 %v4370, %v4446
        %v4515 = vmul.f32 %v4371, %v4450
        %v4516 = vmul.f32 %v4372, %v4449
        %v4517 = vmul.f32 %v4373, %v4453
        %v4518 = vmul.f32 %v4374, %v4452
        %v4519 = vmul.f32 %v4375, %v4456
        %v4520 = vmul.f32 %v4376, %v4455
        %v4553 = vrot.slane %v3993, 7
        %v4554 = vrot.slane %v3994, 7
        %v4555 = vsel %vm778, %v4553, %v4554
        %v4556 = vrot.slane %v3995, 7
        %v4557 = vrot.slane %v3996, 7
        %v4558 = vsel %vm778, %v4556, %v4557
        %v4559 = vrot.slane %v3997, 7
        %v4560 = vrot.slane %v3998, 7
        %v4561 = vsel %vm778, %v4559, %v4560
        %v4562 = vrot.slane %v3999, 7
        %v4563 = vrot.slane %v4000, 7
        %v4564 = vsel %vm778, %v4562, %v4563
        %v4565 = vrot.slane %v4001, 7
        %v4566 = vrot.slane %v4002, 7
        %v4567 = vsel %vm778, %v4565, %v4566
        %v4568 = vrot.slane %v4003, 7
        %v4569 = vrot.slane %v4004, 7
        %v4570 = vsel %vm778, %v4568, %v4569
        %v4571 = vrot.slane %v4005, 7
        %v4572 = vrot.slane %v4006, 7
        %v4573 = vsel %vm778, %v4571, %v4572
        %v4574 = vrot.slane %v4007, 7
        %v4575 = vrot.slane %v4008, 7
        %v4576 = vsel %vm778, %v4574, %v4575
        %v4577 = vrot.slane %v4009, 7
        %v4578 = vrot.slane %v4010, 7
        %v4579 = vsel %vm778, %v4577, %v4578
        %v4580 = vrot.slane %v4011, 7
        %v4581 = vrot.slane %v4012, 7
        %v4582 = vsel %vm778, %v4580, %v4581
        %v4583 = vrot.slane %v4013, 7
        %v4584 = vrot.slane %v4014, 7
        %v4585 = vsel %vm778, %v4583, %v4584
        %v4586 = vrot.slane %v4015, 7
        %v4587 = vrot.slane %v4016, 7
        %v4588 = vsel %vm778, %v4586, %v4587
        %v4589 = vrot.slane %v4017, 7
        %v4590 = vrot.slane %v4018, 7
        %v4591 = vsel %vm778, %v4589, %v4590
        %v4592 = vrot.slane %v4019, 7
        %v4593 = vrot.slane %v4020, 7
        %v4594 = vsel %vm778, %v4592, %v4593
        %v4595 = vrot.slane %v4021, 7
        %v4596 = vrot.slane %v4022, 7
        %v4597 = vsel %vm778, %v4595, %v4596
        %v4598 = vrot.slane %v4023, 7
        %v4599 = vrot.slane %v4024, 7
        %v4600 = vsel %vm778, %v4598, %v4599
        %v4633 = vmul.f32 %v1341, %v4553
        %v4634 = vmul.f32 %v1342, %v4555
        %v4635 = vmul.f32 %v1343, %v4556
        %v4636 = vmul.f32 %v1344, %v4558
        %v4637 = vmul.f32 %v1345, %v4559
        %v4638 = vmul.f32 %v1346, %v4561
        %v4639 = vmul.f32 %v1347, %v4562
        %v4640 = vmul.f32 %v1348, %v4564
        %v4641 = vmul.f32 %v1349, %v4565
        %v4642 = vmul.f32 %v1350, %v4567
        %v4643 = vmul.f32 %v1351, %v4568
        %v4644 = vmul.f32 %v1352, %v4570
        %v4645 = vmul.f32 %v1353, %v4571
        %v4646 = vmul.f32 %v1354, %v4573
        %v4647 = vmul.f32 %v1355, %v4574
        %v4648 = vmul.f32 %v1356, %v4576
        %v4649 = vmul.f32 %v1357, %v4577
        %v4650 = vmul.f32 %v1358, %v4579
        %v4651 = vmul.f32 %v1359, %v4580
        %v4652 = vmul.f32 %v1360, %v4582
        %v4653 = vmul.f32 %v1361, %v4583
        %v4654 = vmul.f32 %v1362, %v4585
        %v4655 = vmul.f32 %v1363, %v4586
        %v4656 = vmul.f32 %v1364, %v4588
        %v4657 = vmul.f32 %v1365, %v4589
        %v4658 = vmul.f32 %v1366, %v4591
        %v4659 = vmul.f32 %v1367, %v4592
        %v4660 = vmul.f32 %v1368, %v4594
        %v4661 = vmul.f32 %v1369, %v4595
        %v4662 = vmul.f32 %v1370, %v4597
        %v4663 = vmul.f32 %v1371, %v4598
        %v4664 = vmul.f32 %v1372, %v4600
        %v4697 = vrot.slane %v4633, 1
        %v4698 = vrot.slane %v4634, 1
        %v4699 = vsel %vm2863, %v4697, %v4698
        %v4700 = vrot.slane %v4635, 1
        %v4701 = vrot.slane %v4636, 1
        %v4702 = vsel %vm2863, %v4700, %v4701
        %v4703 = vrot.slane %v4637, 1
        %v4704 = vrot.slane %v4638, 1
        %v4705 = vsel %vm2863, %v4703, %v4704
        %v4706 = vrot.slane %v4639, 1
        %v4707 = vrot.slane %v4640, 1
        %v4708 = vsel %vm2863, %v4706, %v4707
        %v4709 = vrot.slane %v4641, 1
        %v4710 = vrot.slane %v4642, 1
        %v4711 = vsel %vm2863, %v4709, %v4710
        %v4712 = vrot.slane %v4643, 1
        %v4713 = vrot.slane %v4644, 1
        %v4714 = vsel %vm2863, %v4712, %v4713
        %v4715 = vrot.slane %v4645, 1
        %v4716 = vrot.slane %v4646, 1
        %v4717 = vsel %vm2863, %v4715, %v4716
        %v4718 = vrot.slane %v4647, 1
        %v4719 = vrot.slane %v4648, 1
        %v4720 = vsel %vm2863, %v4718, %v4719
        %v4721 = vrot.slane %v4649, 1
        %v4722 = vrot.slane %v4650, 1
        %v4723 = vsel %vm2863, %v4721, %v4722
        %v4724 = vrot.slane %v4651, 1
        %v4725 = vrot.slane %v4652, 1
        %v4726 = vsel %vm2863, %v4724, %v4725
        %v4727 = vrot.slane %v4653, 1
        %v4728 = vrot.slane %v4654, 1
        %v4729 = vsel %vm2863, %v4727, %v4728
        %v4730 = vrot.slane %v4655, 1
        %v4731 = vrot.slane %v4656, 1
        %v4732 = vsel %vm2863, %v4730, %v4731
        %v4733 = vrot.slane %v4657, 1
        %v4734 = vrot.slane %v4658, 1
        %v4735 = vsel %vm2863, %v4733, %v4734
        %v4736 = vrot.slane %v4659, 1
        %v4737 = vrot.slane %v4660, 1
        %v4738 = vsel %vm2863, %v4736, %v4737
        %v4739 = vrot.slane %v4661, 1
        %v4740 = vrot.slane %v4662, 1
        %v4741 = vsel %vm2863, %v4739, %v4740
        %v4742 = vrot.slane %v4663, 1
        %v4743 = vrot.slane %v4664, 1
        %v4744 = vsel %vm2863, %v4742, %v4743
        %v4777 = vsub.f32 %v4489, %v4699
        %v4778 = vsub.f32 %v4490, %v4698
        %v4779 = vsub.f32 %v4491, %v4702
        %v4780 = vsub.f32 %v4492, %v4701
        %v4781 = vsub.f32 %v4493, %v4705
        %v4782 = vsub.f32 %v4494, %v4704
        %v4783 = vsub.f32 %v4495, %v4708
        %v4784 = vsub.f32 %v4496, %v4707
        %v4785 = vsub.f32 %v4497, %v4711
        %v4786 = vsub.f32 %v4498, %v4710
        %v4787 = vsub.f32 %v4499, %v4714
        %v4788 = vsub.f32 %v4500, %v4713
        %v4789 = vsub.f32 %v4501, %v4717
        %v4790 = vsub.f32 %v4502, %v4716
        %v4791 = vsub.f32 %v4503, %v4720
        %v4792 = vsub.f32 %v4504, %v4719
        %v4793 = vsub.f32 %v4505, %v4723
        %v4794 = vsub.f32 %v4506, %v4722
        %v4795 = vsub.f32 %v4507, %v4726
        %v4796 = vsub.f32 %v4508, %v4725
        %v4797 = vsub.f32 %v4509, %v4729
        %v4798 = vsub.f32 %v4510, %v4728
        %v4799 = vsub.f32 %v4511, %v4732
        %v4800 = vsub.f32 %v4512, %v4731
        %v4801 = vsub.f32 %v4513, %v4735
        %v4802 = vsub.f32 %v4514, %v4734
        %v4803 = vsub.f32 %v4515, %v4738
        %v4804 = vsub.f32 %v4516, %v4737
        %v4805 = vsub.f32 %v4517, %v4741
        %v4806 = vsub.f32 %v4518, %v4740
        %v4807 = vsub.f32 %v4519, %v4744
        %v4808 = vsub.f32 %v4520, %v4743
        %4841 = vrot.lane.b32.xlu0 %v4313, 1
        %v4842 = vpop.permute.xlu0 %4841
        %4843 = vrot.lane.b32.xlu0 %v4314, 1
        %v4844 = vpop.permute.xlu0 %4843
        %4845 = vrot.lane.b32.xlu0 %v4315, 1
        %v4846 = vpop.permute.xlu0 %4845
        %4847 = vrot.lane.b32.xlu0 %v4316, 1
        %v4848 = vpop.permute.xlu0 %4847
        %4849 = vrot.lane.b32.xlu0 %v4317, 1
        %v4850 = vpop.permute.xlu0 %4849
        %4851 = vrot.lane.b32.xlu0 %v4318, 1
        %v4852 = vpop.permute.xlu0 %4851
        %4853 = vrot.lane.b32.xlu0 %v4319, 1
        %v4854 = vpop.permute.xlu0 %4853
        %4855 = vrot.lane.b32.xlu0 %v4320, 1
        %v4856 = vpop.permute.xlu0 %4855
        %4857 = vrot.lane.b32.xlu0 %v4321, 1
        %v4858 = vpop.permute.xlu0 %4857
        %4859 = vrot.lane.b32.xlu0 %v4322, 1
        %v4860 = vpop.permute.xlu0 %4859
        %4861 = vrot.lane.b32.xlu0 %v4323, 1
        %v4862 = vpop.permute.xlu0 %4861
        %4863 = vrot.lane.b32.xlu0 %v4324, 1
        %v4864 = vpop.permute.xlu0 %4863
        %4865 = vrot.lane.b32.xlu0 %v4325, 1
        %v4866 = vpop.permute.xlu0 %4865
        %4867 = vrot.lane.b32.xlu0 %v4326, 1
        %v4868 = vpop.permute.xlu0 %4867
        %4869 = vrot.lane.b32.xlu0 %v4327, 1
        %v4870 = vpop.permute.xlu0 %4869
        %4871 = vrot.lane.b32.xlu0 %v4328, 1
        %v4872 = vpop.permute.xlu0 %4871
        %4873 = vrot.lane.b32.xlu0 %v4329, 1
        %v4874 = vpop.permute.xlu0 %4873
        %4875 = vrot.lane.b32.xlu0 %v4330, 1
        %v4876 = vpop.permute.xlu0 %4875
        %4877 = vrot.lane.b32.xlu0 %v4331, 1
        %v4878 = vpop.permute.xlu0 %4877
        %4879 = vrot.lane.b32.xlu0 %v4332, 1
        %v4880 = vpop.permute.xlu0 %4879
        %4881 = vrot.lane.b32.xlu0 %v4333, 1
        %v4882 = vpop.permute.xlu0 %4881
        %4883 = vrot.lane.b32.xlu0 %v4334, 1
        %v4884 = vpop.permute.xlu0 %4883
        %4885 = vrot.lane.b32.xlu0 %v4335, 1
        %v4886 = vpop.permute.xlu0 %4885
        %4887 = vrot.lane.b32.xlu0 %v4336, 1
        %v4888 = vpop.permute.xlu0 %4887
        %4889 = vrot.lane.b32.xlu0 %v4337, 1
        %v4890 = vpop.permute.xlu0 %4889
        %4891 = vrot.lane.b32.xlu0 %v4338, 1
        %v4892 = vpop.permute.xlu0 %4891
        %4893 = vrot.lane.b32.xlu0 %v4339, 1
        %v4894 = vpop.permute.xlu0 %4893
        %4895 = vrot.lane.b32.xlu0 %v4340, 1
        %v4896 = vpop.permute.xlu0 %4895
        %4897 = vrot.lane.b32.xlu0 %v4341, 1
        %v4898 = vpop.permute.xlu0 %4897
        %4899 = vrot.lane.b32.xlu0 %v4342, 1
        %v4900 = vpop.permute.xlu0 %4899
        %4901 = vrot.lane.b32.xlu0 %v4343, 1
        %v4902 = vpop.permute.xlu0 %4901
        %4903 = vrot.lane.b32.xlu0 %v4344, 1
        %v4904 = vpop.permute.xlu0 %4903
        %v4937 = vmul.f32 %v1373, %v4842
        %v4938 = vmul.f32 %v1374, %v4844
        %v4939 = vmul.f32 %v1375, %v4846
        %v4940 = vmul.f32 %v1376, %v4848
        %v4941 = vmul.f32 %v1377, %v4850
        %v4942 = vmul.f32 %v1378, %v4852
        %v4943 = vmul.f32 %v1379, %v4854
        %v4944 = vmul.f32 %v1380, %v4856
        %v4945 = vmul.f32 %v1381, %v4858
        %v4946 = vmul.f32 %v1382, %v4860
        %v4947 = vmul.f32 %v1383, %v4862
        %v4948 = vmul.f32 %v1384, %v4864
        %v4949 = vmul.f32 %v1385, %v4866
        %v4950 = vmul.f32 %v1386, %v4868
        %v4951 = vmul.f32 %v1387, %v4870
        %v4952 = vmul.f32 %v1388, %v4872
        %v4953 = vmul.f32 %v1389, %v4874
        %v4954 = vmul.f32 %v1390, %v4876
        %v4955 = vmul.f32 %v1391, %v4878
        %v4956 = vmul.f32 %v1392, %v4880
        %v4957 = vmul.f32 %v1393, %v4882
        %v4958 = vmul.f32 %v1394, %v4884
        %v4959 = vmul.f32 %v1395, %v4886
        %v4960 = vmul.f32 %v1396, %v4888
        %v4961 = vmul.f32 %v1397, %v4890
        %v4962 = vmul.f32 %v1398, %v4892
        %v4963 = vmul.f32 %v1399, %v4894
        %v4964 = vmul.f32 %v1400, %v4896
        %v4965 = vmul.f32 %v1401, %v4898
        %v4966 = vmul.f32 %v1402, %v4900
        %v4967 = vmul.f32 %v1403, %v4902
        %v4968 = vmul.f32 %v1404, %v4904
        %5001 = vrot.lane.b32.xlu0 %v4937, 127
        %v5002 = vpop.permute.xlu0 %5001
        %5003 = vrot.lane.b32.xlu0 %v4938, 127
        %v5004 = vpop.permute.xlu0 %5003
        %5005 = vrot.lane.b32.xlu0 %v4939, 127
        %v5006 = vpop.permute.xlu0 %5005
        %5007 = vrot.lane.b32.xlu0 %v4940, 127
        %v5008 = vpop.permute.xlu0 %5007
        %5009 = vrot.lane.b32.xlu0 %v4941, 127
        %v5010 = vpop.permute.xlu0 %5009
        %5011 = vrot.lane.b32.xlu0 %v4942, 127
        %v5012 = vpop.permute.xlu0 %5011
        %5013 = vrot.lane.b32.xlu0 %v4943, 127
        %v5014 = vpop.permute.xlu0 %5013
        %5015 = vrot.lane.b32.xlu0 %v4944, 127
        %v5016 = vpop.permute.xlu0 %5015
        %5017 = vrot.lane.b32.xlu0 %v4945, 127
        %v5018 = vpop.permute.xlu0 %5017
        %5019 = vrot.lane.b32.xlu0 %v4946, 127
        %v5020 = vpop.permute.xlu0 %5019
        %5021 = vrot.lane.b32.xlu0 %v4947, 127
        %v5022 = vpop.permute.xlu0 %5021
        %5023 = vrot.lane.b32.xlu0 %v4948, 127
        %v5024 = vpop.permute.xlu0 %5023
        %5025 = vrot.lane.b32.xlu0 %v4949, 127
        %v5026 = vpop.permute.xlu0 %5025
        %5027 = vrot.lane.b32.xlu0 %v4950, 127
        %v5028 = vpop.permute.xlu0 %5027
        %5029 = vrot.lane.b32.xlu0 %v4951, 127
        %v5030 = vpop.permute.xlu0 %5029
        %5031 = vrot.lane.b32.xlu0 %v4952, 127
        %v5032 = vpop.permute.xlu0 %5031
        %5033 = vrot.lane.b32.xlu0 %v4953, 127
        %v5034 = vpop.permute.xlu0 %5033
        %5035 = vrot.lane.b32.xlu0 %v4954, 127
        %v5036 = vpop.permute.xlu0 %5035
        %5037 = vrot.lane.b32.xlu0 %v4955, 127
        %v5038 = vpop.permute.xlu0 %5037
        %5039 = vrot.lane.b32.xlu0 %v4956, 127
        %v5040 = vpop.permute.xlu0 %5039
        %5041 = vrot.lane.b32.xlu0 %v4957, 127
        %v5042 = vpop.permute.xlu0 %5041
        %5043 = vrot.lane.b32.xlu0 %v4958, 127
        %v5044 = vpop.permute.xlu0 %5043
        %5045 = vrot.lane.b32.xlu0 %v4959, 127
        %v5046 = vpop.permute.xlu0 %5045
        %5047 = vrot.lane.b32.xlu0 %v4960, 127
        %v5048 = vpop.permute.xlu0 %5047
        %5049 = vrot.lane.b32.xlu0 %v4961, 127
        %v5050 = vpop.permute.xlu0 %5049
        %5051 = vrot.lane.b32.xlu0 %v4962, 127
        %v5052 = vpop.permute.xlu0 %5051
        %5053 = vrot.lane.b32.xlu0 %v4963, 127
        %v5054 = vpop.permute.xlu0 %5053
        %5055 = vrot.lane.b32.xlu0 %v4964, 127
        %v5056 = vpop.permute.xlu0 %5055
        %5057 = vrot.lane.b32.xlu0 %v4965, 127
        %v5058 = vpop.permute.xlu0 %5057
        %5059 = vrot.lane.b32.xlu0 %v4966, 127
        %v5060 = vpop.permute.xlu0 %5059
        %5061 = vrot.lane.b32.xlu0 %v4967, 127
        %v5062 = vpop.permute.xlu0 %5061
        %5063 = vrot.lane.b32.xlu0 %v4968, 127
        %v5064 = vpop.permute.xlu0 %5063
        %v5097 = vadd.f32 %v4777, %v5002
        %v5098 = vadd.f32 %v4778, %v5004
        %v5099 = vadd.f32 %v4779, %v5006
        %v5100 = vadd.f32 %v4780, %v5008
        %v5101 = vadd.f32 %v4781, %v5010
        %v5102 = vadd.f32 %v4782, %v5012
        %v5103 = vadd.f32 %v4783, %v5014
        %v5104 = vadd.f32 %v4784, %v5016
        %v5105 = vadd.f32 %v4785, %v5018
        %v5106 = vadd.f32 %v4786, %v5020
        %v5107 = vadd.f32 %v4787, %v5022
        %v5108 = vadd.f32 %v4788, %v5024
        %v5109 = vadd.f32 %v4789, %v5026
        %v5110 = vadd.f32 %v4790, %v5028
        %v5111 = vadd.f32 %v4791, %v5030
        %v5112 = vadd.f32 %v4792, %v5032
        %v5113 = vadd.f32 %v4793, %v5034
        %v5114 = vadd.f32 %v4794, %v5036
        %v5115 = vadd.f32 %v4795, %v5038
        %v5116 = vadd.f32 %v4796, %v5040
        %v5117 = vadd.f32 %v4797, %v5042
        %v5118 = vadd.f32 %v4798, %v5044
        %v5119 = vadd.f32 %v4799, %v5046
        %v5120 = vadd.f32 %v4800, %v5048
        %v5121 = vadd.f32 %v4801, %v5050
        %v5122 = vadd.f32 %v4802, %v5052
        %v5123 = vadd.f32 %v4803, %v5054
        %v5124 = vadd.f32 %v4804, %v5056
        %v5125 = vadd.f32 %v4805, %v5058
        %v5126 = vadd.f32 %v4806, %v5060
        %v5127 = vadd.f32 %v4807, %v5062
        %v5128 = vadd.f32 %v4808, %v5064
        %v5129 = vmax.f32 %v5097, 0.0
        %v5130 = vmax.f32 %v5098, 0.0
        %v5131 = vmax.f32 %v5099, 0.0
        %v5132 = vmax.f32 %v5100, 0.0
        %v5133 = vmax.f32 %v5101, 0.0
        %v5134 = vmax.f32 %v5102, 0.0
        %v5135 = vmax.f32 %v5103, 0.0
        %v5136 = vmax.f32 %v5104, 0.0
        %v5137 = vmax.f32 %v5105, 0.0
        %v5138 = vmax.f32 %v5106, 0.0
        %v5139 = vmax.f32 %v5107, 0.0
        %v5140 = vmax.f32 %v5108, 0.0
        %v5141 = vmax.f32 %v5109, 0.0
        %v5142 = vmax.f32 %v5110, 0.0
        %v5143 = vmax.f32 %v5111, 0.0
        %v5144 = vmax.f32 %v5112, 0.0
        %v5145 = vmax.f32 %v5113, 0.0
        %v5146 = vmax.f32 %v5114, 0.0
        %v5147 = vmax.f32 %v5115, 0.0
        %v5148 = vmax.f32 %v5116, 0.0
        %v5149 = vmax.f32 %v5117, 0.0
        %v5150 = vmax.f32 %v5118, 0.0
        %v5151 = vmax.f32 %v5119, 0.0
        %v5152 = vmax.f32 %v5120, 0.0
        %v5153 = vmax.f32 %v5121, 0.0
        %v5154 = vmax.f32 %v5122, 0.0
        %v5155 = vmax.f32 %v5123, 0.0
        %v5156 = vmax.f32 %v5124, 0.0
        %v5157 = vmax.f32 %v5125, 0.0
        %v5158 = vmax.f32 %v5126, 0.0
        %v5159 = vmax.f32 %v5127, 0.0
        %v5160 = vmax.f32 %v5128, 0.0
        %v5161 = vadd.f32 %v5129, 1e-07
        %v5162 = vadd.f32 %v5130, 1e-07
        %v5163 = vadd.f32 %v5131, 1e-07
        %v5164 = vadd.f32 %v5132, 1e-07
        %v5165 = vadd.f32 %v5133, 1e-07
        %v5166 = vadd.f32 %v5134, 1e-07
        %v5167 = vadd.f32 %v5135, 1e-07
        %v5168 = vadd.f32 %v5136, 1e-07
        %v5169 = vadd.f32 %v5137, 1e-07
        %v5170 = vadd.f32 %v5138, 1e-07
        %v5171 = vadd.f32 %v5139, 1e-07
        %v5172 = vadd.f32 %v5140, 1e-07
        %v5173 = vadd.f32 %v5141, 1e-07
        %v5174 = vadd.f32 %v5142, 1e-07
        %v5175 = vadd.f32 %v5143, 1e-07
        %v5176 = vadd.f32 %v5144, 1e-07
        %v5177 = vadd.f32 %v5145, 1e-07
        %v5178 = vadd.f32 %v5146, 1e-07
        %v5179 = vadd.f32 %v5147, 1e-07
        %v5180 = vadd.f32 %v5148, 1e-07
        %v5181 = vadd.f32 %v5149, 1e-07
        %v5182 = vadd.f32 %v5150, 1e-07
        %v5183 = vadd.f32 %v5151, 1e-07
        %v5184 = vadd.f32 %v5152, 1e-07
        %v5185 = vadd.f32 %v5153, 1e-07
        %v5186 = vadd.f32 %v5154, 1e-07
        %v5187 = vadd.f32 %v5155, 1e-07
        %v5188 = vadd.f32 %v5156, 1e-07
        %v5189 = vadd.f32 %v5157, 1e-07
        %v5190 = vadd.f32 %v5158, 1e-07
        %v5191 = vadd.f32 %v5159, 1e-07
        %v5192 = vadd.f32 %v5160, 1e-07
        %v5193 = vlog2.pop %v5161
        %v5194 = vmul.f32 %v5193, 0.6931472
        %v5195 = vlog2.pop %v5162
        %v5196 = vmul.f32 %v5195, 0.6931472
        %v5197 = vlog2.pop %v5163
        %v5198 = vmul.f32 %v5197, 0.6931472
        %v5199 = vlog2.pop %v5164
        %v5200 = vmul.f32 %v5199, 0.6931472
        %v5201 = vlog2.pop %v5165
        %v5202 = vmul.f32 %v5201, 0.6931472
        %v5203 = vlog2.pop %v5166
        %v5204 = vmul.f32 %v5203, 0.6931472
        %v5205 = vlog2.pop %v5167
        %v5206 = vmul.f32 %v5205, 0.6931472
        %v5207 = vlog2.pop %v5168
        %v5208 = vmul.f32 %v5207, 0.6931472
        %v5209 = vlog2.pop %v5169
        %v5210 = vmul.f32 %v5209, 0.6931472
        %v5211 = vlog2.pop %v5170
        %v5212 = vmul.f32 %v5211, 0.6931472
        %v5213 = vlog2.pop %v5171
        %v5214 = vmul.f32 %v5213, 0.6931472
        %v5215 = vlog2.pop %v5172
        %v5216 = vmul.f32 %v5215, 0.6931472
        %v5217 = vlog2.pop %v5173
        %v5218 = vmul.f32 %v5217, 0.6931472
        %v5219 = vlog2.pop %v5174
        %v5220 = vmul.f32 %v5219, 0.6931472
        %v5221 = vlog2.pop %v5175
        %v5222 = vmul.f32 %v5221, 0.6931472
        %v5223 = vlog2.pop %v5176
        %v5224 = vmul.f32 %v5223, 0.6931472
        %v5225 = vlog2.pop %v5177
        %v5226 = vmul.f32 %v5225, 0.6931472
        %v5227 = vlog2.pop %v5178
        %v5228 = vmul.f32 %v5227, 0.6931472
        %v5229 = vlog2.pop %v5179
        %v5230 = vmul.f32 %v5229, 0.6931472
        %v5231 = vlog2.pop %v5180
        %v5232 = vmul.f32 %v5231, 0.6931472
        %v5233 = vlog2.pop %v5181
        %v5234 = vmul.f32 %v5233, 0.6931472
        %v5235 = vlog2.pop %v5182
        %v5236 = vmul.f32 %v5235, 0.6931472
        %v5237 = vlog2.pop %v5183
        %v5238 = vmul.f32 %v5237, 0.6931472
        %v5239 = vlog2.pop %v5184
        %v5240 = vmul.f32 %v5239, 0.6931472
        %v5241 = vlog2.pop %v5185
        %v5242 = vmul.f32 %v5241, 0.6931472
        %v5243 = vlog2.pop %v5186
        %v5244 = vmul.f32 %v5243, 0.6931472
        %v5245 = vlog2.pop %v5187
        %v5246 = vmul.f32 %v5245, 0.6931472
        %v5247 = vlog2.pop %v5188
        %v5248 = vmul.f32 %v5247, 0.6931472
        %v5249 = vlog2.pop %v5189
        %v5250 = vmul.f32 %v5249, 0.6931472
        %v5251 = vlog2.pop %v5190
        %v5252 = vmul.f32 %v5251, 0.6931472
        %v5253 = vlog2.pop %v5191
        %v5254 = vmul.f32 %v5253, 0.6931472
        %v5255 = vlog2.pop %v5192
        %v5256 = vmul.f32 %v5255, 0.6931472
        %v5257 = vand.u32 2147483647, %v5194
        %v5258 = vand.u32 2147483647, %v5196
        %v5259 = vand.u32 2147483647, %v5198
        %v5260 = vand.u32 2147483647, %v5200
        %v5261 = vand.u32 2147483647, %v5202
        %v5262 = vand.u32 2147483647, %v5204
        %v5263 = vand.u32 2147483647, %v5206
        %v5264 = vand.u32 2147483647, %v5208
        %v5265 = vand.u32 2147483647, %v5210
        %v5266 = vand.u32 2147483647, %v5212
        %v5267 = vand.u32 2147483647, %v5214
        %v5268 = vand.u32 2147483647, %v5216
        %v5269 = vand.u32 2147483647, %v5218
        %v5270 = vand.u32 2147483647, %v5220
        %v5271 = vand.u32 2147483647, %v5222
        %v5272 = vand.u32 2147483647, %v5224
        %v5273 = vand.u32 2147483647, %v5226
        %v5274 = vand.u32 2147483647, %v5228
        %v5275 = vand.u32 2147483647, %v5230
        %v5276 = vand.u32 2147483647, %v5232
        %v5277 = vand.u32 2147483647, %v5234
        %v5278 = vand.u32 2147483647, %v5236
        %v5279 = vand.u32 2147483647, %v5238
        %v5280 = vand.u32 2147483647, %v5240
        %v5281 = vand.u32 2147483647, %v5242
        %v5282 = vand.u32 2147483647, %v5244
        %v5283 = vand.u32 2147483647, %v5246
        %v5284 = vand.u32 2147483647, %v5248
        %v5285 = vand.u32 2147483647, %v5250
        %v5286 = vand.u32 2147483647, %v5252
        %v5287 = vand.u32 2147483647, %v5254
        %v5288 = vand.u32 2147483647, %v5256
        %v5289 = vmul.f32 %v5257, %v664
        %v5290 = vmul.f32 %v5258, %v664
        %v5291 = vmul.f32 %v5259, %v665
        %v5292 = vmul.f32 %v5260, %v665
        %v5293 = vmul.f32 %v5261, %v666
        %v5294 = vmul.f32 %v5262, %v666
        %v5295 = vmul.f32 %v5263, %v667
        %v5296 = vmul.f32 %v5264, %v667
        %v5297 = vmul.f32 %v5265, %v668
        %v5298 = vmul.f32 %v5266, %v668
        %v5299 = vmul.f32 %v5267, %v669
        %v5300 = vmul.f32 %v5268, %v669
        %v5301 = vmul.f32 %v5269, %v670
        %v5302 = vmul.f32 %v5270, %v670
        %v5303 = vmul.f32 %v5271, %v671
        %v5304 = vmul.f32 %v5272, %v671
        %v5305 = vmul.f32 %v5273, %v672
        %v5306 = vmul.f32 %v5274, %v672
        %v5307 = vmul.f32 %v5275, %v673
        %v5308 = vmul.f32 %v5276, %v673
        %v5309 = vmul.f32 %v5277, %v674
        %v5310 = vmul.f32 %v5278, %v674
        %v5311 = vmul.f32 %v5279, %v675
        %v5312 = vmul.f32 %v5280, %v675
        %v5313 = vmul.f32 %v5281, %v676
        %v5314 = vmul.f32 %v5282, %v676
        %v5315 = vmul.f32 %v5283, %v677
        %v5316 = vmul.f32 %v5284, %v677
        %v5317 = vmul.f32 %v5285, %v678
        %v5318 = vmul.f32 %v5286, %v678
        %v5319 = vmul.f32 %v5287, %v679
        %v5320 = vmul.f32 %v5288, %v679
        %v5321 = vld [vmem:[#allocation6] sm:$0xff]
        %v5322 = vld [vmem:[#allocation6 + $0x8] sm:$0x7f]
        %v5323 = vsel %vm2886, %v5289, 0.0
        %v5324 = vsel %vm2886, %v5291, 0.0
        %v5325 = vadd.f32 %v5323, %v5324
        %v5326 = vsel %vm2886, %v5293, 0.0
        %v5327 = vadd.f32 %v5325, %v5326
        %v5328 = vsel %vm2886, %v5295, 0.0
        %v5329 = vadd.f32 %v5327, %v5328
        %v5330 = vsel %vm2886, %v5297, 0.0
        %v5331 = vadd.f32 %v5329, %v5330
        %v5332 = vsel %vm2886, %v5299, 0.0
        %v5333 = vadd.f32 %v5331, %v5332
        %v5334 = vsel %vm2886, %v5301, 0.0
        %v5335 = vadd.f32 %v5333, %v5334
        %v5336 = vsel %vm2886, %v5303, 0.0
        %v5337 = vadd.f32 %v5335, %v5336
        %v5338 = vsel %vm2886, %v5305, 0.0
        %v5339 = vadd.f32 %v5337, %v5338
        %v5340 = vsel %vm2886, %v5307, 0.0
        %v5341 = vadd.f32 %v5339, %v5340
        %v5342 = vsel %vm2886, %v5309, 0.0
        %v5343 = vadd.f32 %v5341, %v5342
        %v5344 = vsel %vm2886, %v5311, 0.0
        %v5345 = vadd.f32 %v5343, %v5344
        %v5346 = vsel %vm2886, %v5313, 0.0
        %v5347 = vadd.f32 %v5345, %v5346
        %v5348 = vsel %vm2886, %v5315, 0.0
        %v5349 = vadd.f32 %v5347, %v5348
        %v5350 = vsel %vm2886, %v5317, 0.0
        %v5351 = vadd.f32 %v5349, %v5350
        %v5352 = vsel %vm2886, %v5319, 0.0
        %v5353 = vadd.f32 %v5351, %v5352
        %vm5354 = vcmask 55296
        %v5355 = vsel %vm5354, %v5290, 0.0
        %v5356 = vsel %vm5354, %v5292, 0.0
        %v5357 = vadd.f32 %v5355, %v5356
        %v5358 = vsel %vm5354, %v5294, 0.0
        %v5359 = vadd.f32 %v5357, %v5358
        %v5360 = vsel %vm5354, %v5296, 0.0
        %v5361 = vadd.f32 %v5359, %v5360
        %v5362 = vsel %vm5354, %v5298, 0.0
        %v5363 = vadd.f32 %v5361, %v5362
        %v5364 = vsel %vm5354, %v5300, 0.0
        %v5365 = vadd.f32 %v5363, %v5364
        %v5366 = vsel %vm5354, %v5302, 0.0
        %v5367 = vadd.f32 %v5365, %v5366
        %v5368 = vsel %vm5354, %v5304, 0.0
        %v5369 = vadd.f32 %v5367, %v5368
        %v5370 = vsel %vm5354, %v5306, 0.0
        %v5371 = vadd.f32 %v5369, %v5370
        %v5372 = vsel %vm5354, %v5308, 0.0
        %v5373 = vadd.f32 %v5371, %v5372
        %v5374 = vsel %vm5354, %v5310, 0.0
        %v5375 = vadd.f32 %v5373, %v5374
        %v5376 = vsel %vm5354, %v5312, 0.0
        %v5377 = vadd.f32 %v5375, %v5376
        %v5378 = vsel %vm5354, %v5314, 0.0
        %v5379 = vadd.f32 %v5377, %v5378
        %v5380 = vsel %vm5354, %v5316, 0.0
        %v5381 = vadd.f32 %v5379, %v5380
        %v5382 = vsel %vm5354, %v5318, 0.0
        %v5383 = vadd.f32 %v5381, %v5382
        %v5384 = vsel %vm5354, %v5320, 0.0
        %v5385 = vadd.f32 %v5383, %v5384
        %v5386 = vadd.f32 %v5321, %v5353
        %v5387 = vadd.f32 %v5322, %v5385
        %5388 = vst.msk [vmem:[#allocation6] sm:$0xff] %vm2886, %v5386
        %5389 = vst.msk [vmem:[#allocation6 + $0x8] sm:$0x7f] %vm5354, %v5387
        // Predicated region
        $region79: #{tpu_custom_call.1} parent=69 // pred_check
          %p5390 = pneg %p400
        $region80: #{tpu_custom_call.1} parent=69 // pred_check_branch
          %5392 = sbr.rel (%p5390) target = $region82
        $region81: #{tpu_custom_call.1} parent=69 // pred_region
          %v5393 = vld [vmem:[#allocation2] sm:$0xff]
          %v5394 = vld [vmem:[#allocation2 + $0x8] sm:$0xff]
          %v5395 = vsel %vm548, %v5393, 0.0
          %v5396 = vsel %vm548, %v5394, 0.0
          %v5397 = vadd.f32 %v5395, %v5396
          %5398 = vadd.xlane.f32.xlu0 %v5397
          %v5399 = vpop.xlane.xlu0 %5398
          %v5400 = vrot.slane %v5399, 4
          %v5401 = vadd.f32 %v5399, %v5400
          %v5402 = vrot.slane %v5401, 2
          %v5403 = vadd.f32 %v5401, %v5402
          %v5404 = vrot.slane %v5403, 1
          %v5405 = vadd.f32 %v5403, %v5404
          %s5406 = vtos %v5405
          %v5407 = vstv %s5406
          %5408 = vst [vmem:[%s362] sm:$0xff] %v5407
          %v5409 = vld [vmem:[#allocation3] sm:$0xff]
          %v5410 = vld [vmem:[#allocation3 + $0x8] sm:$0xff]
          %v5411 = vsel %vm548, %v5409, 0.0
          %v5412 = vsel %vm548, %v5410, 0.0
          %v5413 = vadd.f32 %v5411, %v5412
          %5414 = vadd.xlane.f32.xlu0 %v5413
          %v5415 = vpop.xlane.xlu0 %5414
          %v5416 = vrot.slane %v5415, 4
          %v5417 = vadd.f32 %v5415, %v5416
          %v5418 = vrot.slane %v5417, 2
          %v5419 = vadd.f32 %v5417, %v5418
          %v5420 = vrot.slane %v5419, 1
          %v5421 = vadd.f32 %v5419, %v5420
          %s5422 = vtos %v5421
          %v5423 = vstv %s5422
          %s5424 = scalar_lea.vmem %s362, 8 [#allocation8]
          %5425 = vst [vmem:[%s5424] sm:$0xff] %v5423
          %v5426 = vld [vmem:[#allocation4] sm:$0xff]
          %v5427 = vld [vmem:[#allocation4 + $0x8] sm:$0x7f]
          %v5428 = vsel %vm548, %v5426, 0.0
          %v5429 = vsel %vm2872, %v5427, 0.0
          %v5430 = vadd.f32 %v5428, %v5429
          %5431 = vadd.xlane.f32.xlu0 %v5430
          %v5432 = vpop.xlane.xlu0 %5431
          %v5433 = vrot.slane %v5432, 4
          %v5434 = vadd.f32 %v5432, %v5433
          %v5435 = vrot.slane %v5434, 2
          %v5436 = vadd.f32 %v5434, %v5435
          %v5437 = vrot.slane %v5436, 1
          %v5438 = vadd.f32 %v5436, %v5437
          %s5439 = vtos %v5438
          %v5440 = vstv %s5439
          %s5441 = scalar_lea.vmem %s362, 16 [#allocation8]
          %5442 = vst [vmem:[%s5441] sm:$0xff] %v5440
          %v5443 = vld [vmem:[#allocation5] sm:$0xff]
          %v5444 = vld [vmem:[#allocation5 + $0x8] sm:$0xff]
          %v5445 = vsel %vm2886, %v5443, 0.0
          %v5446 = vsel %vm2886, %v5444, 0.0
          %v5447 = vadd.f32 %v5445, %v5446
          %5448 = vadd.xlane.f32.xlu0 %v5447
          %v5449 = vpop.xlane.xlu0 %5448
          %v5450 = vrot.slane %v5449, 4
          %v5451 = vadd.f32 %v5449, %v5450
          %v5452 = vrot.slane %v5451, 2
          %v5453 = vadd.f32 %v5451, %v5452
          %v5454 = vrot.slane %v5453, 1
          %v5455 = vadd.f32 %v5453, %v5454
          %s5456 = vtos %v5455
          %v5457 = vstv %s5456
          %s5458 = scalar_lea.vmem %s362, 24 [#allocation8]
          %5459 = vst [vmem:[%s5458] sm:$0xff] %v5457
          %v5460 = vld [vmem:[#allocation6] sm:$0xff]
          %v5461 = vld [vmem:[#allocation6 + $0x8] sm:$0x7f]
          %v5462 = vsel %vm2886, %v5460, 0.0
          %v5463 = vsel %vm5354, %v5461, 0.0
          %v5464 = vadd.f32 %v5462, %v5463
          %5465 = vadd.xlane.f32.xlu0 %v5464
          %v5466 = vpop.xlane.xlu0 %5465
          %v5467 = vrot.slane %v5466, 4
          %v5468 = vadd.f32 %v5466, %v5467
          %v5469 = vrot.slane %v5468, 2
          %v5470 = vadd.f32 %v5468, %v5469
          %v5471 = vrot.slane %v5470, 1
          %v5472 = vadd.f32 %v5470, %v5471
          %s5473 = vtos %v5472
          %v5474 = vstv %s5473
          %s5475 = scalar_lea.vmem %s362, 32 [#allocation8]
          %5476 = vst [vmem:[%s5475] sm:$0xff] %v5474
        $region82: #{tpu_custom_call.1} parent=69 // pred_fallthru
          _
        %s5477 = sand.u32 %s158, 1
        %s5478 = scalar_lea.sflag [#allocation9], %s5477
        %s5479 = sand.u32 %s158, 1
        %s5480 = smul.addr %s5479, 40
        %s5481 = scalar_lea.vmem [#allocation8], %s5480
        // Predicated region
        $region83: #{tpu_custom_call.1} parent=69 // pred_check
          %p5482 = pneg %p168
        $region84: #{tpu_custom_call.1} parent=69 // pred_check_branch
          %5484 = sbr.rel (%p5482) target = $region86
        $region85: #{tpu_custom_call.1} parent=69 // pred_region
          %s5486 = ssub.s32 640, 640
          %5487 = vsyncadd %s5478, %s5486
          %s5488 = smul.addr %s22, 5
          %s5489 = smul.addr %s5488, 128
          %s5490 = scalar_lea.hbm %s4, %s5489
          %s5491 = sshll.u32 %s5481, 4
          %s5492 = int_to_ptr.vmem [resolvable:$true] %s5491
          %5497 = dma.vmem_to_hbm [thread:$0]  %s5492, 640, %s5490, %s5478, 128, 128, 8
        $region86: #{tpu_custom_call.1} parent=69 // pred_fallthru
          _
      $region70: #{tpu_custom_call.1} parent=5 // pred_fallthru
        _
      %p5498 = scmp.le.s32.totalorder 2, %s13
      // Predicated region
      $region87: #{tpu_custom_call.1} parent=5 // pred_check
        %p5499 = pneg %p5498
      $region88: #{tpu_custom_call.1} parent=5 // pred_check_branch
        %5501 = sbr.rel (%p5499) target = $region90
      $region89: #{tpu_custom_call.1} parent=5 // pred_region
        %s5502 = ssub.s32 %s13, 2
        // Predicated region
        $region91: #{tpu_custom_call.1} parent=89 // pred_check
          %p5503 = pneg %p174
        $region92: #{tpu_custom_call.1} parent=89 // pred_check_branch
          %5505 = sbr.rel (%p5503) target = $region94
        $region93: #{tpu_custom_call.1} parent=89 // pred_region
          %s5506 = sand.u32 %s159, 1
          %s5507 = scalar_lea.sflag [#allocation9], %s5506
          %s5508 = sand.u32 %s159, 1
          %s5509 = smul.addr %s5508, 40
          %s5510 = scalar_lea.vmem [#allocation8], %s5509
          %5511 = dma.done %s5507, 640
        $region94: #{tpu_custom_call.1} parent=89 // pred_fallthru
          _
      $region90: #{tpu_custom_call.1} parent=5 // pred_fallthru
        _
    $region6: #{tpu_custom_call.1} parent=1 // loop_footer
      %s17 = sadd.s32 1, %s13
    $region7: #{tpu_custom_call.1} parent=1 // loop_footer_branch
      %12 = sbr.rel target = $region3
    $region8: #{tpu_custom_call.1} parent=1 // loop_exit
      _
    %5512 = vsyncpa [#allocation9], 1
    %s5513 = scalar_lea.sflag [#allocation9], 1
    %5514 = vsyncpa %s5513, 1

</llo_original>
